<compile_context>
chip_gen: v5e
topology: v5e:2x2
jax: 0.10.0
libtpu: 0.0.40
codegen_flags: <defaults>
</compile_context>

<pallas_src>
import functools

import jax
import jax.numpy as jnp
import numpy as np
from jax.experimental import pallas as pl
from jax.experimental.pallas import tpu as pltpu

_NEG_SENTINEL = -3.0e38  # finite "-inf" for the masked segment max


def _leaky(v):
    # nn.LeakyReLU(0.1)
    return jnp.where(v > 0, v, 0.1 * v)


def _round_up(x, m):
    return ((x + m - 1) // m) * m


def _point_encoder_kernel(x_ref, npts_ref,
                          w1, b1, w2, b2, w3a, w3b, b3, w4, b4,
                          g4_ref):
    """conv1..conv4 + both point_maxpools for Bt clouds; emits g4 [Bt, 1024]."""
    Bt, Npad, Cin = x_ref.shape
    x = x_ref[...].reshape(Bt * Npad, Cin)               # points on sublanes

    counts = npts_ref[...].reshape(Bt, 1, 1)             # int32 per-cloud sizes
    pt_idx = jax.lax.broadcasted_iota(jnp.int32, (Bt, Npad, 1), 1)
    valid = pt_idx < counts                              # [Bt, Npad, 1]
    nonempty = (npts_ref[...] > 0)                       # [Bt, 1]

    # conv1 (Cin -> 128) + LeakyReLU, conv2 (128 -> 256) + LeakyReLU
    f1 = _leaky(jnp.dot(x, w1[...], preferred_element_type=jnp.float32) + b1[...])
    f2 = _leaky(jnp.dot(f1, w2[...], preferred_element_type=jnp.float32) + b2[...])

    # point_maxpool (keepdims) per cloud
    c2 = f2.shape[-1]
    g2 = jnp.max(jnp.where(valid, f2.reshape(Bt, Npad, c2), _NEG_SENTINEL), axis=1)
    g2 = jnp.where(nonempty, g2, 0.0)                    # [Bt, 256], guard empty clouds

    # conv3 (512 -> 512) with split weight: point part + per-cloud part
    # (equivalent to concat([f2, unpool(g2)]) @ w3, but half the MXU work).
    f3_pt = jnp.dot(f2, w3a[...], preferred_element_type=jnp.float32)   # [Bt*Npad, 512]
    f3_cl = jnp.dot(g2, w3b[...], preferred_element_type=jnp.float32) + b3[...]  # [Bt, 512]
    c3 = f3_pt.shape[-1]
    f3 = _leaky(f3_pt.reshape(Bt, Npad, c3) + f3_cl.reshape(Bt, 1, c3))

    # conv4 (512 -> 1024), no activation
    f4 = jnp.dot(f3.reshape(Bt * Npad, c3), w4[...],
                 preferred_element_type=jnp.float32) + b4[...]

    # point_maxpool (no keepdims) -> one 1024-d feature per cloud
    c4 = f4.shape[-1]
    g4 = jnp.max(jnp.where(valid, f4.reshape(Bt, Npad, c4), _NEG_SENTINEL), axis=1)
    g4_ref[...] = jnp.where(nonempty, g4, 0.0)


def _head_kernel(g4_ref, w5, b5, w6, b6, w7cat, b7cat, out_ref, *, pos_cols):
    """conv5/conv6 + fused conv7|conv7_conf heads, batched over all clouds."""
    g4 = g4_ref[...]                                                         # [B, 1024]
    h5 = jnp.dot(g4, w5[...], preferred_element_type=jnp.float32) + b5[...]  # [B, 512]
    h6 = jnp.dot(h5, w6[...], preferred_element_type=jnp.float32) + b6[...]  # [B, 256]
    y = jnp.dot(h6, w7cat[...], preferred_element_type=jnp.float32) + b7cat[...]  # [B, 4K]
    col = jax.lax.broadcasted_iota(jnp.int32, y.shape, 1)
    # ReLU only on the confidence columns (>= pos_cols).
    out_ref[...] = jnp.where(col < pos_cols, y, jnp.maximum(y, 0.0))


def init_params(key, input_chal, output_obj=10):
    dims = [
        ("w1", (input_chal, 128)), ("b1", (1, 128)),
        ("w2", (128, 256)), ("b2", (1, 256)),
        ("w3", (512, 512)), ("b3", (1, 512)),
        ("w4", (512, 1024)), ("b4", (1, 1024)),
        ("w5", (1024, 512)), ("b5", (1, 512)),
        ("w6", (512, 256)), ("b6", (1, 256)),
        ("w7", (256, output_obj * 3)), ("b7", (1, output_obj * 3)),
        ("w7c", (256, output_obj)), ("b7c", (1, output_obj)),
    ]
    params = {}
    for name, shape in dims:
        key, sub = jax.random.split(key)
        scale = 0.1 if name.startswith("w") else 0.01
        params[name] = (scale * jax.random.normal(sub, shape)).astype(jnp.float32)
    return params


@functools.partial(jax.jit, static_argnames=("output_obj",))
def objectcloud_encoder_pallas(partial_ncl, npts, params, output_obj=10):
    """partial_ncl: [B, Cin, Npad] (PyTorch NCL), npts: [B] int32."""
    B, Cin, Npad = partial_ncl.shape
    K = output_obj

    # NCL -> [B, Npad, Cin]: points on sublanes, channels on lanes, so each
    # ks=1 conv is a plain [M, Cin] @ [Cin, Cout] matmul.  (x is tiny compared
    # to the f1..f4 activations, so its lane padding is not on the roofline.)
    x = jnp.transpose(partial_ncl, (0, 2, 1)).astype(jnp.float32)

    # Pad the point axis to a sublane multiple so (Bt,Npad,C) <-> (Bt*Npad,C)
    # reshapes in the kernel are layout-preserving; padded points are masked.
    npad_p = _round_up(Npad, 8)
    if npad_p != Npad:
        x = jnp.pad(x, ((0, 0), (0, npad_p - Npad), (0, 0)))

    # Clouds per grid step: make M = Bt*npad_p large enough to feed the MXU
    # while keeping fp32 activations (~9.7 KB / point) well inside VMEM.
    MAX_PTS = 1024
    if B * npad_p <= MAX_PTS:
        bt, b_pad = B, B                      # one grid step over the whole batch
    else:
        bt = max(8, min(_round_up(B, 8), (MAX_PTS // npad_p) // 8 * 8))
        b_pad = _round_up(B, bt)
    if b_pad != B:
        x = jnp.pad(x, ((0, b_pad - B), (0, 0), (0, 0)))

    npts_col = jnp.zeros((b_pad, 1), jnp.int32).at[:B, 0].set(npts.astype(jnp.int32))

    # Split conv3's weight: rows 0..255 act on the per-point features, rows
    # 256..511 on the broadcast per-cloud max (done in the wrapper -> no
    # in-kernel slicing).
    c_mid = params["w2"].shape[1]
    w3a = params["w3"][:c_mid]
    w3b = params["w3"][c_mid:]
    point_w = [params["w1"], params["b1"], params["w2"], params["b2"],
               w3a, w3b, params["b3"], params["w4"], params["b4"]]
    c4 = params["w4"].shape[1]

    def const_spec(a):
        return pl.BlockSpec(a.shape, lambda i: (0,) * a.ndim)

    g4 = pl.pallas_call(
        _point_encoder_kernel,
        out_shape=jax.ShapeDtypeStruct((b_pad, c4), jnp.float32),
        grid_spec=pltpu.PrefetchScalarGridSpec(
            num_scalar_prefetch=0,
            grid=(b_pad // bt,),
            in_specs=[pl.BlockSpec((bt, npad_p, Cin), lambda i: (i, 0, 0)),
                      pl.BlockSpec((bt, 1), lambda i: (i, 0))]
                     + [const_spec(a) for a in point_w],
            out_specs=pl.BlockSpec((bt, c4), lambda i: (i, 0)),
        ),
        compiler_params=pltpu.CompilerParams(
            dimension_semantics=("parallel",),          # independent clouds
            vmem_limit_bytes=48 * 1024 * 1024,          # safe on v7x (64 MiB)
        ),
    )(x, npts_col, *point_w)

    g4 = g4[:B]                                         # drop batch padding

    # Per-cloud MLP head, batched over all B clouds; pos|conf fused into one
    # output slab so the store is a single contiguous write.
    w7cat = jnp.concatenate([params["w7"], params["w7c"]], axis=1)   # [256, 4K]
    b7cat = jnp.concatenate([params["b7"], params["b7c"]], axis=1)   # [1, 4K]
    head_w = [params["w5"], params["b5"], params["w6"], params["b6"], w7cat, b7cat]

    head_out = pl.pallas_call(
        functools.partial(_head_kernel, pos_cols=3 * K),
        out_shape=jax.ShapeDtypeStruct((B, 4 * K), jnp.float32),
        grid_spec=pltpu.PrefetchScalarGridSpec(
            num_scalar_prefetch=0,
            grid=(1,),
            in_specs=[pl.BlockSpec((B, c4), lambda i: (0, 0))]
                     + [const_spec(a) for a in head_w],
            out_specs=pl.BlockSpec((B, 4 * K), lambda i: (0, 0)),
        ),
        compiler_params=pltpu.CompilerParams(
            dimension_semantics=("arbitrary",),
            vmem_limit_bytes=16 * 1024 * 1024,
        ),
    )(g4, *head_w)

    object_pos = head_out[:, :3 * K].reshape(B, K, 3)
    conf = head_out[:, 3 * K:]
    return object_pos, conf


def reference_forward(partial_ncl, npts, params, output_obj=10):
    """Plain-NumPy replica of the PyTorch forward (ragged concat version)."""
    partial_ncl = np.asarray(partial_ncl, dtype=np.float32)
    npts = np.asarray(npts, dtype=np.int64)
    B = partial_ncl.shape[0]
    P = {k: np.asarray(v) for k, v in params.items()}

    def leaky(v):
        return np.where(v > 0, v, 0.1 * v)

    cols = [partial_ncl[i, :, :int(npts[i])].T for i in range(B)]   # [n_i, Cin]
    x = np.concatenate(cols, axis=0)                                # [total, Cin]
    f1 = leaky(x @ P["w1"] + P["b1"])
    f2 = leaky(f1 @ P["w2"] + P["b2"])

    offs = np.concatenate([[0], np.cumsum(npts)])
    g2 = np.stack([f2[offs[i]:offs[i + 1]].max(axis=0) for i in range(B)])   # [B, 256]
    g2_per_point = np.concatenate(
        [np.repeat(g2[i:i + 1], int(npts[i]), axis=0) for i in range(B)], axis=0)
    f_cat = np.concatenate([f2, g2_per_point], axis=-1)

    f3 = leaky(f_cat @ P["w3"] + P["b3"])
    f4 = f3 @ P["w4"] + P["b4"]
    g4 = np.stack([f4[offs[i]:offs[i + 1]].max(axis=0) for i in range(B)])   # [B, 1024]

    h5 = g4 @ P["w5"] + P["b5"]
    h6 = h5 @ P["w6"] + P["b6"]
    pos = (h6 @ P["w7"] + P["b7"]).reshape(B, output_obj, 3)
    conf = np.maximum(h6 @ P["w7c"] + P["b7c"], 0.0)
    return pos, conf


if __name__ == "__main__":
    key = jax.random.PRNGKey(0)
    B, Cin, Npad, K = 2, 4, 16, 10

    k_x, k_p = jax.random.split(key)
    partial = jax.random.normal(k_x, (B, Cin, Npad), dtype=jnp.float32)   # NCL like PyTorch
    npts = jnp.array([12, 16], dtype=jnp.int32)                           # ragged point counts
    params = init_params(k_p, Cin, K)

    object_pos, conf = objectcloud_encoder_pallas(partial, npts, params, output_obj=K)
    jax.block_until_ready((object_pos, conf))

    ref_pos, ref_conf = reference_forward(partial, npts, params, output_obj=K)
    np.testing.assert_allclose(np.asarray(object_pos), ref_pos, rtol=1e-4, atol=1e-4)
    np.testing.assert_allclose(np.asarray(conf), ref_conf, rtol=1e-4, atol=1e-4)

    assert object_pos.shape == (B, K, 3) and conf.shape == (B, K)
    print("KERNEL_OK")
</pallas_src>

<mosaic_0001>
module attributes {stable_mosaic.version = 11 : i64} {
  func.func @_point_encoder_kernel(%arg0: i32, %arg1: memref<2x16x4xf32, #tpu.memory_space<vmem>>, %arg2: memref<2x1xi32, #tpu.memory_space<vmem>>, %arg3: memref<4x128xf32, #tpu.memory_space<vmem>>, %arg4: memref<1x128xf32, #tpu.memory_space<vmem>>, %arg5: memref<128x256xf32, #tpu.memory_space<vmem>>, %arg6: memref<1x256xf32, #tpu.memory_space<vmem>>, %arg7: memref<256x512xf32, #tpu.memory_space<vmem>>, %arg8: memref<256x512xf32, #tpu.memory_space<vmem>>, %arg9: memref<1x512xf32, #tpu.memory_space<vmem>>, %arg10: memref<512x1024xf32, #tpu.memory_space<vmem>>, %arg11: memref<1x1024xf32, #tpu.memory_space<vmem>>, %arg12: memref<2x1024xf32, #tpu.memory_space<vmem>>) attributes {dimension_semantics = [#tpu.dimension_semantics<parallel>], iteration_bounds = array<i64: 1>, scalar_prefetch = 0 : i64, scratch_operands = 0 : i64, tpu.core_type = #tpu.core_type<tc>, window_params = [{transform_indices = @transform_0, window_bounds = array<i64: 2, 16, 4>}, {transform_indices = @transform_1, window_bounds = array<i64: 2, 1>}, {pipeline_mode = #tpu.pipeline_mode<synchronous>, transform_indices = @transform_2, window_bounds = array<i64: 4, 128>}, {pipeline_mode = #tpu.pipeline_mode<synchronous>, transform_indices = @transform_3, window_bounds = array<i64: 1, 128>}, {pipeline_mode = #tpu.pipeline_mode<synchronous>, transform_indices = @transform_4, window_bounds = array<i64: 128, 256>}, {pipeline_mode = #tpu.pipeline_mode<synchronous>, transform_indices = @transform_5, window_bounds = array<i64: 1, 256>}, {pipeline_mode = #tpu.pipeline_mode<synchronous>, transform_indices = @transform_6, window_bounds = array<i64: 256, 512>}, {pipeline_mode = #tpu.pipeline_mode<synchronous>, transform_indices = @transform_7, window_bounds = array<i64: 256, 512>}, {pipeline_mode = #tpu.pipeline_mode<synchronous>, transform_indices = @transform_8, window_bounds = array<i64: 1, 512>}, {pipeline_mode = #tpu.pipeline_mode<synchronous>, transform_indices = @transform_9, window_bounds = array<i64: 512, 1024>}, {pipeline_mode = #tpu.pipeline_mode<synchronous>, transform_indices = @transform_10, window_bounds = array<i64: 1, 1024>}, {transform_indices = @transform_11, window_bounds = array<i64: 2, 1024>}]} {
    %c0 = arith.constant 0 : index
    %c0_0 = arith.constant 0 : index
    %c0_1 = arith.constant 0 : index
    %0 = vector.load %arg1[%c0, %c0_0, %c0_1] : memref<2x16x4xf32, #tpu.memory_space<vmem>>, vector<2x16x4xf32>
    %1 = vector.shape_cast %0 : vector<2x16x4xf32> to vector<32x4xf32>
    %c0_2 = arith.constant 0 : index
    %c0_3 = arith.constant 0 : index
    %2 = vector.load %arg2[%c0_2, %c0_3] : memref<2x1xi32, #tpu.memory_space<vmem>>, vector<2x1xi32>
    %3 = vector.shape_cast %2 : vector<2x1xi32> to vector<2x1x1xi32>
    %4 = tpu.iota {dimensions = array<i32: 1>} : vector<2x16x1xi32>
    %5 = vector.broadcast %3 : vector<2x1x1xi32> to vector<2x16x1xi32>
    %6 = arith.cmpi slt, %4, %5 : vector<2x16x1xi32>
    %c0_4 = arith.constant 0 : index
    %c0_5 = arith.constant 0 : index
    %7 = vector.load %arg2[%c0_4, %c0_5] : memref<2x1xi32, #tpu.memory_space<vmem>>, vector<2x1xi32>
    %c0_i32 = arith.constant 0 : i32
    %8 = vector.broadcast %c0_i32 : i32 to vector<2x1xi32>
    %9 = arith.cmpi sgt, %7, %8 : vector<2x1xi32>
    %c0_6 = arith.constant 0 : index
    %c0_7 = arith.constant 0 : index
    %10 = vector.load %arg3[%c0_6, %c0_7] : memref<4x128xf32, #tpu.memory_space<vmem>>, vector<4x128xf32>
    %cst = arith.constant dense<0.000000e+00> : vector<32x128xf32>
    %11 = tpu.matmul %1, %10, %cst {dimension_numbers = #tpu.dot_dimension_numbers<[1], [0], [0], [1], [0, 0, 1, 1], [], []>} : vector<32x4xf32>, vector<4x128xf32>, vector<32x128xf32> -> vector<32x128xf32>
    %c0_8 = arith.constant 0 : index
    %c0_9 = arith.constant 0 : index
    %12 = vector.load %arg4[%c0_8, %c0_9] : memref<1x128xf32, #tpu.memory_space<vmem>>, vector<1x128xf32>
    %13 = vector.broadcast %12 : vector<1x128xf32> to vector<32x128xf32>
    %14 = arith.addf %11, %13 : vector<32x128xf32>
    %cst_10 = arith.constant 0.000000e+00 : f32
    %15 = vector.broadcast %cst_10 : f32 to vector<32x128xf32>
    %16 = arith.cmpf ogt, %14, %15 : vector<32x128xf32>
    %cst_11 = arith.constant 1.000000e-01 : f32
    %17 = vector.broadcast %cst_11 : f32 to vector<32x128xf32>
    %18 = arith.mulf %17, %14 : vector<32x128xf32>
    %19 = arith.select %16, %14, %18 : vector<32x128xi1>, vector<32x128xf32>
    %c0_12 = arith.constant 0 : index
    %c0_13 = arith.constant 0 : index
    %20 = vector.load %arg5[%c0_12, %c0_13] : memref<128x256xf32, #tpu.memory_space<vmem>>, vector<128x256xf32>
    %cst_14 = arith.constant dense<0.000000e+00> : vector<32x256xf32>
    %21 = tpu.matmul %19, %20, %cst_14 {dimension_numbers = #tpu.dot_dimension_numbers<[1], [0], [0], [1], [0, 0, 1, 1], [], []>} : vector<32x128xf32>, vector<128x256xf32>, vector<32x256xf32> -> vector<32x256xf32>
    %c0_15 = arith.constant 0 : index
    %c0_16 = arith.constant 0 : index
    %22 = vector.load %arg6[%c0_15, %c0_16] : memref<1x256xf32, #tpu.memory_space<vmem>>, vector<1x256xf32>
    %23 = vector.broadcast %22 : vector<1x256xf32> to vector<32x256xf32>
    %24 = arith.addf %21, %23 : vector<32x256xf32>
    %cst_17 = arith.constant 0.000000e+00 : f32
    %25 = vector.broadcast %cst_17 : f32 to vector<32x256xf32>
    %26 = arith.cmpf ogt, %24, %25 : vector<32x256xf32>
    %cst_18 = arith.constant 1.000000e-01 : f32
    %27 = vector.broadcast %cst_18 : f32 to vector<32x256xf32>
    %28 = arith.mulf %27, %24 : vector<32x256xf32>
    %29 = arith.select %26, %24, %28 : vector<32x256xi1>, vector<32x256xf32>
    %30 = vector.shape_cast %29 : vector<32x256xf32> to vector<2x16x256xf32>
    %cst_19 = arith.constant -3.000000e+38 : f32
    %31 = vector.shape_cast %6 : vector<2x16x1xi1> to vector<2x16x1xi1>
    %32 = vector.broadcast %31 : vector<2x16x1xi1> to vector<2x16x256xi1>
    %33 = vector.broadcast %cst_19 : f32 to vector<2x16x256xf32>
    %34 = arith.select %32, %30, %33 : vector<2x16x256xi1>, vector<2x16x256xf32>
    %cst_20 = arith.constant dense<0xFF800000> : vector<2x256xf32>
    %35 = vector.multi_reduction <maximumf>, %34, %cst_20 [1] : vector<2x16x256xf32> to vector<2x256xf32>
    %cst_21 = arith.constant 0.000000e+00 : f32
    %36 = vector.shape_cast %9 : vector<2x1xi1> to vector<2x1xi1>
    %37 = vector.broadcast %36 : vector<2x1xi1> to vector<2x256xi1>
    %38 = vector.broadcast %cst_21 : f32 to vector<2x256xf32>
    %39 = arith.select %37, %35, %38 : vector<2x256xi1>, vector<2x256xf32>
    %c0_22 = arith.constant 0 : index
    %c0_23 = arith.constant 0 : index
    %40 = vector.load %arg7[%c0_22, %c0_23] : memref<256x512xf32, #tpu.memory_space<vmem>>, vector<256x512xf32>
    %cst_24 = arith.constant dense<0.000000e+00> : vector<32x512xf32>
    %41 = tpu.matmul %29, %40, %cst_24 {dimension_numbers = #tpu.dot_dimension_numbers<[1], [0], [0], [1], [0, 0, 1, 1], [], []>} : vector<32x256xf32>, vector<256x512xf32>, vector<32x512xf32> -> vector<32x512xf32>
    %c0_25 = arith.constant 0 : index
    %c0_26 = arith.constant 0 : index
    %42 = vector.load %arg8[%c0_25, %c0_26] : memref<256x512xf32, #tpu.memory_space<vmem>>, vector<256x512xf32>
    %cst_27 = arith.constant dense<0.000000e+00> : vector<2x512xf32>
    %43 = tpu.matmul %39, %42, %cst_27 {dimension_numbers = #tpu.dot_dimension_numbers<[1], [0], [0], [1], [0, 0, 1, 1], [], []>} : vector<2x256xf32>, vector<256x512xf32>, vector<2x512xf32> -> vector<2x512xf32>
    %c0_28 = arith.constant 0 : index
    %c0_29 = arith.constant 0 : index
    %44 = vector.load %arg9[%c0_28, %c0_29] : memref<1x512xf32, #tpu.memory_space<vmem>>, vector<1x512xf32>
    %45 = vector.broadcast %44 : vector<1x512xf32> to vector<2x512xf32>
    %46 = arith.addf %43, %45 : vector<2x512xf32>
    %47 = vector.shape_cast %41 : vector<32x512xf32> to vector<2x16x512xf32>
    %48 = vector.shape_cast %46 : vector<2x512xf32> to vector<2x1x512xf32>
    %49 = vector.broadcast %48 : vector<2x1x512xf32> to vector<2x16x512xf32>
    %50 = arith.addf %47, %49 : vector<2x16x512xf32>
    %cst_30 = arith.constant 0.000000e+00 : f32
    %51 = vector.broadcast %cst_30 : f32 to vector<2x16x512xf32>
    %52 = arith.cmpf ogt, %50, %51 : vector<2x16x512xf32>
    %cst_31 = arith.constant 1.000000e-01 : f32
    %53 = vector.broadcast %cst_31 : f32 to vector<2x16x512xf32>
    %54 = arith.mulf %53, %50 : vector<2x16x512xf32>
    %55 = arith.select %52, %50, %54 : vector<2x16x512xi1>, vector<2x16x512xf32>
    %56 = vector.shape_cast %55 : vector<2x16x512xf32> to vector<32x512xf32>
    %c0_32 = arith.constant 0 : index
    %c0_33 = arith.constant 0 : index
    %57 = vector.load %arg10[%c0_32, %c0_33] : memref<512x1024xf32, #tpu.memory_space<vmem>>, vector<512x1024xf32>
    %cst_34 = arith.constant dense<0.000000e+00> : vector<32x1024xf32>
    %58 = tpu.matmul %56, %57, %cst_34 {dimension_numbers = #tpu.dot_dimension_numbers<[1], [0], [0], [1], [0, 0, 1, 1], [], []>} : vector<32x512xf32>, vector<512x1024xf32>, vector<32x1024xf32> -> vector<32x1024xf32>
    %c0_35 = arith.constant 0 : index
    %c0_36 = arith.constant 0 : index
    %59 = vector.load %arg11[%c0_35, %c0_36] : memref<1x1024xf32, #tpu.memory_space<vmem>>, vector<1x1024xf32>
    %60 = vector.broadcast %59 : vector<1x1024xf32> to vector<32x1024xf32>
    %61 = arith.addf %58, %60 : vector<32x1024xf32>
    %62 = vector.shape_cast %61 : vector<32x1024xf32> to vector<2x16x1024xf32>
    %cst_37 = arith.constant -3.000000e+38 : f32
    %63 = vector.shape_cast %6 : vector<2x16x1xi1> to vector<2x16x1xi1>
    %64 = vector.broadcast %63 : vector<2x16x1xi1> to vector<2x16x1024xi1>
    %65 = vector.broadcast %cst_37 : f32 to vector<2x16x1024xf32>
    %66 = arith.select %64, %62, %65 : vector<2x16x1024xi1>, vector<2x16x1024xf32>
    %cst_38 = arith.constant dense<0xFF800000> : vector<2x1024xf32>
    %67 = vector.multi_reduction <maximumf>, %66, %cst_38 [1] : vector<2x16x1024xf32> to vector<2x1024xf32>
    %cst_39 = arith.constant 0.000000e+00 : f32
    %68 = vector.shape_cast %9 : vector<2x1xi1> to vector<2x1xi1>
    %69 = vector.broadcast %68 : vector<2x1xi1> to vector<2x1024xi1>
    %70 = vector.broadcast %cst_39 : f32 to vector<2x1024xf32>
    %71 = arith.select %69, %67, %70 : vector<2x1024xi1>, vector<2x1024xf32>
    %c0_40 = arith.constant 0 : index
    %c0_41 = arith.constant 0 : index
    %72 = vector.load %arg12[%c0_40, %c0_41] : memref<2x1024xf32, #tpu.memory_space<vmem>>, vector<2x1024xf32>
    tpu.vector_store %arg12[%c0_40, %c0_41], %71 {strides = array<i32>} : memref<2x1024xf32, #tpu.memory_space<vmem>>, vector<2x1024xf32>,
    return
  }
  func.func @transform_0(%arg0: i32) -> (i32, i32, i32) {
    %c0_i32 = arith.constant 0 : i32
    %c0_i32_0 = arith.constant 0 : i32
    %c0_i32_1 = arith.constant 0 : i32
    return %arg0, %c0_i32, %c0_i32_0 : i32, i32, i32
  }
  func.func @transform_1(%arg0: i32) -> (i32, i32) {
    %c0_i32 = arith.constant 0 : i32
    %c0_i32_0 = arith.constant 0 : i32
    return %arg0, %c0_i32 : i32, i32
  }
  func.func @transform_2(%arg0: i32) -> (i32, i32) {
    %c0_i32 = arith.constant 0 : i32
    %c0_i32_0 = arith.constant 0 : i32
    %c0_i32_1 = arith.constant 0 : i32
    return %c0_i32, %c0_i32_0 : i32, i32
  }
  func.func @transform_3(%arg0: i32) -> (i32, i32) {
    %c0_i32 = arith.constant 0 : i32
    %c0_i32_0 = arith.constant 0 : i32
    %c0_i32_1 = arith.constant 0 : i32
    return %c0_i32, %c0_i32_0 : i32, i32
  }
  func.func @transform_4(%arg0: i32) -> (i32, i32) {
    %c0_i32 = arith.constant 0 : i32
    %c0_i32_0 = arith.constant 0 : i32
    %c0_i32_1 = arith.constant 0 : i32
    return %c0_i32, %c0_i32_0 : i32, i32
  }
  func.func @transform_5(%arg0: i32) -> (i32, i32) {
    %c0_i32 = arith.constant 0 : i32
    %c0_i32_0 = arith.constant 0 : i32
    %c0_i32_1 = arith.constant 0 : i32
    return %c0_i32, %c0_i32_0 : i32, i32
  }
  func.func @transform_6(%arg0: i32) -> (i32, i32) {
    %c0_i32 = arith.constant 0 : i32
    %c0_i32_0 = arith.constant 0 : i32
    %c0_i32_1 = arith.constant 0 : i32
    return %c0_i32, %c0_i32_0 : i32, i32
  }
  func.func @transform_7(%arg0: i32) -> (i32, i32) {
    %c0_i32 = arith.constant 0 : i32
    %c0_i32_0 = arith.constant 0 : i32
    %c0_i32_1 = arith.constant 0 : i32
    return %c0_i32, %c0_i32_0 : i32, i32
  }
  func.func @transform_8(%arg0: i32) -> (i32, i32) {
    %c0_i32 = arith.constant 0 : i32
    %c0_i32_0 = arith.constant 0 : i32
    %c0_i32_1 = arith.constant 0 : i32
    return %c0_i32, %c0_i32_0 : i32, i32
  }
  func.func @transform_9(%arg0: i32) -> (i32, i32) {
    %c0_i32 = arith.constant 0 : i32
    %c0_i32_0 = arith.constant 0 : i32
    %c0_i32_1 = arith.constant 0 : i32
    return %c0_i32, %c0_i32_0 : i32, i32
  }
  func.func @transform_10(%arg0: i32) -> (i32, i32) {
    %c0_i32 = arith.constant 0 : i32
    %c0_i32_0 = arith.constant 0 : i32
    %c0_i32_1 = arith.constant 0 : i32
    return %c0_i32, %c0_i32_0 : i32, i32
  }
  func.func @transform_11(%arg0: i32) -> (i32, i32) {
    %c0_i32 = arith.constant 0 : i32
    %c0_i32_0 = arith.constant 0 : i32
    return %arg0, %c0_i32 : i32, i32
  }
}

module attributes {stable_mosaic.version = 11 : i64} {
  func.func @_head_kernel(%arg0: i32, %arg1: memref<2x1024xf32, #tpu.memory_space<vmem>>, %arg2: memref<1024x512xf32, #tpu.memory_space<vmem>>, %arg3: memref<1x512xf32, #tpu.memory_space<vmem>>, %arg4: memref<512x256xf32, #tpu.memory_space<vmem>>, %arg5: memref<1x256xf32, #tpu.memory_space<vmem>>, %arg6: memref<256x40xf32, #tpu.memory_space<vmem>>, %arg7: memref<1x40xf32, #tpu.memory_space<vmem>>, %arg8: memref<2x40xf32, #tpu.memory_space<vmem>>) attributes {dimension_semantics = [#tpu.dimension_semantics<arbitrary>], iteration_bounds = array<i64: 1>, scalar_prefetch = 0 : i64, scratch_operands = 0 : i64, tpu.core_type = #tpu.core_type<tc>, window_params = [{pipeline_mode = #tpu.pipeline_mode<synchronous>, transform_indices = @transform_0, window_bounds = array<i64: 2, 1024>}, {pipeline_mode = #tpu.pipeline_mode<synchronous>, transform_indices = @transform_1, window_bounds = array<i64: 1024, 512>}, {pipeline_mode = #tpu.pipeline_mode<synchronous>, transform_indices = @transform_2, window_bounds = array<i64: 1, 512>}, {pipeline_mode = #tpu.pipeline_mode<synchronous>, transform_indices = @transform_3, window_bounds = array<i64: 512, 256>}, {pipeline_mode = #tpu.pipeline_mode<synchronous>, transform_indices = @transform_4, window_bounds = array<i64: 1, 256>}, {pipeline_mode = #tpu.pipeline_mode<synchronous>, transform_indices = @transform_5, window_bounds = array<i64: 256, 40>}, {pipeline_mode = #tpu.pipeline_mode<synchronous>, transform_indices = @transform_6, window_bounds = array<i64: 1, 40>}, {pipeline_mode = #tpu.pipeline_mode<synchronous>, transform_indices = @transform_7, window_bounds = array<i64: 2, 40>}]} {
    %c0 = arith.constant 0 : index
    %c0_0 = arith.constant 0 : index
    %0 = vector.load %arg1[%c0, %c0_0] : memref<2x1024xf32, #tpu.memory_space<vmem>>, vector<2x1024xf32>
    %c0_1 = arith.constant 0 : index
    %c0_2 = arith.constant 0 : index
    %1 = vector.load %arg2[%c0_1, %c0_2] : memref<1024x512xf32, #tpu.memory_space<vmem>>, vector<1024x512xf32>
    %cst = arith.constant dense<0.000000e+00> : vector<2x512xf32>
    %2 = tpu.matmul %0, %1, %cst {dimension_numbers = #tpu.dot_dimension_numbers<[1], [0], [0], [1], [0, 0, 1, 1], [], []>} : vector<2x1024xf32>, vector<1024x512xf32>, vector<2x512xf32> -> vector<2x512xf32>
    %c0_3 = arith.constant 0 : index
    %c0_4 = arith.constant 0 : index
    %3 = vector.load %arg3[%c0_3, %c0_4] : memref<1x512xf32, #tpu.memory_space<vmem>>, vector<1x512xf32>
    %4 = vector.broadcast %3 : vector<1x512xf32> to vector<2x512xf32>
    %5 = arith.addf %2, %4 : vector<2x512xf32>
    %c0_5 = arith.constant 0 : index
    %c0_6 = arith.constant 0 : index
    %6 = vector.load %arg4[%c0_5, %c0_6] : memref<512x256xf32, #tpu.memory_space<vmem>>, vector<512x256xf32>
    %cst_7 = arith.constant dense<0.000000e+00> : vector<2x256xf32>
    %7 = tpu.matmul %5, %6, %cst_7 {dimension_numbers = #tpu.dot_dimension_numbers<[1], [0], [0], [1], [0, 0, 1, 1], [], []>} : vector<2x512xf32>, vector<512x256xf32>, vector<2x256xf32> -> vector<2x256xf32>
    %c0_8 = arith.constant 0 : index
    %c0_9 = arith.constant 0 : index
    %8 = vector.load %arg5[%c0_8, %c0_9] : memref<1x256xf32, #tpu.memory_space<vmem>>, vector<1x256xf32>
    %9 = vector.broadcast %8 : vector<1x256xf32> to vector<2x256xf32>
    %10 = arith.addf %7, %9 : vector<2x256xf32>
    %c0_10 = arith.constant 0 : index
    %c0_11 = arith.constant 0 : index
    %11 = vector.load %arg6[%c0_10, %c0_11] : memref<256x40xf32, #tpu.memory_space<vmem>>, vector<256x40xf32>
    %cst_12 = arith.constant dense<0.000000e+00> : vector<2x40xf32>
    %12 = tpu.matmul %10, %11, %cst_12 {dimension_numbers = #tpu.dot_dimension_numbers<[1], [0], [0], [1], [0, 0, 1, 1], [], []>} : vector<2x256xf32>, vector<256x40xf32>, vector<2x40xf32> -> vector<2x40xf32>
    %c0_13 = arith.constant 0 : index
    %c0_14 = arith.constant 0 : index
    %13 = vector.load %arg7[%c0_13, %c0_14] : memref<1x40xf32, #tpu.memory_space<vmem>>, vector<1x40xf32>
    %14 = vector.broadcast %13 : vector<1x40xf32> to vector<2x40xf32>
    %15 = arith.addf %12, %14 : vector<2x40xf32>
    %16 = tpu.iota {dimensions = array<i32: 1>} : vector<2x40xi32>
    %c30_i32 = arith.constant 30 : i32
    %17 = vector.broadcast %c30_i32 : i32 to vector<2x40xi32>
    %18 = arith.cmpi slt, %16, %17 : vector<2x40xi32>
    %cst_15 = arith.constant 0.000000e+00 : f32
    %19 = vector.broadcast %cst_15 : f32 to vector<2x40xf32>
    %20 = arith.maximumf %15, %19 : vector<2x40xf32>
    %21 = arith.select %18, %15, %20 : vector<2x40xi1>, vector<2x40xf32>
    %c0_16 = arith.constant 0 : index
    %c0_17 = arith.constant 0 : index
    %22 = vector.load %arg8[%c0_16, %c0_17] : memref<2x40xf32, #tpu.memory_space<vmem>>, vector<2x40xf32>
    tpu.vector_store %arg8[%c0_16, %c0_17], %21 {strides = array<i32>} : memref<2x40xf32, #tpu.memory_space<vmem>>, vector<2x40xf32>,
    return
  }
  func.func @transform_0(%arg0: i32) -> (i32, i32) {
    %c0_i32 = arith.constant 0 : i32
    %c0_i32_0 = arith.constant 0 : i32
    %c0_i32_1 = arith.constant 0 : i32
    return %c0_i32, %c0_i32_0 : i32, i32
  }
  func.func @transform_1(%arg0: i32) -> (i32, i32) {
    %c0_i32 = arith.constant 0 : i32
    %c0_i32_0 = arith.constant 0 : i32
    %c0_i32_1 = arith.constant 0 : i32
    return %c0_i32, %c0_i32_0 : i32, i32
  }
  func.func @transform_2(%arg0: i32) -> (i32, i32) {
    %c0_i32 = arith.constant 0 : i32
    %c0_i32_0 = arith.constant 0 : i32
    %c0_i32_1 = arith.constant 0 : i32
    return %c0_i32, %c0_i32_0 : i32, i32
  }
  func.func @transform_3(%arg0: i32) -> (i32, i32) {
    %c0_i32 = arith.constant 0 : i32
    %c0_i32_0 = arith.constant 0 : i32
    %c0_i32_1 = arith.constant 0 : i32
    return %c0_i32, %c0_i32_0 : i32, i32
  }
  func.func @transform_4(%arg0: i32) -> (i32, i32) {
    %c0_i32 = arith.constant 0 : i32
    %c0_i32_0 = arith.constant 0 : i32
    %c0_i32_1 = arith.constant 0 : i32
    return %c0_i32, %c0_i32_0 : i32, i32
  }
  func.func @transform_5(%arg0: i32) -> (i32, i32) {
    %c0_i32 = arith.constant 0 : i32
    %c0_i32_0 = arith.constant 0 : i32
    %c0_i32_1 = arith.constant 0 : i32
    return %c0_i32, %c0_i32_0 : i32, i32
  }
  func.func @transform_6(%arg0: i32) -> (i32, i32) {
    %c0_i32 = arith.constant 0 : i32
    %c0_i32_0 = arith.constant 0 : i32
    %c0_i32_1 = arith.constant 0 : i32
    return %c0_i32, %c0_i32_0 : i32, i32
  }
  func.func @transform_7(%arg0: i32) -> (i32, i32) {
    %c0_i32 = arith.constant 0 : i32
    %c0_i32_0 = arith.constant 0 : i32
    %c0_i32_1 = arith.constant 0 : i32
    return %c0_i32, %c0_i32_0 : i32, i32
  }
}

</mosaic_0001>

<llo_original>
// kernel: objectcloud_encoder_pallas.3
$region0: #{objectcloud_encoder_pallas.3}
  #allocation0 [shape = 'u32[]', space=smem, size = 0x4, offset = 0x4, fixed_abs, tag = 'smem constant byte address 0x4 - core index']
  #allocation1 [shape = 'u32[72,128]{1,0:T(1,128)}', space=vmem, size = 0x9000, scoped, tag = 'internal scratch']
  %s0 = inlined_call_operand.vmem [shape: f32[2,1024], index: 0, kind: input, shape index: {}]
  %s1 = inlined_call_operand.vmem [shape: f32[1024,512], index: 1, kind: input, shape index: {}]
  %s2 = inlined_call_operand.vmem [shape: f32[1,512], index: 2, kind: input, shape index: {}]
  %s3 = inlined_call_operand.hbm [shape: f32[512,256], index: 3, kind: input, shape index: {}]
  %s4 = inlined_call_operand.vmem [shape: f32[1,256], index: 4, kind: input, shape index: {}]
  %s5 = inlined_call_operand.vmem [shape: f32[256,40], index: 5, kind: input, shape index: {}]
  %s6 = inlined_call_operand.vmem [shape: f32[1,40], index: 6, kind: input, shape index: {}]
  %s7 = inlined_call_operand.vmem [shape: f32[2,40], index: 7, kind: output, shape index: {}]
  %s8 = sld [smem:[#allocation0]]
  $region42: #{objectcloud_encoder_pallas.3} parent=0
    _
  %s10 = ssub.s32 1, %s8
  %s11 = scalar_select 0, %s10, %s8
  $region1: #{objectcloud_encoder_pallas.3} parent=0
    #allocation2 [shape = 'u8[524288]{0}', space=vmem, size = 0x80000, scoped, tag = 'input window, operand 3, single buffered']
    #allocation3 [shape = 's32[1]{0}', space=sflag, size = 0x4, scoped, tag = 'scoped memory for objectcloud_encoder_pallas.3']
    %12 = vsyncpa [#allocation3], 0
    // Predicated region
    $region2: #{objectcloud_encoder_pallas.3} parent=1 // pred_check
      _
    $region3: #{objectcloud_encoder_pallas.3} parent=1 // pred_check_branch
      %14 = sbr.rel (0) target = $region5
    $region4: #{objectcloud_encoder_pallas.3} parent=1 // pred_region
      _
    $region5: #{objectcloud_encoder_pallas.3} parent=1 // pred_fallthru
      _
    // Predicated region
    $region6: #{objectcloud_encoder_pallas.3} parent=1 // pred_check
      _
    $region7: #{objectcloud_encoder_pallas.3} parent=1 // pred_check_branch
      %16 = sbr.rel (0) target = $region9
    $region8: #{objectcloud_encoder_pallas.3} parent=1 // pred_region
      _
    $region9: #{objectcloud_encoder_pallas.3} parent=1 // pred_fallthru
      _
    // Predicated region
    $region10: #{objectcloud_encoder_pallas.3} parent=1 // pred_check
      _
    $region11: #{objectcloud_encoder_pallas.3} parent=1 // pred_check_branch
      %18 = sbr.rel (0) target = $region13
    $region12: #{objectcloud_encoder_pallas.3} parent=1 // pred_region
      _
    $region13: #{objectcloud_encoder_pallas.3} parent=1 // pred_fallthru
      _
    // Predicated region
    $region14: #{objectcloud_encoder_pallas.3} parent=1 // pred_check
      _
    $region15: #{objectcloud_encoder_pallas.3} parent=1 // pred_check_branch
      %20 = sbr.rel (0) target = $region17
    $region16: #{objectcloud_encoder_pallas.3} parent=1 // pred_region
      %22 = vsyncadd [#allocation3], 0
      %s23 = sshll.u32 %s3, 4
      %s24 = int_to_ptr.hbm [resolvable:$true] %s23
      %s25 = sshll.u32 [#allocation2], 4
      %s26 = int_to_ptr.vmem [resolvable:$true] %s25
      %31 = dma.hbm_to_vmem [thread:$0]  %s24, 16384, %s26, [#allocation3], 256, 256, 16
    $region17: #{objectcloud_encoder_pallas.3} parent=1 // pred_fallthru
      _
    // Predicated region
    $region18: #{objectcloud_encoder_pallas.3} parent=1 // pred_check
      _
    $region19: #{objectcloud_encoder_pallas.3} parent=1 // pred_check_branch
      %33 = sbr.rel (0) target = $region21
    $region20: #{objectcloud_encoder_pallas.3} parent=1 // pred_region
      _
    $region21: #{objectcloud_encoder_pallas.3} parent=1 // pred_fallthru
      _
    // Predicated region
    $region22: #{objectcloud_encoder_pallas.3} parent=1 // pred_check
      _
    $region23: #{objectcloud_encoder_pallas.3} parent=1 // pred_check_branch
      %35 = sbr.rel (0) target = $region25
    $region24: #{objectcloud_encoder_pallas.3} parent=1 // pred_region
      _
    $region25: #{objectcloud_encoder_pallas.3} parent=1 // pred_fallthru
      _
    // Predicated region
    $region26: #{objectcloud_encoder_pallas.3} parent=1 // pred_check
      _
    $region27: #{objectcloud_encoder_pallas.3} parent=1 // pred_check_branch
      %37 = sbr.rel (0) target = $region29
    $region28: #{objectcloud_encoder_pallas.3} parent=1 // pred_region
      _
    $region29: #{objectcloud_encoder_pallas.3} parent=1 // pred_fallthru
      _
    // Predicated region
    $region30: #{objectcloud_encoder_pallas.3} parent=1 // pred_check
      _
    $region31: #{objectcloud_encoder_pallas.3} parent=1 // pred_check_branch
      %39 = sbr.rel (0) target = $region33
    $region32: #{objectcloud_encoder_pallas.3} parent=1 // pred_region
      %41 = dma.done [#allocation3], 16384
    $region33: #{objectcloud_encoder_pallas.3} parent=1 // pred_fallthru
      _
    %v42 = vld [vmem:[%s0] sm:$0xff]
    %v43 = vld [vmem:[%s0 + $0x8] sm:$0xff]
    %v44 = vld [vmem:[%s1] sm:$0xff]
    %v45 = vld [vmem:[%s1 + $0x8] sm:$0xff]
    %v46 = vld [vmem:[%s1 + $0x10] sm:$0xff]
    %v47 = vld [vmem:[%s1 + $0x18] sm:$0xff]
    %v48 = vld [vmem:[%s1 + $0x20] sm:$0xff]
    %v49 = vld [vmem:[%s1 + $0x28] sm:$0xff]
    %v50 = vld [vmem:[%s1 + $0x30] sm:$0xff]
    %v51 = vld [vmem:[%s1 + $0x38] sm:$0xff]
    %v52 = vld [vmem:[%s1 + $0x40] sm:$0xff]
    %v53 = vld [vmem:[%s1 + $0x48] sm:$0xff]
    %v54 = vld [vmem:[%s1 + $0x50] sm:$0xff]
    %v55 = vld [vmem:[%s1 + $0x58] sm:$0xff]
    %v56 = vld [vmem:[%s1 + $0x60] sm:$0xff]
    %v57 = vld [vmem:[%s1 + $0x68] sm:$0xff]
    %v58 = vld [vmem:[%s1 + $0x70] sm:$0xff]
    %v59 = vld [vmem:[%s1 + $0x78] sm:$0xff]
    %v60 = vld [vmem:[%s1 + $0x80] sm:$0xff]
    %v61 = vld [vmem:[%s1 + $0x88] sm:$0xff]
    %v62 = vld [vmem:[%s1 + $0x90] sm:$0xff]
    %v63 = vld [vmem:[%s1 + $0x98] sm:$0xff]
    %v64 = vld [vmem:[%s1 + $0xa0] sm:$0xff]
    %v65 = vld [vmem:[%s1 + $0xa8] sm:$0xff]
    %v66 = vld [vmem:[%s1 + $0xb0] sm:$0xff]
    %v67 = vld [vmem:[%s1 + $0xb8] sm:$0xff]
    %v68 = vld [vmem:[%s1 + $0xc0] sm:$0xff]
    %v69 = vld [vmem:[%s1 + $0xc8] sm:$0xff]
    %v70 = vld [vmem:[%s1 + $0xd0] sm:$0xff]
    %v71 = vld [vmem:[%s1 + $0xd8] sm:$0xff]
    %v72 = vld [vmem:[%s1 + $0xe0] sm:$0xff]
    %v73 = vld [vmem:[%s1 + $0xe8] sm:$0xff]
    %v74 = vld [vmem:[%s1 + $0xf0] sm:$0xff]
    %v75 = vld [vmem:[%s1 + $0xf8] sm:$0xff]
    %v76 = vld [vmem:[%s1 + $0x100] sm:$0xff]
    %v77 = vld [vmem:[%s1 + $0x108] sm:$0xff]
    %v78 = vld [vmem:[%s1 + $0x110] sm:$0xff]
    %v79 = vld [vmem:[%s1 + $0x118] sm:$0xff]
    %v80 = vld [vmem:[%s1 + $0x120] sm:$0xff]
    %v81 = vld [vmem:[%s1 + $0x128] sm:$0xff]
    %v82 = vld [vmem:[%s1 + $0x130] sm:$0xff]
    %v83 = vld [vmem:[%s1 + $0x138] sm:$0xff]
    %v84 = vld [vmem:[%s1 + $0x140] sm:$0xff]
    %v85 = vld [vmem:[%s1 + $0x148] sm:$0xff]
    %v86 = vld [vmem:[%s1 + $0x150] sm:$0xff]
    %v87 = vld [vmem:[%s1 + $0x158] sm:$0xff]
    %v88 = vld [vmem:[%s1 + $0x160] sm:$0xff]
    %v89 = vld [vmem:[%s1 + $0x168] sm:$0xff]
    %v90 = vld [vmem:[%s1 + $0x170] sm:$0xff]
    %v91 = vld [vmem:[%s1 + $0x178] sm:$0xff]
    %v92 = vld [vmem:[%s1 + $0x180] sm:$0xff]
    %v93 = vld [vmem:[%s1 + $0x188] sm:$0xff]
    %v94 = vld [vmem:[%s1 + $0x190] sm:$0xff]
    %v95 = vld [vmem:[%s1 + $0x198] sm:$0xff]
    %v96 = vld [vmem:[%s1 + $0x1a0] sm:$0xff]
    %v97 = vld [vmem:[%s1 + $0x1a8] sm:$0xff]
    %v98 = vld [vmem:[%s1 + $0x1b0] sm:$0xff]
    %v99 = vld [vmem:[%s1 + $0x1b8] sm:$0xff]
    %v100 = vld [vmem:[%s1 + $0x1c0] sm:$0xff]
    %v101 = vld [vmem:[%s1 + $0x1c8] sm:$0xff]
    %v102 = vld [vmem:[%s1 + $0x1d0] sm:$0xff]
    %v103 = vld [vmem:[%s1 + $0x1d8] sm:$0xff]
    %v104 = vld [vmem:[%s1 + $0x1e0] sm:$0xff]
    %v105 = vld [vmem:[%s1 + $0x1e8] sm:$0xff]
    %v106 = vld [vmem:[%s1 + $0x1f0] sm:$0xff]
    %v107 = vld [vmem:[%s1 + $0x1f8] sm:$0xff]
    %v108 = vld [vmem:[%s1 + $0x200] sm:$0xff]
    %v109 = vld [vmem:[%s1 + $0x208] sm:$0xff]
    %v110 = vld [vmem:[%s1 + $0x210] sm:$0xff]
    %v111 = vld [vmem:[%s1 + $0x218] sm:$0xff]
    %v112 = vld [vmem:[%s1 + $0x220] sm:$0xff]
    %v113 = vld [vmem:[%s1 + $0x228] sm:$0xff]
    %v114 = vld [vmem:[%s1 + $0x230] sm:$0xff]
    %v115 = vld [vmem:[%s1 + $0x238] sm:$0xff]
    %v116 = vld [vmem:[%s1 + $0x240] sm:$0xff]
    %v117 = vld [vmem:[%s1 + $0x248] sm:$0xff]
    %v118 = vld [vmem:[%s1 + $0x250] sm:$0xff]
    %v119 = vld [vmem:[%s1 + $0x258] sm:$0xff]
    %v120 = vld [vmem:[%s1 + $0x260] sm:$0xff]
    %v121 = vld [vmem:[%s1 + $0x268] sm:$0xff]
    %v122 = vld [vmem:[%s1 + $0x270] sm:$0xff]
    %v123 = vld [vmem:[%s1 + $0x278] sm:$0xff]
    %v124 = vld [vmem:[%s1 + $0x280] sm:$0xff]
    %v125 = vld [vmem:[%s1 + $0x288] sm:$0xff]
    %v126 = vld [vmem:[%s1 + $0x290] sm:$0xff]
    %v127 = vld [vmem:[%s1 + $0x298] sm:$0xff]
    %v128 = vld [vmem:[%s1 + $0x2a0] sm:$0xff]
    %v129 = vld [vmem:[%s1 + $0x2a8] sm:$0xff]
    %v130 = vld [vmem:[%s1 + $0x2b0] sm:$0xff]
    %v131 = vld [vmem:[%s1 + $0x2b8] sm:$0xff]
    %v132 = vld [vmem:[%s1 + $0x2c0] sm:$0xff]
    %v133 = vld [vmem:[%s1 + $0x2c8] sm:$0xff]
    %v134 = vld [vmem:[%s1 + $0x2d0] sm:$0xff]
    %v135 = vld [vmem:[%s1 + $0x2d8] sm:$0xff]
    %v136 = vld [vmem:[%s1 + $0x2e0] sm:$0xff]
    %v137 = vld [vmem:[%s1 + $0x2e8] sm:$0xff]
    %v138 = vld [vmem:[%s1 + $0x2f0] sm:$0xff]
    %v139 = vld [vmem:[%s1 + $0x2f8] sm:$0xff]
    %v140 = vld [vmem:[%s1 + $0x300] sm:$0xff]
    %v141 = vld [vmem:[%s1 + $0x308] sm:$0xff]
    %v142 = vld [vmem:[%s1 + $0x310] sm:$0xff]
    %v143 = vld [vmem:[%s1 + $0x318] sm:$0xff]
    %v144 = vld [vmem:[%s1 + $0x320] sm:$0xff]
    %v145 = vld [vmem:[%s1 + $0x328] sm:$0xff]
    %v146 = vld [vmem:[%s1 + $0x330] sm:$0xff]
    %v147 = vld [vmem:[%s1 + $0x338] sm:$0xff]
    %v148 = vld [vmem:[%s1 + $0x340] sm:$0xff]
    %v149 = vld [vmem:[%s1 + $0x348] sm:$0xff]
    %v150 = vld [vmem:[%s1 + $0x350] sm:$0xff]
    %v151 = vld [vmem:[%s1 + $0x358] sm:$0xff]
    %v152 = vld [vmem:[%s1 + $0x360] sm:$0xff]
    %v153 = vld [vmem:[%s1 + $0x368] sm:$0xff]
    %v154 = vld [vmem:[%s1 + $0x370] sm:$0xff]
    %v155 = vld [vmem:[%s1 + $0x378] sm:$0xff]
    %v156 = vld [vmem:[%s1 + $0x380] sm:$0xff]
    %v157 = vld [vmem:[%s1 + $0x388] sm:$0xff]
    %v158 = vld [vmem:[%s1 + $0x390] sm:$0xff]
    %v159 = vld [vmem:[%s1 + $0x398] sm:$0xff]
    %v160 = vld [vmem:[%s1 + $0x3a0] sm:$0xff]
    %v161 = vld [vmem:[%s1 + $0x3a8] sm:$0xff]
    %v162 = vld [vmem:[%s1 + $0x3b0] sm:$0xff]
    %v163 = vld [vmem:[%s1 + $0x3b8] sm:$0xff]
    %v164 = vld [vmem:[%s1 + $0x3c0] sm:$0xff]
    %v165 = vld [vmem:[%s1 + $0x3c8] sm:$0xff]
    %v166 = vld [vmem:[%s1 + $0x3d0] sm:$0xff]
    %v167 = vld [vmem:[%s1 + $0x3d8] sm:$0xff]
    %v168 = vld [vmem:[%s1 + $0x3e0] sm:$0xff]
    %v169 = vld [vmem:[%s1 + $0x3e8] sm:$0xff]
    %v170 = vld [vmem:[%s1 + $0x3f0] sm:$0xff]
    %v171 = vld [vmem:[%s1 + $0x3f8] sm:$0xff]
    %v172 = vld [vmem:[%s1 + $0x400] sm:$0xff]
    %v173 = vld [vmem:[%s1 + $0x408] sm:$0xff]
    %v174 = vld [vmem:[%s1 + $0x410] sm:$0xff]
    %v175 = vld [vmem:[%s1 + $0x418] sm:$0xff]
    %v176 = vld [vmem:[%s1 + $0x420] sm:$0xff]
    %v177 = vld [vmem:[%s1 + $0x428] sm:$0xff]
    %v178 = vld [vmem:[%s1 + $0x430] sm:$0xff]
    %v179 = vld [vmem:[%s1 + $0x438] sm:$0xff]
    %v180 = vld [vmem:[%s1 + $0x440] sm:$0xff]
    %v181 = vld [vmem:[%s1 + $0x448] sm:$0xff]
    %v182 = vld [vmem:[%s1 + $0x450] sm:$0xff]
    %v183 = vld [vmem:[%s1 + $0x458] sm:$0xff]
    %v184 = vld [vmem:[%s1 + $0x460] sm:$0xff]
    %v185 = vld [vmem:[%s1 + $0x468] sm:$0xff]
    %v186 = vld [vmem:[%s1 + $0x470] sm:$0xff]
    %v187 = vld [vmem:[%s1 + $0x478] sm:$0xff]
    %v188 = vld [vmem:[%s1 + $0x480] sm:$0xff]
    %v189 = vld [vmem:[%s1 + $0x488] sm:$0xff]
    %v190 = vld [vmem:[%s1 + $0x490] sm:$0xff]
    %v191 = vld [vmem:[%s1 + $0x498] sm:$0xff]
    %v192 = vld [vmem:[%s1 + $0x4a0] sm:$0xff]
    %v193 = vld [vmem:[%s1 + $0x4a8] sm:$0xff]
    %v194 = vld [vmem:[%s1 + $0x4b0] sm:$0xff]
    %v195 = vld [vmem:[%s1 + $0x4b8] sm:$0xff]
    %v196 = vld [vmem:[%s1 + $0x4c0] sm:$0xff]
    %v197 = vld [vmem:[%s1 + $0x4c8] sm:$0xff]
    %v198 = vld [vmem:[%s1 + $0x4d0] sm:$0xff]
    %v199 = vld [vmem:[%s1 + $0x4d8] sm:$0xff]
    %v200 = vld [vmem:[%s1 + $0x4e0] sm:$0xff]
    %v201 = vld [vmem:[%s1 + $0x4e8] sm:$0xff]
    %v202 = vld [vmem:[%s1 + $0x4f0] sm:$0xff]
    %v203 = vld [vmem:[%s1 + $0x4f8] sm:$0xff]
    %v204 = vld [vmem:[%s1 + $0x500] sm:$0xff]
    %v205 = vld [vmem:[%s1 + $0x508] sm:$0xff]
    %v206 = vld [vmem:[%s1 + $0x510] sm:$0xff]
    %v207 = vld [vmem:[%s1 + $0x518] sm:$0xff]
    %v208 = vld [vmem:[%s1 + $0x520] sm:$0xff]
    %v209 = vld [vmem:[%s1 + $0x528] sm:$0xff]
    %v210 = vld [vmem:[%s1 + $0x530] sm:$0xff]
    %v211 = vld [vmem:[%s1 + $0x538] sm:$0xff]
    %v212 = vld [vmem:[%s1 + $0x540] sm:$0xff]
    %v213 = vld [vmem:[%s1 + $0x548] sm:$0xff]
    %v214 = vld [vmem:[%s1 + $0x550] sm:$0xff]
    %v215 = vld [vmem:[%s1 + $0x558] sm:$0xff]
    %v216 = vld [vmem:[%s1 + $0x560] sm:$0xff]
    %v217 = vld [vmem:[%s1 + $0x568] sm:$0xff]
    %v218 = vld [vmem:[%s1 + $0x570] sm:$0xff]
    %v219 = vld [vmem:[%s1 + $0x578] sm:$0xff]
    %v220 = vld [vmem:[%s1 + $0x580] sm:$0xff]
    %v221 = vld [vmem:[%s1 + $0x588] sm:$0xff]
    %v222 = vld [vmem:[%s1 + $0x590] sm:$0xff]
    %v223 = vld [vmem:[%s1 + $0x598] sm:$0xff]
    %v224 = vld [vmem:[%s1 + $0x5a0] sm:$0xff]
    %v225 = vld [vmem:[%s1 + $0x5a8] sm:$0xff]
    %v226 = vld [vmem:[%s1 + $0x5b0] sm:$0xff]
    %v227 = vld [vmem:[%s1 + $0x5b8] sm:$0xff]
    %v228 = vld [vmem:[%s1 + $0x5c0] sm:$0xff]
    %v229 = vld [vmem:[%s1 + $0x5c8] sm:$0xff]
    %v230 = vld [vmem:[%s1 + $0x5d0] sm:$0xff]
    %v231 = vld [vmem:[%s1 + $0x5d8] sm:$0xff]
    %v232 = vld [vmem:[%s1 + $0x5e0] sm:$0xff]
    %v233 = vld [vmem:[%s1 + $0x5e8] sm:$0xff]
    %v234 = vld [vmem:[%s1 + $0x5f0] sm:$0xff]
    %v235 = vld [vmem:[%s1 + $0x5f8] sm:$0xff]
    %v236 = vld [vmem:[%s1 + $0x600] sm:$0xff]
    %v237 = vld [vmem:[%s1 + $0x608] sm:$0xff]
    %v238 = vld [vmem:[%s1 + $0x610] sm:$0xff]
    %v239 = vld [vmem:[%s1 + $0x618] sm:$0xff]
    %v240 = vld [vmem:[%s1 + $0x620] sm:$0xff]
    %v241 = vld [vmem:[%s1 + $0x628] sm:$0xff]
    %v242 = vld [vmem:[%s1 + $0x630] sm:$0xff]
    %v243 = vld [vmem:[%s1 + $0x638] sm:$0xff]
    %v244 = vld [vmem:[%s1 + $0x640] sm:$0xff]
    %v245 = vld [vmem:[%s1 + $0x648] sm:$0xff]
    %v246 = vld [vmem:[%s1 + $0x650] sm:$0xff]
    %v247 = vld [vmem:[%s1 + $0x658] sm:$0xff]
    %v248 = vld [vmem:[%s1 + $0x660] sm:$0xff]
    %v249 = vld [vmem:[%s1 + $0x668] sm:$0xff]
    %v250 = vld [vmem:[%s1 + $0x670] sm:$0xff]
    %v251 = vld [vmem:[%s1 + $0x678] sm:$0xff]
    %v252 = vld [vmem:[%s1 + $0x680] sm:$0xff]
    %v253 = vld [vmem:[%s1 + $0x688] sm:$0xff]
    %v254 = vld [vmem:[%s1 + $0x690] sm:$0xff]
    %v255 = vld [vmem:[%s1 + $0x698] sm:$0xff]
    %v256 = vld [vmem:[%s1 + $0x6a0] sm:$0xff]
    %v257 = vld [vmem:[%s1 + $0x6a8] sm:$0xff]
    %v258 = vld [vmem:[%s1 + $0x6b0] sm:$0xff]
    %v259 = vld [vmem:[%s1 + $0x6b8] sm:$0xff]
    %v260 = vld [vmem:[%s1 + $0x6c0] sm:$0xff]
    %v261 = vld [vmem:[%s1 + $0x6c8] sm:$0xff]
    %v262 = vld [vmem:[%s1 + $0x6d0] sm:$0xff]
    %v263 = vld [vmem:[%s1 + $0x6d8] sm:$0xff]
    %v264 = vld [vmem:[%s1 + $0x6e0] sm:$0xff]
    %v265 = vld [vmem:[%s1 + $0x6e8] sm:$0xff]
    %v266 = vld [vmem:[%s1 + $0x6f0] sm:$0xff]
    %v267 = vld [vmem:[%s1 + $0x6f8] sm:$0xff]
    %v268 = vld [vmem:[%s1 + $0x700] sm:$0xff]
    %v269 = vld [vmem:[%s1 + $0x708] sm:$0xff]
    %v270 = vld [vmem:[%s1 + $0x710] sm:$0xff]
    %v271 = vld [vmem:[%s1 + $0x718] sm:$0xff]
    %v272 = vld [vmem:[%s1 + $0x720] sm:$0xff]
    %v273 = vld [vmem:[%s1 + $0x728] sm:$0xff]
    %v274 = vld [vmem:[%s1 + $0x730] sm:$0xff]
    %v275 = vld [vmem:[%s1 + $0x738] sm:$0xff]
    %v276 = vld [vmem:[%s1 + $0x740] sm:$0xff]
    %v277 = vld [vmem:[%s1 + $0x748] sm:$0xff]
    %v278 = vld [vmem:[%s1 + $0x750] sm:$0xff]
    %v279 = vld [vmem:[%s1 + $0x758] sm:$0xff]
    %v280 = vld [vmem:[%s1 + $0x760] sm:$0xff]
    %v281 = vld [vmem:[%s1 + $0x768] sm:$0xff]
    %v282 = vld [vmem:[%s1 + $0x770] sm:$0xff]
    %v283 = vld [vmem:[%s1 + $0x778] sm:$0xff]
    %v284 = vld [vmem:[%s1 + $0x780] sm:$0xff]
    %v285 = vld [vmem:[%s1 + $0x788] sm:$0xff]
    %v286 = vld [vmem:[%s1 + $0x790] sm:$0xff]
    %v287 = vld [vmem:[%s1 + $0x798] sm:$0xff]
    %v288 = vld [vmem:[%s1 + $0x7a0] sm:$0xff]
    %v289 = vld [vmem:[%s1 + $0x7a8] sm:$0xff]
    %v290 = vld [vmem:[%s1 + $0x7b0] sm:$0xff]
    %v291 = vld [vmem:[%s1 + $0x7b8] sm:$0xff]
    %v292 = vld [vmem:[%s1 + $0x7c0] sm:$0xff]
    %v293 = vld [vmem:[%s1 + $0x7c8] sm:$0xff]
    %v294 = vld [vmem:[%s1 + $0x7d0] sm:$0xff]
    %v295 = vld [vmem:[%s1 + $0x7d8] sm:$0xff]
    %v296 = vld [vmem:[%s1 + $0x7e0] sm:$0xff]
    %v297 = vld [vmem:[%s1 + $0x7e8] sm:$0xff]
    %v298 = vld [vmem:[%s1 + $0x7f0] sm:$0xff]
    %v299 = vld [vmem:[%s1 + $0x7f8] sm:$0xff]
    %v300 = vld [vmem:[%s1 + $0x800] sm:$0xff]
    %v301 = vld [vmem:[%s1 + $0x808] sm:$0xff]
    %v302 = vld [vmem:[%s1 + $0x810] sm:$0xff]
    %v303 = vld [vmem:[%s1 + $0x818] sm:$0xff]
    %v304 = vld [vmem:[%s1 + $0x820] sm:$0xff]
    %v305 = vld [vmem:[%s1 + $0x828] sm:$0xff]
    %v306 = vld [vmem:[%s1 + $0x830] sm:$0xff]
    %v307 = vld [vmem:[%s1 + $0x838] sm:$0xff]
    %v308 = vld [vmem:[%s1 + $0x840] sm:$0xff]
    %v309 = vld [vmem:[%s1 + $0x848] sm:$0xff]
    %v310 = vld [vmem:[%s1 + $0x850] sm:$0xff]
    %v311 = vld [vmem:[%s1 + $0x858] sm:$0xff]
    %v312 = vld [vmem:[%s1 + $0x860] sm:$0xff]
    %v313 = vld [vmem:[%s1 + $0x868] sm:$0xff]
    %v314 = vld [vmem:[%s1 + $0x870] sm:$0xff]
    %v315 = vld [vmem:[%s1 + $0x878] sm:$0xff]
    %v316 = vld [vmem:[%s1 + $0x880] sm:$0xff]
    %v317 = vld [vmem:[%s1 + $0x888] sm:$0xff]
    %v318 = vld [vmem:[%s1 + $0x890] sm:$0xff]
    %v319 = vld [vmem:[%s1 + $0x898] sm:$0xff]
    %v320 = vld [vmem:[%s1 + $0x8a0] sm:$0xff]
    %v321 = vld [vmem:[%s1 + $0x8a8] sm:$0xff]
    %v322 = vld [vmem:[%s1 + $0x8b0] sm:$0xff]
    %v323 = vld [vmem:[%s1 + $0x8b8] sm:$0xff]
    %v324 = vld [vmem:[%s1 + $0x8c0] sm:$0xff]
    %v325 = vld [vmem:[%s1 + $0x8c8] sm:$0xff]
    %v326 = vld [vmem:[%s1 + $0x8d0] sm:$0xff]
    %v327 = vld [vmem:[%s1 + $0x8d8] sm:$0xff]
    %v328 = vld [vmem:[%s1 + $0x8e0] sm:$0xff]
    %v329 = vld [vmem:[%s1 + $0x8e8] sm:$0xff]
    %v330 = vld [vmem:[%s1 + $0x8f0] sm:$0xff]
    %v331 = vld [vmem:[%s1 + $0x8f8] sm:$0xff]
    %v332 = vld [vmem:[%s1 + $0x900] sm:$0xff]
    %v333 = vld [vmem:[%s1 + $0x908] sm:$0xff]
    %v334 = vld [vmem:[%s1 + $0x910] sm:$0xff]
    %v335 = vld [vmem:[%s1 + $0x918] sm:$0xff]
    %v336 = vld [vmem:[%s1 + $0x920] sm:$0xff]
    %v337 = vld [vmem:[%s1 + $0x928] sm:$0xff]
    %v338 = vld [vmem:[%s1 + $0x930] sm:$0xff]
    %v339 = vld [vmem:[%s1 + $0x938] sm:$0xff]
    %v340 = vld [vmem:[%s1 + $0x940] sm:$0xff]
    %v341 = vld [vmem:[%s1 + $0x948] sm:$0xff]
    %v342 = vld [vmem:[%s1 + $0x950] sm:$0xff]
    %v343 = vld [vmem:[%s1 + $0x958] sm:$0xff]
    %v344 = vld [vmem:[%s1 + $0x960] sm:$0xff]
    %v345 = vld [vmem:[%s1 + $0x968] sm:$0xff]
    %v346 = vld [vmem:[%s1 + $0x970] sm:$0xff]
    %v347 = vld [vmem:[%s1 + $0x978] sm:$0xff]
    %v348 = vld [vmem:[%s1 + $0x980] sm:$0xff]
    %v349 = vld [vmem:[%s1 + $0x988] sm:$0xff]
    %v350 = vld [vmem:[%s1 + $0x990] sm:$0xff]
    %v351 = vld [vmem:[%s1 + $0x998] sm:$0xff]
    %v352 = vld [vmem:[%s1 + $0x9a0] sm:$0xff]
    %v353 = vld [vmem:[%s1 + $0x9a8] sm:$0xff]
    %v354 = vld [vmem:[%s1 + $0x9b0] sm:$0xff]
    %v355 = vld [vmem:[%s1 + $0x9b8] sm:$0xff]
    %v356 = vld [vmem:[%s1 + $0x9c0] sm:$0xff]
    %v357 = vld [vmem:[%s1 + $0x9c8] sm:$0xff]
    %v358 = vld [vmem:[%s1 + $0x9d0] sm:$0xff]
    %v359 = vld [vmem:[%s1 + $0x9d8] sm:$0xff]
    %v360 = vld [vmem:[%s1 + $0x9e0] sm:$0xff]
    %v361 = vld [vmem:[%s1 + $0x9e8] sm:$0xff]
    %v362 = vld [vmem:[%s1 + $0x9f0] sm:$0xff]
    %v363 = vld [vmem:[%s1 + $0x9f8] sm:$0xff]
    %v364 = vld [vmem:[%s1 + $0xa00] sm:$0xff]
    %v365 = vld [vmem:[%s1 + $0xa08] sm:$0xff]
    %v366 = vld [vmem:[%s1 + $0xa10] sm:$0xff]
    %v367 = vld [vmem:[%s1 + $0xa18] sm:$0xff]
    %v368 = vld [vmem:[%s1 + $0xa20] sm:$0xff]
    %v369 = vld [vmem:[%s1 + $0xa28] sm:$0xff]
    %v370 = vld [vmem:[%s1 + $0xa30] sm:$0xff]
    %v371 = vld [vmem:[%s1 + $0xa38] sm:$0xff]
    %v372 = vld [vmem:[%s1 + $0xa40] sm:$0xff]
    %v373 = vld [vmem:[%s1 + $0xa48] sm:$0xff]
    %v374 = vld [vmem:[%s1 + $0xa50] sm:$0xff]
    %v375 = vld [vmem:[%s1 + $0xa58] sm:$0xff]
    %v376 = vld [vmem:[%s1 + $0xa60] sm:$0xff]
    %v377 = vld [vmem:[%s1 + $0xa68] sm:$0xff]
    %v378 = vld [vmem:[%s1 + $0xa70] sm:$0xff]
    %v379 = vld [vmem:[%s1 + $0xa78] sm:$0xff]
    %v380 = vld [vmem:[%s1 + $0xa80] sm:$0xff]
    %v381 = vld [vmem:[%s1 + $0xa88] sm:$0xff]
    %v382 = vld [vmem:[%s1 + $0xa90] sm:$0xff]
    %v383 = vld [vmem:[%s1 + $0xa98] sm:$0xff]
    %v384 = vld [vmem:[%s1 + $0xaa0] sm:$0xff]
    %v385 = vld [vmem:[%s1 + $0xaa8] sm:$0xff]
    %v386 = vld [vmem:[%s1 + $0xab0] sm:$0xff]
    %v387 = vld [vmem:[%s1 + $0xab8] sm:$0xff]
    %v388 = vld [vmem:[%s1 + $0xac0] sm:$0xff]
    %v389 = vld [vmem:[%s1 + $0xac8] sm:$0xff]
    %v390 = vld [vmem:[%s1 + $0xad0] sm:$0xff]
    %v391 = vld [vmem:[%s1 + $0xad8] sm:$0xff]
    %v392 = vld [vmem:[%s1 + $0xae0] sm:$0xff]
    %v393 = vld [vmem:[%s1 + $0xae8] sm:$0xff]
    %v394 = vld [vmem:[%s1 + $0xaf0] sm:$0xff]
    %v395 = vld [vmem:[%s1 + $0xaf8] sm:$0xff]
    %v396 = vld [vmem:[%s1 + $0xb00] sm:$0xff]
    %v397 = vld [vmem:[%s1 + $0xb08] sm:$0xff]
    %v398 = vld [vmem:[%s1 + $0xb10] sm:$0xff]
    %v399 = vld [vmem:[%s1 + $0xb18] sm:$0xff]
    %v400 = vld [vmem:[%s1 + $0xb20] sm:$0xff]
    %v401 = vld [vmem:[%s1 + $0xb28] sm:$0xff]
    %v402 = vld [vmem:[%s1 + $0xb30] sm:$0xff]
    %v403 = vld [vmem:[%s1 + $0xb38] sm:$0xff]
    %v404 = vld [vmem:[%s1 + $0xb40] sm:$0xff]
    %v405 = vld [vmem:[%s1 + $0xb48] sm:$0xff]
    %v406 = vld [vmem:[%s1 + $0xb50] sm:$0xff]
    %v407 = vld [vmem:[%s1 + $0xb58] sm:$0xff]
    %v408 = vld [vmem:[%s1 + $0xb60] sm:$0xff]
    %v409 = vld [vmem:[%s1 + $0xb68] sm:$0xff]
    %v410 = vld [vmem:[%s1 + $0xb70] sm:$0xff]
    %v411 = vld [vmem:[%s1 + $0xb78] sm:$0xff]
    %v412 = vld [vmem:[%s1 + $0xb80] sm:$0xff]
    %v413 = vld [vmem:[%s1 + $0xb88] sm:$0xff]
    %v414 = vld [vmem:[%s1 + $0xb90] sm:$0xff]
    %v415 = vld [vmem:[%s1 + $0xb98] sm:$0xff]
    %v416 = vld [vmem:[%s1 + $0xba0] sm:$0xff]
    %v417 = vld [vmem:[%s1 + $0xba8] sm:$0xff]
    %v418 = vld [vmem:[%s1 + $0xbb0] sm:$0xff]
    %v419 = vld [vmem:[%s1 + $0xbb8] sm:$0xff]
    %v420 = vld [vmem:[%s1 + $0xbc0] sm:$0xff]
    %v421 = vld [vmem:[%s1 + $0xbc8] sm:$0xff]
    %v422 = vld [vmem:[%s1 + $0xbd0] sm:$0xff]
    %v423 = vld [vmem:[%s1 + $0xbd8] sm:$0xff]
    %v424 = vld [vmem:[%s1 + $0xbe0] sm:$0xff]
    %v425 = vld [vmem:[%s1 + $0xbe8] sm:$0xff]
    %v426 = vld [vmem:[%s1 + $0xbf0] sm:$0xff]
    %v427 = vld [vmem:[%s1 + $0xbf8] sm:$0xff]
    %v428 = vld [vmem:[%s1 + $0xc00] sm:$0xff]
    %v429 = vld [vmem:[%s1 + $0xc08] sm:$0xff]
    %v430 = vld [vmem:[%s1 + $0xc10] sm:$0xff]
    %v431 = vld [vmem:[%s1 + $0xc18] sm:$0xff]
    %v432 = vld [vmem:[%s1 + $0xc20] sm:$0xff]
    %v433 = vld [vmem:[%s1 + $0xc28] sm:$0xff]
    %v434 = vld [vmem:[%s1 + $0xc30] sm:$0xff]
    %v435 = vld [vmem:[%s1 + $0xc38] sm:$0xff]
    %v436 = vld [vmem:[%s1 + $0xc40] sm:$0xff]
    %v437 = vld [vmem:[%s1 + $0xc48] sm:$0xff]
    %v438 = vld [vmem:[%s1 + $0xc50] sm:$0xff]
    %v439 = vld [vmem:[%s1 + $0xc58] sm:$0xff]
    %v440 = vld [vmem:[%s1 + $0xc60] sm:$0xff]
    %v441 = vld [vmem:[%s1 + $0xc68] sm:$0xff]
    %v442 = vld [vmem:[%s1 + $0xc70] sm:$0xff]
    %v443 = vld [vmem:[%s1 + $0xc78] sm:$0xff]
    %v444 = vld [vmem:[%s1 + $0xc80] sm:$0xff]
    %v445 = vld [vmem:[%s1 + $0xc88] sm:$0xff]
    %v446 = vld [vmem:[%s1 + $0xc90] sm:$0xff]
    %v447 = vld [vmem:[%s1 + $0xc98] sm:$0xff]
    %v448 = vld [vmem:[%s1 + $0xca0] sm:$0xff]
    %v449 = vld [vmem:[%s1 + $0xca8] sm:$0xff]
    %v450 = vld [vmem:[%s1 + $0xcb0] sm:$0xff]
    %v451 = vld [vmem:[%s1 + $0xcb8] sm:$0xff]
    %v452 = vld [vmem:[%s1 + $0xcc0] sm:$0xff]
    %v453 = vld [vmem:[%s1 + $0xcc8] sm:$0xff]
    %v454 = vld [vmem:[%s1 + $0xcd0] sm:$0xff]
    %v455 = vld [vmem:[%s1 + $0xcd8] sm:$0xff]
    %v456 = vld [vmem:[%s1 + $0xce0] sm:$0xff]
    %v457 = vld [vmem:[%s1 + $0xce8] sm:$0xff]
    %v458 = vld [vmem:[%s1 + $0xcf0] sm:$0xff]
    %v459 = vld [vmem:[%s1 + $0xcf8] sm:$0xff]
    %v460 = vld [vmem:[%s1 + $0xd00] sm:$0xff]
    %v461 = vld [vmem:[%s1 + $0xd08] sm:$0xff]
    %v462 = vld [vmem:[%s1 + $0xd10] sm:$0xff]
    %v463 = vld [vmem:[%s1 + $0xd18] sm:$0xff]
    %v464 = vld [vmem:[%s1 + $0xd20] sm:$0xff]
    %v465 = vld [vmem:[%s1 + $0xd28] sm:$0xff]
    %v466 = vld [vmem:[%s1 + $0xd30] sm:$0xff]
    %v467 = vld [vmem:[%s1 + $0xd38] sm:$0xff]
    %v468 = vld [vmem:[%s1 + $0xd40] sm:$0xff]
    %v469 = vld [vmem:[%s1 + $0xd48] sm:$0xff]
    %v470 = vld [vmem:[%s1 + $0xd50] sm:$0xff]
    %v471 = vld [vmem:[%s1 + $0xd58] sm:$0xff]
    %v472 = vld [vmem:[%s1 + $0xd60] sm:$0xff]
    %v473 = vld [vmem:[%s1 + $0xd68] sm:$0xff]
    %v474 = vld [vmem:[%s1 + $0xd70] sm:$0xff]
    %v475 = vld [vmem:[%s1 + $0xd78] sm:$0xff]
    %v476 = vld [vmem:[%s1 + $0xd80] sm:$0xff]
    %v477 = vld [vmem:[%s1 + $0xd88] sm:$0xff]
    %v478 = vld [vmem:[%s1 + $0xd90] sm:$0xff]
    %v479 = vld [vmem:[%s1 + $0xd98] sm:$0xff]
    %v480 = vld [vmem:[%s1 + $0xda0] sm:$0xff]
    %v481 = vld [vmem:[%s1 + $0xda8] sm:$0xff]
    %v482 = vld [vmem:[%s1 + $0xdb0] sm:$0xff]
    %v483 = vld [vmem:[%s1 + $0xdb8] sm:$0xff]
    %v484 = vld [vmem:[%s1 + $0xdc0] sm:$0xff]
    %v485 = vld [vmem:[%s1 + $0xdc8] sm:$0xff]
    %v486 = vld [vmem:[%s1 + $0xdd0] sm:$0xff]
    %v487 = vld [vmem:[%s1 + $0xdd8] sm:$0xff]
    %v488 = vld [vmem:[%s1 + $0xde0] sm:$0xff]
    %v489 = vld [vmem:[%s1 + $0xde8] sm:$0xff]
    %v490 = vld [vmem:[%s1 + $0xdf0] sm:$0xff]
    %v491 = vld [vmem:[%s1 + $0xdf8] sm:$0xff]
    %v492 = vld [vmem:[%s1 + $0xe00] sm:$0xff]
    %v493 = vld [vmem:[%s1 + $0xe08] sm:$0xff]
    %v494 = vld [vmem:[%s1 + $0xe10] sm:$0xff]
    %v495 = vld [vmem:[%s1 + $0xe18] sm:$0xff]
    %v496 = vld [vmem:[%s1 + $0xe20] sm:$0xff]
    %v497 = vld [vmem:[%s1 + $0xe28] sm:$0xff]
    %v498 = vld [vmem:[%s1 + $0xe30] sm:$0xff]
    %v499 = vld [vmem:[%s1 + $0xe38] sm:$0xff]
    %v500 = vld [vmem:[%s1 + $0xe40] sm:$0xff]
    %v501 = vld [vmem:[%s1 + $0xe48] sm:$0xff]
    %v502 = vld [vmem:[%s1 + $0xe50] sm:$0xff]
    %v503 = vld [vmem:[%s1 + $0xe58] sm:$0xff]
    %v504 = vld [vmem:[%s1 + $0xe60] sm:$0xff]
    %v505 = vld [vmem:[%s1 + $0xe68] sm:$0xff]
    %v506 = vld [vmem:[%s1 + $0xe70] sm:$0xff]
    %v507 = vld [vmem:[%s1 + $0xe78] sm:$0xff]
    %v508 = vld [vmem:[%s1 + $0xe80] sm:$0xff]
    %v509 = vld [vmem:[%s1 + $0xe88] sm:$0xff]
    %v510 = vld [vmem:[%s1 + $0xe90] sm:$0xff]
    %v511 = vld [vmem:[%s1 + $0xe98] sm:$0xff]
    %v512 = vld [vmem:[%s1 + $0xea0] sm:$0xff]
    %v513 = vld [vmem:[%s1 + $0xea8] sm:$0xff]
    %v514 = vld [vmem:[%s1 + $0xeb0] sm:$0xff]
    %v515 = vld [vmem:[%s1 + $0xeb8] sm:$0xff]
    %v516 = vld [vmem:[%s1 + $0xec0] sm:$0xff]
    %v517 = vld [vmem:[%s1 + $0xec8] sm:$0xff]
    %v518 = vld [vmem:[%s1 + $0xed0] sm:$0xff]
    %v519 = vld [vmem:[%s1 + $0xed8] sm:$0xff]
    %v520 = vld [vmem:[%s1 + $0xee0] sm:$0xff]
    %v521 = vld [vmem:[%s1 + $0xee8] sm:$0xff]
    %v522 = vld [vmem:[%s1 + $0xef0] sm:$0xff]
    %v523 = vld [vmem:[%s1 + $0xef8] sm:$0xff]
    %v524 = vld [vmem:[%s1 + $0xf00] sm:$0xff]
    %v525 = vld [vmem:[%s1 + $0xf08] sm:$0xff]
    %v526 = vld [vmem:[%s1 + $0xf10] sm:$0xff]
    %v527 = vld [vmem:[%s1 + $0xf18] sm:$0xff]
    %v528 = vld [vmem:[%s1 + $0xf20] sm:$0xff]
    %v529 = vld [vmem:[%s1 + $0xf28] sm:$0xff]
    %v530 = vld [vmem:[%s1 + $0xf30] sm:$0xff]
    %v531 = vld [vmem:[%s1 + $0xf38] sm:$0xff]
    %v532 = vld [vmem:[%s1 + $0xf40] sm:$0xff]
    %v533 = vld [vmem:[%s1 + $0xf48] sm:$0xff]
    %v534 = vld [vmem:[%s1 + $0xf50] sm:$0xff]
    %v535 = vld [vmem:[%s1 + $0xf58] sm:$0xff]
    %v536 = vld [vmem:[%s1 + $0xf60] sm:$0xff]
    %v537 = vld [vmem:[%s1 + $0xf68] sm:$0xff]
    %v538 = vld [vmem:[%s1 + $0xf70] sm:$0xff]
    %v539 = vld [vmem:[%s1 + $0xf78] sm:$0xff]
    %v540 = vld [vmem:[%s1 + $0xf80] sm:$0xff]
    %v541 = vld [vmem:[%s1 + $0xf88] sm:$0xff]
    %v542 = vld [vmem:[%s1 + $0xf90] sm:$0xff]
    %v543 = vld [vmem:[%s1 + $0xf98] sm:$0xff]
    %v544 = vld [vmem:[%s1 + $0xfa0] sm:$0xff]
    %v545 = vld [vmem:[%s1 + $0xfa8] sm:$0xff]
    %v546 = vld [vmem:[%s1 + $0xfb0] sm:$0xff]
    %v547 = vld [vmem:[%s1 + $0xfb8] sm:$0xff]
    %v548 = vld [vmem:[%s1 + $0xfc0] sm:$0xff]
    %v549 = vld [vmem:[%s1 + $0xfc8] sm:$0xff]
    %v550 = vld [vmem:[%s1 + $0xfd0] sm:$0xff]
    %v551 = vld [vmem:[%s1 + $0xfd8] sm:$0xff]
    %v552 = vld [vmem:[%s1 + $0xfe0] sm:$0xff]
    %v553 = vld [vmem:[%s1 + $0xfe8] sm:$0xff]
    %v554 = vld [vmem:[%s1 + $0xff0] sm:$0xff]
    %v555 = vld [vmem:[%s1 + $0xff8] sm:$0xff]
    %v556 = vld [vmem:[%s2] sm:$0xf]
    %v558 = vperm.slane %v556, 0
    %v559 = vperm.slane %v556, 1
    %v560 = vperm.slane %v556, 2
    %v561 = vperm.slane %v556, 3
    %568 = vst [vmem:[#allocation1] ss:$4 sm:$0xff] %v42
    %s569 = scalar_lea.vmem [#allocation1], 32
    %570 = vst [vmem:[%s569] ss:$4 sm:$0xff] %v43
    %v571 = vld.sshfl [vmem:[#allocation1] sm:$0xff pattern:$0x73625140]
    %v572 = vld.sshfl [vmem:[#allocation1 + $0x8] sm:$0xff pattern:$0x73625140]
    %v573 = vld.sshfl [vmem:[#allocation1 + $0x10] sm:$0xff pattern:$0x73625140]
    %v574 = vld.sshfl [vmem:[#allocation1 + $0x18] sm:$0xff pattern:$0x73625140]
    %v575 = vld.sshfl [vmem:[#allocation1 + $0x20] sm:$0xff pattern:$0x73625140]
    %v576 = vld.sshfl [vmem:[#allocation1 + $0x28] sm:$0xff pattern:$0x73625140]
    %v577 = vld.sshfl [vmem:[#allocation1 + $0x30] sm:$0xff pattern:$0x73625140]
    %v578 = vld.sshfl [vmem:[#allocation1 + $0x38] sm:$0xff pattern:$0x73625140]
    %587 = vmatpush.msra.mxu0 %v104
    %588 = vmatpush.msra.mxu0 %v100
    %589 = vmatpush.msra.mxu0 %v96
    %590 = vmatpush.msra.mxu0 %v92
    %591 = vmatpush.msra.mxu0 %v88
    %592 = vmatpush.msra.mxu0 %v84
    %593 = vmatpush.msra.mxu0 %v80
    %594 = vmatpush.msra.mxu0 %v76
    %595 = vmatpush.msra.mxu0 %v72
    %596 = vmatpush.msra.mxu0 %v68
    %597 = vmatpush.msra.mxu0 %v64
    %598 = vmatpush.msra.mxu0 %v60
    %599 = vmatpush.msra.mxu0 %v56
    %600 = vmatpush.msra.mxu0 %v52
    %601 = vmatpush.msra.mxu0 %v48
    %602 = vmatpush.msra.mxu0 %v44
    %603 = vmatmul.f32.gmra.mxu0 %v571
    %v604 = vpop.f32.mrf.mxu0
    %v605 = vadd.f32 %v558, %v604
    %606 = vdwg.mxu0
    %607 = vmatpush.msra.mxu0 %v168
    %608 = vmatpush.msra.mxu0 %v164
    %609 = vmatpush.msra.mxu0 %v160
    %610 = vmatpush.msra.mxu0 %v156
    %611 = vmatpush.msra.mxu0 %v152
    %612 = vmatpush.msra.mxu0 %v148
    %613 = vmatpush.msra.mxu0 %v144
    %614 = vmatpush.msra.mxu0 %v140
    %615 = vmatpush.msra.mxu0 %v136
    %616 = vmatpush.msra.mxu0 %v132
    %617 = vmatpush.msra.mxu0 %v128
    %618 = vmatpush.msra.mxu0 %v124
    %619 = vmatpush.msra.mxu0 %v120
    %620 = vmatpush.msra.mxu0 %v116
    %621 = vmatpush.msra.mxu0 %v112
    %622 = vmatpush.msra.mxu0 %v108
    %623 = vmatmul.f32.gmra.mxu0 %v572
    %v624 = vpop.f32.mrf.mxu0
    %v625 = vadd.f32 %v605, %v624
    %626 = vdwg.mxu0
    %627 = vmatpush.msra.mxu0 %v232
    %628 = vmatpush.msra.mxu0 %v228
    %629 = vmatpush.msra.mxu0 %v224
    %630 = vmatpush.msra.mxu0 %v220
    %631 = vmatpush.msra.mxu0 %v216
    %632 = vmatpush.msra.mxu0 %v212
    %633 = vmatpush.msra.mxu0 %v208
    %634 = vmatpush.msra.mxu0 %v204
    %635 = vmatpush.msra.mxu0 %v200
    %636 = vmatpush.msra.mxu0 %v196
    %637 = vmatpush.msra.mxu0 %v192
    %638 = vmatpush.msra.mxu0 %v188
    %639 = vmatpush.msra.mxu0 %v184
    %640 = vmatpush.msra.mxu0 %v180
    %641 = vmatpush.msra.mxu0 %v176
    %642 = vmatpush.msra.mxu0 %v172
    %643 = vmatmul.f32.gmra.mxu0 %v573
    %v644 = vpop.f32.mrf.mxu0
    %v645 = vadd.f32 %v625, %v644
    %646 = vdwg.mxu0
    %647 = vmatpush.msra.mxu0 %v296
    %648 = vmatpush.msra.mxu0 %v292
    %649 = vmatpush.msra.mxu0 %v288
    %650 = vmatpush.msra.mxu0 %v284
    %651 = vmatpush.msra.mxu0 %v280
    %652 = vmatpush.msra.mxu0 %v276
    %653 = vmatpush.msra.mxu0 %v272
    %654 = vmatpush.msra.mxu0 %v268
    %655 = vmatpush.msra.mxu0 %v264
    %656 = vmatpush.msra.mxu0 %v260
    %657 = vmatpush.msra.mxu0 %v256
    %658 = vmatpush.msra.mxu0 %v252
    %659 = vmatpush.msra.mxu0 %v248
    %660 = vmatpush.msra.mxu0 %v244
    %661 = vmatpush.msra.mxu0 %v240
    %662 = vmatpush.msra.mxu0 %v236
    %663 = vmatmul.f32.gmra.mxu0 %v574
    %v664 = vpop.f32.mrf.mxu0
    %v665 = vadd.f32 %v645, %v664
    %666 = vdwg.mxu0
    %667 = vmatpush.msra.mxu0 %v360
    %668 = vmatpush.msra.mxu0 %v356
    %669 = vmatpush.msra.mxu0 %v352
    %670 = vmatpush.msra.mxu0 %v348
    %671 = vmatpush.msra.mxu0 %v344
    %672 = vmatpush.msra.mxu0 %v340
    %673 = vmatpush.msra.mxu0 %v336
    %674 = vmatpush.msra.mxu0 %v332
    %675 = vmatpush.msra.mxu0 %v328
    %676 = vmatpush.msra.mxu0 %v324
    %677 = vmatpush.msra.mxu0 %v320
    %678 = vmatpush.msra.mxu0 %v316
    %679 = vmatpush.msra.mxu0 %v312
    %680 = vmatpush.msra.mxu0 %v308
    %681 = vmatpush.msra.mxu0 %v304
    %682 = vmatpush.msra.mxu0 %v300
    %683 = vmatmul.f32.gmra.mxu0 %v575
    %v684 = vpop.f32.mrf.mxu0
    %v685 = vadd.f32 %v665, %v684
    %686 = vdwg.mxu0
    %687 = vmatpush.msra.mxu0 %v424
    %688 = vmatpush.msra.mxu0 %v420
    %689 = vmatpush.msra.mxu0 %v416
    %690 = vmatpush.msra.mxu0 %v412
    %691 = vmatpush.msra.mxu0 %v408
    %692 = vmatpush.msra.mxu0 %v404
    %693 = vmatpush.msra.mxu0 %v400
    %694 = vmatpush.msra.mxu0 %v396
    %695 = vmatpush.msra.mxu0 %v392
    %696 = vmatpush.msra.mxu0 %v388
    %697 = vmatpush.msra.mxu0 %v384
    %698 = vmatpush.msra.mxu0 %v380
    %699 = vmatpush.msra.mxu0 %v376
    %700 = vmatpush.msra.mxu0 %v372
    %701 = vmatpush.msra.mxu0 %v368
    %702 = vmatpush.msra.mxu0 %v364
    %703 = vmatmul.f32.gmra.mxu0 %v576
    %v704 = vpop.f32.mrf.mxu0
    %v705 = vadd.f32 %v685, %v704
    %706 = vdwg.mxu0
    %707 = vmatpush.msra.mxu0 %v488
    %708 = vmatpush.msra.mxu0 %v484
    %709 = vmatpush.msra.mxu0 %v480
    %710 = vmatpush.msra.mxu0 %v476
    %711 = vmatpush.msra.mxu0 %v472
    %712 = vmatpush.msra.mxu0 %v468
    %713 = vmatpush.msra.mxu0 %v464
    %714 = vmatpush.msra.mxu0 %v460
    %715 = vmatpush.msra.mxu0 %v456
    %716 = vmatpush.msra.mxu0 %v452
    %717 = vmatpush.msra.mxu0 %v448
    %718 = vmatpush.msra.mxu0 %v444
    %719 = vmatpush.msra.mxu0 %v440
    %720 = vmatpush.msra.mxu0 %v436
    %721 = vmatpush.msra.mxu0 %v432
    %722 = vmatpush.msra.mxu0 %v428
    %723 = vmatmul.f32.gmra.mxu0 %v577
    %v724 = vpop.f32.mrf.mxu0
    %v725 = vadd.f32 %v705, %v724
    %726 = vdwg.mxu0
    %727 = vmatpush.msra.mxu0 %v552
    %728 = vmatpush.msra.mxu0 %v548
    %729 = vmatpush.msra.mxu0 %v544
    %730 = vmatpush.msra.mxu0 %v540
    %731 = vmatpush.msra.mxu0 %v536
    %732 = vmatpush.msra.mxu0 %v532
    %733 = vmatpush.msra.mxu0 %v528
    %734 = vmatpush.msra.mxu0 %v524
    %735 = vmatpush.msra.mxu0 %v520
    %736 = vmatpush.msra.mxu0 %v516
    %737 = vmatpush.msra.mxu0 %v512
    %738 = vmatpush.msra.mxu0 %v508
    %739 = vmatpush.msra.mxu0 %v504
    %740 = vmatpush.msra.mxu0 %v500
    %741 = vmatpush.msra.mxu0 %v496
    %742 = vmatpush.msra.mxu0 %v492
    %743 = vmatmul.f32.gmra.mxu0 %v578
    %v744 = vpop.f32.mrf.mxu0
    %v745 = vadd.f32 %v725, %v744
    %746 = vdwg.mxu0
    %747 = vmatpush.msra.mxu0 %v105
    %748 = vmatpush.msra.mxu0 %v101
    %749 = vmatpush.msra.mxu0 %v97
    %750 = vmatpush.msra.mxu0 %v93
    %751 = vmatpush.msra.mxu0 %v89
    %752 = vmatpush.msra.mxu0 %v85
    %753 = vmatpush.msra.mxu0 %v81
    %754 = vmatpush.msra.mxu0 %v77
    %755 = vmatpush.msra.mxu0 %v73
    %756 = vmatpush.msra.mxu0 %v69
    %757 = vmatpush.msra.mxu0 %v65
    %758 = vmatpush.msra.mxu0 %v61
    %759 = vmatpush.msra.mxu0 %v57
    %760 = vmatpush.msra.mxu0 %v53
    %761 = vmatpush.msra.mxu0 %v49
    %762 = vmatpush.msra.mxu0 %v45
    %763 = vmatmul.f32.gmra.mxu0 %v571
    %v764 = vpop.f32.mrf.mxu0
    %v765 = vadd.f32 %v559, %v764
    %766 = vdwg.mxu0
    %767 = vmatpush.msra.mxu0 %v169
    %768 = vmatpush.msra.mxu0 %v165
    %769 = vmatpush.msra.mxu0 %v161
    %770 = vmatpush.msra.mxu0 %v157
    %771 = vmatpush.msra.mxu0 %v153
    %772 = vmatpush.msra.mxu0 %v149
    %773 = vmatpush.msra.mxu0 %v145
    %774 = vmatpush.msra.mxu0 %v141
    %775 = vmatpush.msra.mxu0 %v137
    %776 = vmatpush.msra.mxu0 %v133
    %777 = vmatpush.msra.mxu0 %v129
    %778 = vmatpush.msra.mxu0 %v125
    %779 = vmatpush.msra.mxu0 %v121
    %780 = vmatpush.msra.mxu0 %v117
    %781 = vmatpush.msra.mxu0 %v113
    %782 = vmatpush.msra.mxu0 %v109
    %783 = vmatmul.f32.gmra.mxu0 %v572
    %v784 = vpop.f32.mrf.mxu0
    %v785 = vadd.f32 %v765, %v784
    %786 = vdwg.mxu0
    %787 = vmatpush.msra.mxu0 %v233
    %788 = vmatpush.msra.mxu0 %v229
    %789 = vmatpush.msra.mxu0 %v225
    %790 = vmatpush.msra.mxu0 %v221
    %791 = vmatpush.msra.mxu0 %v217
    %792 = vmatpush.msra.mxu0 %v213
    %793 = vmatpush.msra.mxu0 %v209
    %794 = vmatpush.msra.mxu0 %v205
    %795 = vmatpush.msra.mxu0 %v201
    %796 = vmatpush.msra.mxu0 %v197
    %797 = vmatpush.msra.mxu0 %v193
    %798 = vmatpush.msra.mxu0 %v189
    %799 = vmatpush.msra.mxu0 %v185
    %800 = vmatpush.msra.mxu0 %v181
    %801 = vmatpush.msra.mxu0 %v177
    %802 = vmatpush.msra.mxu0 %v173
    %803 = vmatmul.f32.gmra.mxu0 %v573
    %v804 = vpop.f32.mrf.mxu0
    %v805 = vadd.f32 %v785, %v804
    %806 = vdwg.mxu0
    %807 = vmatpush.msra.mxu0 %v297
    %808 = vmatpush.msra.mxu0 %v293
    %809 = vmatpush.msra.mxu0 %v289
    %810 = vmatpush.msra.mxu0 %v285
    %811 = vmatpush.msra.mxu0 %v281
    %812 = vmatpush.msra.mxu0 %v277
    %813 = vmatpush.msra.mxu0 %v273
    %814 = vmatpush.msra.mxu0 %v269
    %815 = vmatpush.msra.mxu0 %v265
    %816 = vmatpush.msra.mxu0 %v261
    %817 = vmatpush.msra.mxu0 %v257
    %818 = vmatpush.msra.mxu0 %v253
    %819 = vmatpush.msra.mxu0 %v249
    %820 = vmatpush.msra.mxu0 %v245
    %821 = vmatpush.msra.mxu0 %v241
    %822 = vmatpush.msra.mxu0 %v237
    %823 = vmatmul.f32.gmra.mxu0 %v574
    %v824 = vpop.f32.mrf.mxu0
    %v825 = vadd.f32 %v805, %v824
    %826 = vdwg.mxu0
    %827 = vmatpush.msra.mxu0 %v361
    %828 = vmatpush.msra.mxu0 %v357
    %829 = vmatpush.msra.mxu0 %v353
    %830 = vmatpush.msra.mxu0 %v349
    %831 = vmatpush.msra.mxu0 %v345
    %832 = vmatpush.msra.mxu0 %v341
    %833 = vmatpush.msra.mxu0 %v337
    %834 = vmatpush.msra.mxu0 %v333
    %835 = vmatpush.msra.mxu0 %v329
    %836 = vmatpush.msra.mxu0 %v325
    %837 = vmatpush.msra.mxu0 %v321
    %838 = vmatpush.msra.mxu0 %v317
    %839 = vmatpush.msra.mxu0 %v313
    %840 = vmatpush.msra.mxu0 %v309
    %841 = vmatpush.msra.mxu0 %v305
    %842 = vmatpush.msra.mxu0 %v301
    %843 = vmatmul.f32.gmra.mxu0 %v575
    %v844 = vpop.f32.mrf.mxu0
    %v845 = vadd.f32 %v825, %v844
    %846 = vdwg.mxu0
    %847 = vmatpush.msra.mxu0 %v425
    %848 = vmatpush.msra.mxu0 %v421
    %849 = vmatpush.msra.mxu0 %v417
    %850 = vmatpush.msra.mxu0 %v413
    %851 = vmatpush.msra.mxu0 %v409
    %852 = vmatpush.msra.mxu0 %v405
    %853 = vmatpush.msra.mxu0 %v401
    %854 = vmatpush.msra.mxu0 %v397
    %855 = vmatpush.msra.mxu0 %v393
    %856 = vmatpush.msra.mxu0 %v389
    %857 = vmatpush.msra.mxu0 %v385
    %858 = vmatpush.msra.mxu0 %v381
    %859 = vmatpush.msra.mxu0 %v377
    %860 = vmatpush.msra.mxu0 %v373
    %861 = vmatpush.msra.mxu0 %v369
    %862 = vmatpush.msra.mxu0 %v365
    %863 = vmatmul.f32.gmra.mxu0 %v576
    %v864 = vpop.f32.mrf.mxu0
    %v865 = vadd.f32 %v845, %v864
    %866 = vdwg.mxu0
    %867 = vmatpush.msra.mxu0 %v489
    %868 = vmatpush.msra.mxu0 %v485
    %869 = vmatpush.msra.mxu0 %v481
    %870 = vmatpush.msra.mxu0 %v477
    %871 = vmatpush.msra.mxu0 %v473
    %872 = vmatpush.msra.mxu0 %v469
    %873 = vmatpush.msra.mxu0 %v465
    %874 = vmatpush.msra.mxu0 %v461
    %875 = vmatpush.msra.mxu0 %v457
    %876 = vmatpush.msra.mxu0 %v453
    %877 = vmatpush.msra.mxu0 %v449
    %878 = vmatpush.msra.mxu0 %v445
    %879 = vmatpush.msra.mxu0 %v441
    %880 = vmatpush.msra.mxu0 %v437
    %881 = vmatpush.msra.mxu0 %v433
    %882 = vmatpush.msra.mxu0 %v429
    %883 = vmatmul.f32.gmra.mxu0 %v577
    %v884 = vpop.f32.mrf.mxu0
    %v885 = vadd.f32 %v865, %v884
    %886 = vdwg.mxu0
    %887 = vmatpush.msra.mxu0 %v553
    %888 = vmatpush.msra.mxu0 %v549
    %889 = vmatpush.msra.mxu0 %v545
    %890 = vmatpush.msra.mxu0 %v541
    %891 = vmatpush.msra.mxu0 %v537
    %892 = vmatpush.msra.mxu0 %v533
    %893 = vmatpush.msra.mxu0 %v529
    %894 = vmatpush.msra.mxu0 %v525
    %895 = vmatpush.msra.mxu0 %v521
    %896 = vmatpush.msra.mxu0 %v517
    %897 = vmatpush.msra.mxu0 %v513
    %898 = vmatpush.msra.mxu0 %v509
    %899 = vmatpush.msra.mxu0 %v505
    %900 = vmatpush.msra.mxu0 %v501
    %901 = vmatpush.msra.mxu0 %v497
    %902 = vmatpush.msra.mxu0 %v493
    %903 = vmatmul.f32.gmra.mxu0 %v578
    %v904 = vpop.f32.mrf.mxu0
    %v905 = vadd.f32 %v885, %v904
    %906 = vdwg.mxu0
    %907 = vmatpush.msra.mxu0 %v106
    %908 = vmatpush.msra.mxu0 %v102
    %909 = vmatpush.msra.mxu0 %v98
    %910 = vmatpush.msra.mxu0 %v94
    %911 = vmatpush.msra.mxu0 %v90
    %912 = vmatpush.msra.mxu0 %v86
    %913 = vmatpush.msra.mxu0 %v82
    %914 = vmatpush.msra.mxu0 %v78
    %915 = vmatpush.msra.mxu0 %v74
    %916 = vmatpush.msra.mxu0 %v70
    %917 = vmatpush.msra.mxu0 %v66
    %918 = vmatpush.msra.mxu0 %v62
    %919 = vmatpush.msra.mxu0 %v58
    %920 = vmatpush.msra.mxu0 %v54
    %921 = vmatpush.msra.mxu0 %v50
    %922 = vmatpush.msra.mxu0 %v46
    %923 = vmatmul.f32.gmra.mxu0 %v571
    %v924 = vpop.f32.mrf.mxu0
    %v925 = vadd.f32 %v560, %v924
    %926 = vdwg.mxu0
    %927 = vmatpush.msra.mxu0 %v170
    %928 = vmatpush.msra.mxu0 %v166
    %929 = vmatpush.msra.mxu0 %v162
    %930 = vmatpush.msra.mxu0 %v158
    %931 = vmatpush.msra.mxu0 %v154
    %932 = vmatpush.msra.mxu0 %v150
    %933 = vmatpush.msra.mxu0 %v146
    %934 = vmatpush.msra.mxu0 %v142
    %935 = vmatpush.msra.mxu0 %v138
    %936 = vmatpush.msra.mxu0 %v134
    %937 = vmatpush.msra.mxu0 %v130
    %938 = vmatpush.msra.mxu0 %v126
    %939 = vmatpush.msra.mxu0 %v122
    %940 = vmatpush.msra.mxu0 %v118
    %941 = vmatpush.msra.mxu0 %v114
    %942 = vmatpush.msra.mxu0 %v110
    %943 = vmatmul.f32.gmra.mxu0 %v572
    %v944 = vpop.f32.mrf.mxu0
    %v945 = vadd.f32 %v925, %v944
    %946 = vdwg.mxu0
    %947 = vmatpush.msra.mxu0 %v234
    %948 = vmatpush.msra.mxu0 %v230
    %949 = vmatpush.msra.mxu0 %v226
    %950 = vmatpush.msra.mxu0 %v222
    %951 = vmatpush.msra.mxu0 %v218
    %952 = vmatpush.msra.mxu0 %v214
    %953 = vmatpush.msra.mxu0 %v210
    %954 = vmatpush.msra.mxu0 %v206
    %955 = vmatpush.msra.mxu0 %v202
    %956 = vmatpush.msra.mxu0 %v198
    %957 = vmatpush.msra.mxu0 %v194
    %958 = vmatpush.msra.mxu0 %v190
    %959 = vmatpush.msra.mxu0 %v186
    %960 = vmatpush.msra.mxu0 %v182
    %961 = vmatpush.msra.mxu0 %v178
    %962 = vmatpush.msra.mxu0 %v174
    %963 = vmatmul.f32.gmra.mxu0 %v573
    %v964 = vpop.f32.mrf.mxu0
    %v965 = vadd.f32 %v945, %v964
    %966 = vdwg.mxu0
    %967 = vmatpush.msra.mxu0 %v298
    %968 = vmatpush.msra.mxu0 %v294
    %969 = vmatpush.msra.mxu0 %v290
    %970 = vmatpush.msra.mxu0 %v286
    %971 = vmatpush.msra.mxu0 %v282
    %972 = vmatpush.msra.mxu0 %v278
    %973 = vmatpush.msra.mxu0 %v274
    %974 = vmatpush.msra.mxu0 %v270
    %975 = vmatpush.msra.mxu0 %v266
    %976 = vmatpush.msra.mxu0 %v262
    %977 = vmatpush.msra.mxu0 %v258
    %978 = vmatpush.msra.mxu0 %v254
    %979 = vmatpush.msra.mxu0 %v250
    %980 = vmatpush.msra.mxu0 %v246
    %981 = vmatpush.msra.mxu0 %v242
    %982 = vmatpush.msra.mxu0 %v238
    %983 = vmatmul.f32.gmra.mxu0 %v574
    %v984 = vpop.f32.mrf.mxu0
    %v985 = vadd.f32 %v965, %v984
    %986 = vdwg.mxu0
    %987 = vmatpush.msra.mxu0 %v362
    %988 = vmatpush.msra.mxu0 %v358
    %989 = vmatpush.msra.mxu0 %v354
    %990 = vmatpush.msra.mxu0 %v350
    %991 = vmatpush.msra.mxu0 %v346
    %992 = vmatpush.msra.mxu0 %v342
    %993 = vmatpush.msra.mxu0 %v338
    %994 = vmatpush.msra.mxu0 %v334
    %995 = vmatpush.msra.mxu0 %v330
    %996 = vmatpush.msra.mxu0 %v326
    %997 = vmatpush.msra.mxu0 %v322
    %998 = vmatpush.msra.mxu0 %v318
    %999 = vmatpush.msra.mxu0 %v314
    %1000 = vmatpush.msra.mxu0 %v310
    %1001 = vmatpush.msra.mxu0 %v306
    %1002 = vmatpush.msra.mxu0 %v302
    %1003 = vmatmul.f32.gmra.mxu0 %v575
    %v1004 = vpop.f32.mrf.mxu0
    %v1005 = vadd.f32 %v985, %v1004
    %1006 = vdwg.mxu0
    %1007 = vmatpush.msra.mxu0 %v426
    %1008 = vmatpush.msra.mxu0 %v422
    %1009 = vmatpush.msra.mxu0 %v418
    %1010 = vmatpush.msra.mxu0 %v414
    %1011 = vmatpush.msra.mxu0 %v410
    %1012 = vmatpush.msra.mxu0 %v406
    %1013 = vmatpush.msra.mxu0 %v402
    %1014 = vmatpush.msra.mxu0 %v398
    %1015 = vmatpush.msra.mxu0 %v394
    %1016 = vmatpush.msra.mxu0 %v390
    %1017 = vmatpush.msra.mxu0 %v386
    %1018 = vmatpush.msra.mxu0 %v382
    %1019 = vmatpush.msra.mxu0 %v378
    %1020 = vmatpush.msra.mxu0 %v374
    %1021 = vmatpush.msra.mxu0 %v370
    %1022 = vmatpush.msra.mxu0 %v366
    %1023 = vmatmul.f32.gmra.mxu0 %v576
    %v1024 = vpop.f32.mrf.mxu0
    %v1025 = vadd.f32 %v1005, %v1024
    %1026 = vdwg.mxu0
    %1027 = vmatpush.msra.mxu0 %v490
    %1028 = vmatpush.msra.mxu0 %v486
    %1029 = vmatpush.msra.mxu0 %v482
    %1030 = vmatpush.msra.mxu0 %v478
    %1031 = vmatpush.msra.mxu0 %v474
    %1032 = vmatpush.msra.mxu0 %v470
    %1033 = vmatpush.msra.mxu0 %v466
    %1034 = vmatpush.msra.mxu0 %v462
    %1035 = vmatpush.msra.mxu0 %v458
    %1036 = vmatpush.msra.mxu0 %v454
    %1037 = vmatpush.msra.mxu0 %v450
    %1038 = vmatpush.msra.mxu0 %v446
    %1039 = vmatpush.msra.mxu0 %v442
    %1040 = vmatpush.msra.mxu0 %v438
    %1041 = vmatpush.msra.mxu0 %v434
    %1042 = vmatpush.msra.mxu0 %v430
    %1043 = vmatmul.f32.gmra.mxu0 %v577
    %v1044 = vpop.f32.mrf.mxu0
    %v1045 = vadd.f32 %v1025, %v1044
    %1046 = vdwg.mxu0
    %1047 = vmatpush.msra.mxu0 %v554
    %1048 = vmatpush.msra.mxu0 %v550
    %1049 = vmatpush.msra.mxu0 %v546
    %1050 = vmatpush.msra.mxu0 %v542
    %1051 = vmatpush.msra.mxu0 %v538
    %1052 = vmatpush.msra.mxu0 %v534
    %1053 = vmatpush.msra.mxu0 %v530
    %1054 = vmatpush.msra.mxu0 %v526
    %1055 = vmatpush.msra.mxu0 %v522
    %1056 = vmatpush.msra.mxu0 %v518
    %1057 = vmatpush.msra.mxu0 %v514
    %1058 = vmatpush.msra.mxu0 %v510
    %1059 = vmatpush.msra.mxu0 %v506
    %1060 = vmatpush.msra.mxu0 %v502
    %1061 = vmatpush.msra.mxu0 %v498
    %1062 = vmatpush.msra.mxu0 %v494
    %1063 = vmatmul.f32.gmra.mxu0 %v578
    %v1064 = vpop.f32.mrf.mxu0
    %v1065 = vadd.f32 %v1045, %v1064
    %1066 = vdwg.mxu0
    %1067 = vmatpush.msra.mxu0 %v107
    %1068 = vmatpush.msra.mxu0 %v103
    %1069 = vmatpush.msra.mxu0 %v99
    %1070 = vmatpush.msra.mxu0 %v95
    %1071 = vmatpush.msra.mxu0 %v91
    %1072 = vmatpush.msra.mxu0 %v87
    %1073 = vmatpush.msra.mxu0 %v83
    %1074 = vmatpush.msra.mxu0 %v79
    %1075 = vmatpush.msra.mxu0 %v75
    %1076 = vmatpush.msra.mxu0 %v71
    %1077 = vmatpush.msra.mxu0 %v67
    %1078 = vmatpush.msra.mxu0 %v63
    %1079 = vmatpush.msra.mxu0 %v59
    %1080 = vmatpush.msra.mxu0 %v55
    %1081 = vmatpush.msra.mxu0 %v51
    %1082 = vmatpush.msra.mxu0 %v47
    %1083 = vmatmul.f32.gmra.mxu0 %v571
    %v1084 = vpop.f32.mrf.mxu0
    %v1085 = vadd.f32 %v561, %v1084
    %1086 = vdwg.mxu0
    %1087 = vmatpush.msra.mxu0 %v171
    %1088 = vmatpush.msra.mxu0 %v167
    %1089 = vmatpush.msra.mxu0 %v163
    %1090 = vmatpush.msra.mxu0 %v159
    %1091 = vmatpush.msra.mxu0 %v155
    %1092 = vmatpush.msra.mxu0 %v151
    %1093 = vmatpush.msra.mxu0 %v147
    %1094 = vmatpush.msra.mxu0 %v143
    %1095 = vmatpush.msra.mxu0 %v139
    %1096 = vmatpush.msra.mxu0 %v135
    %1097 = vmatpush.msra.mxu0 %v131
    %1098 = vmatpush.msra.mxu0 %v127
    %1099 = vmatpush.msra.mxu0 %v123
    %1100 = vmatpush.msra.mxu0 %v119
    %1101 = vmatpush.msra.mxu0 %v115
    %1102 = vmatpush.msra.mxu0 %v111
    %1103 = vmatmul.f32.gmra.mxu0 %v572
    %v1104 = vpop.f32.mrf.mxu0
    %v1105 = vadd.f32 %v1085, %v1104
    %1106 = vdwg.mxu0
    %1107 = vmatpush.msra.mxu0 %v235
    %1108 = vmatpush.msra.mxu0 %v231
    %1109 = vmatpush.msra.mxu0 %v227
    %1110 = vmatpush.msra.mxu0 %v223
    %1111 = vmatpush.msra.mxu0 %v219
    %1112 = vmatpush.msra.mxu0 %v215
    %1113 = vmatpush.msra.mxu0 %v211
    %1114 = vmatpush.msra.mxu0 %v207
    %1115 = vmatpush.msra.mxu0 %v203
    %1116 = vmatpush.msra.mxu0 %v199
    %1117 = vmatpush.msra.mxu0 %v195
    %1118 = vmatpush.msra.mxu0 %v191
    %1119 = vmatpush.msra.mxu0 %v187
    %1120 = vmatpush.msra.mxu0 %v183
    %1121 = vmatpush.msra.mxu0 %v179
    %1122 = vmatpush.msra.mxu0 %v175
    %1123 = vmatmul.f32.gmra.mxu0 %v573
    %v1124 = vpop.f32.mrf.mxu0
    %v1125 = vadd.f32 %v1105, %v1124
    %1126 = vdwg.mxu0
    %1127 = vmatpush.msra.mxu0 %v299
    %1128 = vmatpush.msra.mxu0 %v295
    %1129 = vmatpush.msra.mxu0 %v291
    %1130 = vmatpush.msra.mxu0 %v287
    %1131 = vmatpush.msra.mxu0 %v283
    %1132 = vmatpush.msra.mxu0 %v279
    %1133 = vmatpush.msra.mxu0 %v275
    %1134 = vmatpush.msra.mxu0 %v271
    %1135 = vmatpush.msra.mxu0 %v267
    %1136 = vmatpush.msra.mxu0 %v263
    %1137 = vmatpush.msra.mxu0 %v259
    %1138 = vmatpush.msra.mxu0 %v255
    %1139 = vmatpush.msra.mxu0 %v251
    %1140 = vmatpush.msra.mxu0 %v247
    %1141 = vmatpush.msra.mxu0 %v243
    %1142 = vmatpush.msra.mxu0 %v239
    %1143 = vmatmul.f32.gmra.mxu0 %v574
    %v1144 = vpop.f32.mrf.mxu0
    %v1145 = vadd.f32 %v1125, %v1144
    %1146 = vdwg.mxu0
    %1147 = vmatpush.msra.mxu0 %v363
    %1148 = vmatpush.msra.mxu0 %v359
    %1149 = vmatpush.msra.mxu0 %v355
    %1150 = vmatpush.msra.mxu0 %v351
    %1151 = vmatpush.msra.mxu0 %v347
    %1152 = vmatpush.msra.mxu0 %v343
    %1153 = vmatpush.msra.mxu0 %v339
    %1154 = vmatpush.msra.mxu0 %v335
    %1155 = vmatpush.msra.mxu0 %v331
    %1156 = vmatpush.msra.mxu0 %v327
    %1157 = vmatpush.msra.mxu0 %v323
    %1158 = vmatpush.msra.mxu0 %v319
    %1159 = vmatpush.msra.mxu0 %v315
    %1160 = vmatpush.msra.mxu0 %v311
    %1161 = vmatpush.msra.mxu0 %v307
    %1162 = vmatpush.msra.mxu0 %v303
    %1163 = vmatmul.f32.gmra.mxu0 %v575
    %v1164 = vpop.f32.mrf.mxu0
    %v1165 = vadd.f32 %v1145, %v1164
    %1166 = vdwg.mxu0
    %1167 = vmatpush.msra.mxu0 %v427
    %1168 = vmatpush.msra.mxu0 %v423
    %1169 = vmatpush.msra.mxu0 %v419
    %1170 = vmatpush.msra.mxu0 %v415
    %1171 = vmatpush.msra.mxu0 %v411
    %1172 = vmatpush.msra.mxu0 %v407
    %1173 = vmatpush.msra.mxu0 %v403
    %1174 = vmatpush.msra.mxu0 %v399
    %1175 = vmatpush.msra.mxu0 %v395
    %1176 = vmatpush.msra.mxu0 %v391
    %1177 = vmatpush.msra.mxu0 %v387
    %1178 = vmatpush.msra.mxu0 %v383
    %1179 = vmatpush.msra.mxu0 %v379
    %1180 = vmatpush.msra.mxu0 %v375
    %1181 = vmatpush.msra.mxu0 %v371
    %1182 = vmatpush.msra.mxu0 %v367
    %1183 = vmatmul.f32.gmra.mxu0 %v576
    %v1184 = vpop.f32.mrf.mxu0
    %v1185 = vadd.f32 %v1165, %v1184
    %1186 = vdwg.mxu0
    %1187 = vmatpush.msra.mxu0 %v491
    %1188 = vmatpush.msra.mxu0 %v487
    %1189 = vmatpush.msra.mxu0 %v483
    %1190 = vmatpush.msra.mxu0 %v479
    %1191 = vmatpush.msra.mxu0 %v475
    %1192 = vmatpush.msra.mxu0 %v471
    %1193 = vmatpush.msra.mxu0 %v467
    %1194 = vmatpush.msra.mxu0 %v463
    %1195 = vmatpush.msra.mxu0 %v459
    %1196 = vmatpush.msra.mxu0 %v455
    %1197 = vmatpush.msra.mxu0 %v451
    %1198 = vmatpush.msra.mxu0 %v447
    %1199 = vmatpush.msra.mxu0 %v443
    %1200 = vmatpush.msra.mxu0 %v439
    %1201 = vmatpush.msra.mxu0 %v435
    %1202 = vmatpush.msra.mxu0 %v431
    %1203 = vmatmul.f32.gmra.mxu0 %v577
    %v1204 = vpop.f32.mrf.mxu0
    %v1205 = vadd.f32 %v1185, %v1204
    %1206 = vdwg.mxu0
    %1207 = vmatpush.msra.mxu0 %v555
    %1208 = vmatpush.msra.mxu0 %v551
    %1209 = vmatpush.msra.mxu0 %v547
    %1210 = vmatpush.msra.mxu0 %v543
    %1211 = vmatpush.msra.mxu0 %v539
    %1212 = vmatpush.msra.mxu0 %v535
    %1213 = vmatpush.msra.mxu0 %v531
    %1214 = vmatpush.msra.mxu0 %v527
    %1215 = vmatpush.msra.mxu0 %v523
    %1216 = vmatpush.msra.mxu0 %v519
    %1217 = vmatpush.msra.mxu0 %v515
    %1218 = vmatpush.msra.mxu0 %v511
    %1219 = vmatpush.msra.mxu0 %v507
    %1220 = vmatpush.msra.mxu0 %v503
    %1221 = vmatpush.msra.mxu0 %v499
    %1222 = vmatpush.msra.mxu0 %v495
    %1223 = vmatmul.f32.gmra.mxu0 %v578
    %v1224 = vpop.f32.mrf.mxu0
    %v1225 = vadd.f32 %v1205, %v1224
    %1226 = vdwg.mxu0
    %v1227 = vld [vmem:[#allocation2] sm:$0xff]
    %v1228 = vld [vmem:[#allocation2 + $0x8] sm:$0xff]
    %v1229 = vld [vmem:[#allocation2 + $0x10] sm:$0xff]
    %v1230 = vld [vmem:[#allocation2 + $0x18] sm:$0xff]
    %v1231 = vld [vmem:[#allocation2 + $0x20] sm:$0xff]
    %v1232 = vld [vmem:[#allocation2 + $0x28] sm:$0xff]
    %v1233 = vld [vmem:[#allocation2 + $0x30] sm:$0xff]
    %v1234 = vld [vmem:[#allocation2 + $0x38] sm:$0xff]
    %v1235 = vld [vmem:[#allocation2 + $0x40] sm:$0xff]
    %v1236 = vld [vmem:[#allocation2 + $0x48] sm:$0xff]
    %v1237 = vld [vmem:[#allocation2 + $0x50] sm:$0xff]
    %v1238 = vld [vmem:[#allocation2 + $0x58] sm:$0xff]
    %v1239 = vld [vmem:[#allocation2 + $0x60] sm:$0xff]
    %v1240 = vld [vmem:[#allocation2 + $0x68] sm:$0xff]
    %v1241 = vld [vmem:[#allocation2 + $0x70] sm:$0xff]
    %v1242 = vld [vmem:[#allocation2 + $0x78] sm:$0xff]
    %v1243 = vld [vmem:[#allocation2 + $0x80] sm:$0xff]
    %v1244 = vld [vmem:[#allocation2 + $0x88] sm:$0xff]
    %v1245 = vld [vmem:[#allocation2 + $0x90] sm:$0xff]
    %v1246 = vld [vmem:[#allocation2 + $0x98] sm:$0xff]
    %v1247 = vld [vmem:[#allocation2 + $0xa0] sm:$0xff]
    %v1248 = vld [vmem:[#allocation2 + $0xa8] sm:$0xff]
    %v1249 = vld [vmem:[#allocation2 + $0xb0] sm:$0xff]
    %v1250 = vld [vmem:[#allocation2 + $0xb8] sm:$0xff]
    %v1251 = vld [vmem:[#allocation2 + $0xc0] sm:$0xff]
    %v1252 = vld [vmem:[#allocation2 + $0xc8] sm:$0xff]
    %v1253 = vld [vmem:[#allocation2 + $0xd0] sm:$0xff]
    %v1254 = vld [vmem:[#allocation2 + $0xd8] sm:$0xff]
    %v1255 = vld [vmem:[#allocation2 + $0xe0] sm:$0xff]
    %v1256 = vld [vmem:[#allocation2 + $0xe8] sm:$0xff]
    %v1257 = vld [vmem:[#allocation2 + $0xf0] sm:$0xff]
    %v1258 = vld [vmem:[#allocation2 + $0xf8] sm:$0xff]
    %v1259 = vld [vmem:[#allocation2 + $0x100] sm:$0xff]
    %v1260 = vld [vmem:[#allocation2 + $0x108] sm:$0xff]
    %v1261 = vld [vmem:[#allocation2 + $0x110] sm:$0xff]
    %v1262 = vld [vmem:[#allocation2 + $0x118] sm:$0xff]
    %v1263 = vld [vmem:[#allocation2 + $0x120] sm:$0xff]
    %v1264 = vld [vmem:[#allocation2 + $0x128] sm:$0xff]
    %v1265 = vld [vmem:[#allocation2 + $0x130] sm:$0xff]
    %v1266 = vld [vmem:[#allocation2 + $0x138] sm:$0xff]
    %v1267 = vld [vmem:[#allocation2 + $0x140] sm:$0xff]
    %v1268 = vld [vmem:[#allocation2 + $0x148] sm:$0xff]
    %v1269 = vld [vmem:[#allocation2 + $0x150] sm:$0xff]
    %v1270 = vld [vmem:[#allocation2 + $0x158] sm:$0xff]
    %v1271 = vld [vmem:[#allocation2 + $0x160] sm:$0xff]
    %v1272 = vld [vmem:[#allocation2 + $0x168] sm:$0xff]
    %v1273 = vld [vmem:[#allocation2 + $0x170] sm:$0xff]
    %v1274 = vld [vmem:[#allocation2 + $0x178] sm:$0xff]
    %v1275 = vld [vmem:[#allocation2 + $0x180] sm:$0xff]
    %v1276 = vld [vmem:[#allocation2 + $0x188] sm:$0xff]
    %v1277 = vld [vmem:[#allocation2 + $0x190] sm:$0xff]
    %v1278 = vld [vmem:[#allocation2 + $0x198] sm:$0xff]
    %v1279 = vld [vmem:[#allocation2 + $0x1a0] sm:$0xff]
    %v1280 = vld [vmem:[#allocation2 + $0x1a8] sm:$0xff]
    %v1281 = vld [vmem:[#allocation2 + $0x1b0] sm:$0xff]
    %v1282 = vld [vmem:[#allocation2 + $0x1b8] sm:$0xff]
    %v1283 = vld [vmem:[#allocation2 + $0x1c0] sm:$0xff]
    %v1284 = vld [vmem:[#allocation2 + $0x1c8] sm:$0xff]
    %v1285 = vld [vmem:[#allocation2 + $0x1d0] sm:$0xff]
    %v1286 = vld [vmem:[#allocation2 + $0x1d8] sm:$0xff]
    %v1287 = vld [vmem:[#allocation2 + $0x1e0] sm:$0xff]
    %v1288 = vld [vmem:[#allocation2 + $0x1e8] sm:$0xff]
    %v1289 = vld [vmem:[#allocation2 + $0x1f0] sm:$0xff]
    %v1290 = vld [vmem:[#allocation2 + $0x1f8] sm:$0xff]
    %v1291 = vld [vmem:[#allocation2 + $0x200] sm:$0xff]
    %v1292 = vld [vmem:[#allocation2 + $0x208] sm:$0xff]
    %v1293 = vld [vmem:[#allocation2 + $0x210] sm:$0xff]
    %v1294 = vld [vmem:[#allocation2 + $0x218] sm:$0xff]
    %v1295 = vld [vmem:[#allocation2 + $0x220] sm:$0xff]
    %v1296 = vld [vmem:[#allocation2 + $0x228] sm:$0xff]
    %v1297 = vld [vmem:[#allocation2 + $0x230] sm:$0xff]
    %v1298 = vld [vmem:[#allocation2 + $0x238] sm:$0xff]
    %v1299 = vld [vmem:[#allocation2 + $0x240] sm:$0xff]
    %v1300 = vld [vmem:[#allocation2 + $0x248] sm:$0xff]
    %v1301 = vld [vmem:[#allocation2 + $0x250] sm:$0xff]
    %v1302 = vld [vmem:[#allocation2 + $0x258] sm:$0xff]
    %v1303 = vld [vmem:[#allocation2 + $0x260] sm:$0xff]
    %v1304 = vld [vmem:[#allocation2 + $0x268] sm:$0xff]
    %v1305 = vld [vmem:[#allocation2 + $0x270] sm:$0xff]
    %v1306 = vld [vmem:[#allocation2 + $0x278] sm:$0xff]
    %v1307 = vld [vmem:[#allocation2 + $0x280] sm:$0xff]
    %v1308 = vld [vmem:[#allocation2 + $0x288] sm:$0xff]
    %v1309 = vld [vmem:[#allocation2 + $0x290] sm:$0xff]
    %v1310 = vld [vmem:[#allocation2 + $0x298] sm:$0xff]
    %v1311 = vld [vmem:[#allocation2 + $0x2a0] sm:$0xff]
    %v1312 = vld [vmem:[#allocation2 + $0x2a8] sm:$0xff]
    %v1313 = vld [vmem:[#allocation2 + $0x2b0] sm:$0xff]
    %v1314 = vld [vmem:[#allocation2 + $0x2b8] sm:$0xff]
    %v1315 = vld [vmem:[#allocation2 + $0x2c0] sm:$0xff]
    %v1316 = vld [vmem:[#allocation2 + $0x2c8] sm:$0xff]
    %v1317 = vld [vmem:[#allocation2 + $0x2d0] sm:$0xff]
    %v1318 = vld [vmem:[#allocation2 + $0x2d8] sm:$0xff]
    %v1319 = vld [vmem:[#allocation2 + $0x2e0] sm:$0xff]
    %v1320 = vld [vmem:[#allocation2 + $0x2e8] sm:$0xff]
    %v1321 = vld [vmem:[#allocation2 + $0x2f0] sm:$0xff]
    %v1322 = vld [vmem:[#allocation2 + $0x2f8] sm:$0xff]
    %v1323 = vld [vmem:[#allocation2 + $0x300] sm:$0xff]
    %v1324 = vld [vmem:[#allocation2 + $0x308] sm:$0xff]
    %v1325 = vld [vmem:[#allocation2 + $0x310] sm:$0xff]
    %v1326 = vld [vmem:[#allocation2 + $0x318] sm:$0xff]
    %v1327 = vld [vmem:[#allocation2 + $0x320] sm:$0xff]
    %v1328 = vld [vmem:[#allocation2 + $0x328] sm:$0xff]
    %v1329 = vld [vmem:[#allocation2 + $0x330] sm:$0xff]
    %v1330 = vld [vmem:[#allocation2 + $0x338] sm:$0xff]
    %v1331 = vld [vmem:[#allocation2 + $0x340] sm:$0xff]
    %v1332 = vld [vmem:[#allocation2 + $0x348] sm:$0xff]
    %v1333 = vld [vmem:[#allocation2 + $0x350] sm:$0xff]
    %v1334 = vld [vmem:[#allocation2 + $0x358] sm:$0xff]
    %v1335 = vld [vmem:[#allocation2 + $0x360] sm:$0xff]
    %v1336 = vld [vmem:[#allocation2 + $0x368] sm:$0xff]
    %v1337 = vld [vmem:[#allocation2 + $0x370] sm:$0xff]
    %v1338 = vld [vmem:[#allocation2 + $0x378] sm:$0xff]
    %v1339 = vld [vmem:[#allocation2 + $0x380] sm:$0xff]
    %v1340 = vld [vmem:[#allocation2 + $0x388] sm:$0xff]
    %v1341 = vld [vmem:[#allocation2 + $0x390] sm:$0xff]
    %v1342 = vld [vmem:[#allocation2 + $0x398] sm:$0xff]
    %v1343 = vld [vmem:[#allocation2 + $0x3a0] sm:$0xff]
    %v1344 = vld [vmem:[#allocation2 + $0x3a8] sm:$0xff]
    %v1345 = vld [vmem:[#allocation2 + $0x3b0] sm:$0xff]
    %v1346 = vld [vmem:[#allocation2 + $0x3b8] sm:$0xff]
    %v1347 = vld [vmem:[#allocation2 + $0x3c0] sm:$0xff]
    %v1348 = vld [vmem:[#allocation2 + $0x3c8] sm:$0xff]
    %v1349 = vld [vmem:[#allocation2 + $0x3d0] sm:$0xff]
    %v1350 = vld [vmem:[#allocation2 + $0x3d8] sm:$0xff]
    %v1351 = vld [vmem:[#allocation2 + $0x3e0] sm:$0xff]
    %v1352 = vld [vmem:[#allocation2 + $0x3e8] sm:$0xff]
    %v1353 = vld [vmem:[#allocation2 + $0x3f0] sm:$0xff]
    %v1354 = vld [vmem:[#allocation2 + $0x3f8] sm:$0xff]
    %v1355 = vld [vmem:[%s4] sm:$0x3]
    %v1357 = vperm.slane %v1355, 0
    %v1358 = vperm.slane %v1355, 1
    %1361 = vmatpush.msra.mxu0 %v1257
    %1362 = vmatpush.msra.mxu0 %v1255
    %1363 = vmatpush.msra.mxu0 %v1253
    %1364 = vmatpush.msra.mxu0 %v1251
    %1365 = vmatpush.msra.mxu0 %v1249
    %1366 = vmatpush.msra.mxu0 %v1247
    %1367 = vmatpush.msra.mxu0 %v1245
    %1368 = vmatpush.msra.mxu0 %v1243
    %1369 = vmatpush.msra.mxu0 %v1241
    %1370 = vmatpush.msra.mxu0 %v1239
    %1371 = vmatpush.msra.mxu0 %v1237
    %1372 = vmatpush.msra.mxu0 %v1235
    %1373 = vmatpush.msra.mxu0 %v1233
    %1374 = vmatpush.msra.mxu0 %v1231
    %1375 = vmatpush.msra.mxu0 %v1229
    %1376 = vmatpush.msra.mxu0 %v1227
    %1377 = vmatmul.f32.gmra.mxu0 %v745
    %v1378 = vpop.f32.mrf.mxu0
    %v1379 = vadd.f32 %v1357, %v1378
    %1380 = vdwg.mxu0
    %1381 = vmatpush.msra.mxu0 %v1289
    %1382 = vmatpush.msra.mxu0 %v1287
    %1383 = vmatpush.msra.mxu0 %v1285
    %1384 = vmatpush.msra.mxu0 %v1283
    %1385 = vmatpush.msra.mxu0 %v1281
    %1386 = vmatpush.msra.mxu0 %v1279
    %1387 = vmatpush.msra.mxu0 %v1277
    %1388 = vmatpush.msra.mxu0 %v1275
    %1389 = vmatpush.msra.mxu0 %v1273
    %1390 = vmatpush.msra.mxu0 %v1271
    %1391 = vmatpush.msra.mxu0 %v1269
    %1392 = vmatpush.msra.mxu0 %v1267
    %1393 = vmatpush.msra.mxu0 %v1265
    %1394 = vmatpush.msra.mxu0 %v1263
    %1395 = vmatpush.msra.mxu0 %v1261
    %1396 = vmatpush.msra.mxu0 %v1259
    %1397 = vmatmul.f32.gmra.mxu0 %v905
    %v1398 = vpop.f32.mrf.mxu0
    %v1399 = vadd.f32 %v1379, %v1398
    %1400 = vdwg.mxu0
    %1401 = vmatpush.msra.mxu0 %v1321
    %1402 = vmatpush.msra.mxu0 %v1319
    %1403 = vmatpush.msra.mxu0 %v1317
    %1404 = vmatpush.msra.mxu0 %v1315
    %1405 = vmatpush.msra.mxu0 %v1313
    %1406 = vmatpush.msra.mxu0 %v1311
    %1407 = vmatpush.msra.mxu0 %v1309
    %1408 = vmatpush.msra.mxu0 %v1307
    %1409 = vmatpush.msra.mxu0 %v1305
    %1410 = vmatpush.msra.mxu0 %v1303
    %1411 = vmatpush.msra.mxu0 %v1301
    %1412 = vmatpush.msra.mxu0 %v1299
    %1413 = vmatpush.msra.mxu0 %v1297
    %1414 = vmatpush.msra.mxu0 %v1295
    %1415 = vmatpush.msra.mxu0 %v1293
    %1416 = vmatpush.msra.mxu0 %v1291
    %1417 = vmatmul.f32.gmra.mxu0 %v1065
    %v1418 = vpop.f32.mrf.mxu0
    %v1419 = vadd.f32 %v1399, %v1418
    %1420 = vdwg.mxu0
    %1421 = vmatpush.msra.mxu0 %v1353
    %1422 = vmatpush.msra.mxu0 %v1351
    %1423 = vmatpush.msra.mxu0 %v1349
    %1424 = vmatpush.msra.mxu0 %v1347
    %1425 = vmatpush.msra.mxu0 %v1345
    %1426 = vmatpush.msra.mxu0 %v1343
    %1427 = vmatpush.msra.mxu0 %v1341
    %1428 = vmatpush.msra.mxu0 %v1339
    %1429 = vmatpush.msra.mxu0 %v1337
    %1430 = vmatpush.msra.mxu0 %v1335
    %1431 = vmatpush.msra.mxu0 %v1333
    %1432 = vmatpush.msra.mxu0 %v1331
    %1433 = vmatpush.msra.mxu0 %v1329
    %1434 = vmatpush.msra.mxu0 %v1327
    %1435 = vmatpush.msra.mxu0 %v1325
    %1436 = vmatpush.msra.mxu0 %v1323
    %1437 = vmatmul.f32.gmra.mxu0 %v1225
    %v1438 = vpop.f32.mrf.mxu0
    %v1439 = vadd.f32 %v1419, %v1438
    %1440 = vdwg.mxu0
    %1441 = vmatpush.msra.mxu0 %v1258
    %1442 = vmatpush.msra.mxu0 %v1256
    %1443 = vmatpush.msra.mxu0 %v1254
    %1444 = vmatpush.msra.mxu0 %v1252
    %1445 = vmatpush.msra.mxu0 %v1250
    %1446 = vmatpush.msra.mxu0 %v1248
    %1447 = vmatpush.msra.mxu0 %v1246
    %1448 = vmatpush.msra.mxu0 %v1244
    %1449 = vmatpush.msra.mxu0 %v1242
    %1450 = vmatpush.msra.mxu0 %v1240
    %1451 = vmatpush.msra.mxu0 %v1238
    %1452 = vmatpush.msra.mxu0 %v1236
    %1453 = vmatpush.msra.mxu0 %v1234
    %1454 = vmatpush.msra.mxu0 %v1232
    %1455 = vmatpush.msra.mxu0 %v1230
    %1456 = vmatpush.msra.mxu0 %v1228
    %1457 = vmatmul.f32.gmra.mxu0 %v745
    %v1458 = vpop.f32.mrf.mxu0
    %v1459 = vadd.f32 %v1358, %v1458
    %1460 = vdwg.mxu0
    %1461 = vmatpush.msra.mxu0 %v1290
    %1462 = vmatpush.msra.mxu0 %v1288
    %1463 = vmatpush.msra.mxu0 %v1286
    %1464 = vmatpush.msra.mxu0 %v1284
    %1465 = vmatpush.msra.mxu0 %v1282
    %1466 = vmatpush.msra.mxu0 %v1280
    %1467 = vmatpush.msra.mxu0 %v1278
    %1468 = vmatpush.msra.mxu0 %v1276
    %1469 = vmatpush.msra.mxu0 %v1274
    %1470 = vmatpush.msra.mxu0 %v1272
    %1471 = vmatpush.msra.mxu0 %v1270
    %1472 = vmatpush.msra.mxu0 %v1268
    %1473 = vmatpush.msra.mxu0 %v1266
    %1474 = vmatpush.msra.mxu0 %v1264
    %1475 = vmatpush.msra.mxu0 %v1262
    %1476 = vmatpush.msra.mxu0 %v1260
    %1477 = vmatmul.f32.gmra.mxu0 %v905
    %v1478 = vpop.f32.mrf.mxu0
    %v1479 = vadd.f32 %v1459, %v1478
    %1480 = vdwg.mxu0
    %1481 = vmatpush.msra.mxu0 %v1322
    %1482 = vmatpush.msra.mxu0 %v1320
    %1483 = vmatpush.msra.mxu0 %v1318
    %1484 = vmatpush.msra.mxu0 %v1316
    %1485 = vmatpush.msra.mxu0 %v1314
    %1486 = vmatpush.msra.mxu0 %v1312
    %1487 = vmatpush.msra.mxu0 %v1310
    %1488 = vmatpush.msra.mxu0 %v1308
    %1489 = vmatpush.msra.mxu0 %v1306
    %1490 = vmatpush.msra.mxu0 %v1304
    %1491 = vmatpush.msra.mxu0 %v1302
    %1492 = vmatpush.msra.mxu0 %v1300
    %1493 = vmatpush.msra.mxu0 %v1298
    %1494 = vmatpush.msra.mxu0 %v1296
    %1495 = vmatpush.msra.mxu0 %v1294
    %1496 = vmatpush.msra.mxu0 %v1292
    %1497 = vmatmul.f32.gmra.mxu0 %v1065
    %v1498 = vpop.f32.mrf.mxu0
    %v1499 = vadd.f32 %v1479, %v1498
    %1500 = vdwg.mxu0
    %1501 = vmatpush.msra.mxu0 %v1354
    %1502 = vmatpush.msra.mxu0 %v1352
    %1503 = vmatpush.msra.mxu0 %v1350
    %1504 = vmatpush.msra.mxu0 %v1348
    %1505 = vmatpush.msra.mxu0 %v1346
    %1506 = vmatpush.msra.mxu0 %v1344
    %1507 = vmatpush.msra.mxu0 %v1342
    %1508 = vmatpush.msra.mxu0 %v1340
    %1509 = vmatpush.msra.mxu0 %v1338
    %1510 = vmatpush.msra.mxu0 %v1336
    %1511 = vmatpush.msra.mxu0 %v1334
    %1512 = vmatpush.msra.mxu0 %v1332
    %1513 = vmatpush.msra.mxu0 %v1330
    %1514 = vmatpush.msra.mxu0 %v1328
    %1515 = vmatpush.msra.mxu0 %v1326
    %1516 = vmatpush.msra.mxu0 %v1324
    %1517 = vmatmul.f32.gmra.mxu0 %v1225
    %v1518 = vpop.f32.mrf.mxu0
    %v1519 = vadd.f32 %v1499, %v1518
    %1520 = vdwg.mxu0
    %v1521 = vld [vmem:[%s5] sm:$0xff]
    %v1522 = vld [vmem:[%s5 + $0x8] sm:$0xff]
    %v1523 = vld [vmem:[%s5 + $0x10] sm:$0xff]
    %v1524 = vld [vmem:[%s5 + $0x18] sm:$0xff]
    %v1525 = vld [vmem:[%s5 + $0x20] sm:$0xff]
    %v1526 = vld [vmem:[%s5 + $0x28] sm:$0xff]
    %v1527 = vld [vmem:[%s5 + $0x30] sm:$0xff]
    %v1528 = vld [vmem:[%s5 + $0x38] sm:$0xff]
    %v1529 = vld [vmem:[%s5 + $0x40] sm:$0xff]
    %v1530 = vld [vmem:[%s5 + $0x48] sm:$0xff]
    %v1531 = vld [vmem:[%s5 + $0x50] sm:$0xff]
    %v1532 = vld [vmem:[%s5 + $0x58] sm:$0xff]
    %v1533 = vld [vmem:[%s5 + $0x60] sm:$0xff]
    %v1534 = vld [vmem:[%s5 + $0x68] sm:$0xff]
    %v1535 = vld [vmem:[%s5 + $0x70] sm:$0xff]
    %v1536 = vld [vmem:[%s5 + $0x78] sm:$0xff]
    %v1537 = vld [vmem:[%s5 + $0x80] sm:$0xff]
    %v1538 = vld [vmem:[%s5 + $0x88] sm:$0xff]
    %v1539 = vld [vmem:[%s5 + $0x90] sm:$0xff]
    %v1540 = vld [vmem:[%s5 + $0x98] sm:$0xff]
    %v1541 = vld [vmem:[%s5 + $0xa0] sm:$0xff]
    %v1542 = vld [vmem:[%s5 + $0xa8] sm:$0xff]
    %v1543 = vld [vmem:[%s5 + $0xb0] sm:$0xff]
    %v1544 = vld [vmem:[%s5 + $0xb8] sm:$0xff]
    %v1545 = vld [vmem:[%s5 + $0xc0] sm:$0xff]
    %v1546 = vld [vmem:[%s5 + $0xc8] sm:$0xff]
    %v1547 = vld [vmem:[%s5 + $0xd0] sm:$0xff]
    %v1548 = vld [vmem:[%s5 + $0xd8] sm:$0xff]
    %v1549 = vld [vmem:[%s5 + $0xe0] sm:$0xff]
    %v1550 = vld [vmem:[%s5 + $0xe8] sm:$0xff]
    %v1551 = vld [vmem:[%s5 + $0xf0] sm:$0xff]
    %v1552 = vld [vmem:[%s5 + $0xf8] sm:$0xff]
    %v1553 = vld [vmem:[%s6] sm:$0x1]
    %v1555 = vperm.slane %v1553, 0
    %1557 = vmatpush.msra.mxu0 %v1536
    %1558 = vmatpush.msra.mxu0 %v1535
    %1559 = vmatpush.msra.mxu0 %v1534
    %1560 = vmatpush.msra.mxu0 %v1533
    %1561 = vmatpush.msra.mxu0 %v1532
    %1562 = vmatpush.msra.mxu0 %v1531
    %1563 = vmatpush.msra.mxu0 %v1530
    %1564 = vmatpush.msra.mxu0 %v1529
    %1565 = vmatpush.msra.mxu0 %v1528
    %1566 = vmatpush.msra.mxu0 %v1527
    %1567 = vmatpush.msra.mxu0 %v1526
    %1568 = vmatpush.msra.mxu0 %v1525
    %1569 = vmatpush.msra.mxu0 %v1524
    %1570 = vmatpush.msra.mxu0 %v1523
    %1571 = vmatpush.msra.mxu0 %v1522
    %1572 = vmatpush.msra.mxu0 %v1521
    %1573 = vmatmul.f32.gmra.mxu0 %v1439
    %v1574 = vpop.f32.mrf.mxu0
    %v1575 = vadd.f32 %v1555, %v1574
    %1576 = vdwg.mxu0
    %1577 = vmatpush.msra.mxu0 %v1552
    %1578 = vmatpush.msra.mxu0 %v1551
    %1579 = vmatpush.msra.mxu0 %v1550
    %1580 = vmatpush.msra.mxu0 %v1549
    %1581 = vmatpush.msra.mxu0 %v1548
    %1582 = vmatpush.msra.mxu0 %v1547
    %1583 = vmatpush.msra.mxu0 %v1546
    %1584 = vmatpush.msra.mxu0 %v1545
    %1585 = vmatpush.msra.mxu0 %v1544
    %1586 = vmatpush.msra.mxu0 %v1543
    %1587 = vmatpush.msra.mxu0 %v1542
    %1588 = vmatpush.msra.mxu0 %v1541
    %1589 = vmatpush.msra.mxu0 %v1540
    %1590 = vmatpush.msra.mxu0 %v1539
    %1591 = vmatpush.msra.mxu0 %v1538
    %1592 = vmatpush.msra.mxu0 %v1537
    %1593 = vmatmul.f32.gmra.mxu0 %v1519
    %v1594 = vpop.f32.mrf.mxu0
    %v1595 = vadd.f32 %v1575, %v1594
    %1596 = vdwg.mxu0
    %v1597 = vlaneseq
    %v1598 = vand.u32 %v1597, 127
    %vm1599 = vcmp.lt.s32.totalorder %v1598, 30
    %v1600 = vmax.f32 %v1595, 0.0
    %v1601 = vsel %vm1599, %v1595, %v1600
    %vm1602 = vcmask 320512
    %1603 = vst.msk [vmem:[%s7] sm:$0x3] %vm1602, %v1601
    // Predicated region
    $region34: #{objectcloud_encoder_pallas.3} parent=1 // pred_check
      _
    $region35: #{objectcloud_encoder_pallas.3} parent=1 // pred_check_branch
      %1605 = sbr.rel (0) target = $region37
    $region36: #{objectcloud_encoder_pallas.3} parent=1 // pred_region
      _
    $region37: #{objectcloud_encoder_pallas.3} parent=1 // pred_fallthru
      _
    // Predicated region
    $region38: #{objectcloud_encoder_pallas.3} parent=1 // pred_check
      _
    $region39: #{objectcloud_encoder_pallas.3} parent=1 // pred_check_branch
      %1607 = sbr.rel (0) target = $region41
    $region40: #{objectcloud_encoder_pallas.3} parent=1 // pred_region
      _
    $region41: #{objectcloud_encoder_pallas.3} parent=1 // pred_fallthru
      _
    %1608 = vsyncpa [#allocation3], 1

// kernel: objectcloud_encoder_pallas.2
$region0: #{objectcloud_encoder_pallas.2}
  #allocation0 [shape = 'u32[]', space=smem, size = 0x4, offset = 0x4, fixed_abs, tag = 'smem constant byte address 0x4 - core index']
  #allocation1 [shape = 'u32[72,128]{1,0:T(1,128)}', space=vmem, size = 0x9000, scoped, tag = 'internal scratch']
  %s0 = inlined_call_operand.vmem [shape: f32[2,16,4], index: 0, kind: input, shape index: {}]
  %s1 = inlined_call_operand.vmem [shape: s32[2,1], index: 1, kind: input, shape index: {}]
  %s2 = inlined_call_operand.vmem [shape: f32[4,128], index: 2, kind: input, shape index: {}]
  %s3 = inlined_call_operand.vmem [shape: f32[1,128], index: 3, kind: input, shape index: {}]
  %s4 = inlined_call_operand.vmem [shape: f32[128,256], index: 4, kind: input, shape index: {}]
  %s5 = inlined_call_operand.vmem [shape: f32[1,256], index: 5, kind: input, shape index: {}]
  %s6 = inlined_call_operand.vmem [shape: f32[256,512], index: 6, kind: input, shape index: {}]
  %s7 = inlined_call_operand.vmem [shape: f32[256,512], index: 7, kind: input, shape index: {}]
  %s8 = inlined_call_operand.vmem [shape: f32[1,512], index: 8, kind: input, shape index: {}]
  %s9 = inlined_call_operand.hbm [shape: f32[512,1024], index: 9, kind: input, shape index: {}]
  %s10 = inlined_call_operand.vmem [shape: f32[1,1024], index: 10, kind: input, shape index: {}]
  %s11 = inlined_call_operand.vmem [shape: f32[2,1024], index: 11, kind: output, shape index: {}]
  %s12 = sld [smem:[#allocation0]]
  $region58: #{objectcloud_encoder_pallas.2} parent=0
    _
  %s14 = ssub.s32 1, %s12
  %s15 = scalar_select 0, %s14, %s12
  $region1: #{objectcloud_encoder_pallas.2} parent=0
    #allocation2 [shape = 'u8[2097152]{0}', space=vmem, size = 0x200000, scoped, tag = 'input window, operand 9, single buffered']
    #allocation3 [shape = 's32[1]{0}', space=sflag, size = 0x4, scoped, tag = 'scoped memory for objectcloud_encoder_pallas.2']
    %16 = vsyncpa [#allocation3], 0
    // Predicated region
    $region2: #{objectcloud_encoder_pallas.2} parent=1 // pred_check
      _
    $region3: #{objectcloud_encoder_pallas.2} parent=1 // pred_check_branch
      %18 = sbr.rel (0) target = $region5
    $region4: #{objectcloud_encoder_pallas.2} parent=1 // pred_region
      _
    $region5: #{objectcloud_encoder_pallas.2} parent=1 // pred_fallthru
      _
    // Predicated region
    $region6: #{objectcloud_encoder_pallas.2} parent=1 // pred_check
      _
    $region7: #{objectcloud_encoder_pallas.2} parent=1 // pred_check_branch
      %20 = sbr.rel (0) target = $region9
    $region8: #{objectcloud_encoder_pallas.2} parent=1 // pred_region
      _
    $region9: #{objectcloud_encoder_pallas.2} parent=1 // pred_fallthru
      _
    // Predicated region
    $region10: #{objectcloud_encoder_pallas.2} parent=1 // pred_check
      _
    $region11: #{objectcloud_encoder_pallas.2} parent=1 // pred_check_branch
      %22 = sbr.rel (0) target = $region13
    $region12: #{objectcloud_encoder_pallas.2} parent=1 // pred_region
      _
    $region13: #{objectcloud_encoder_pallas.2} parent=1 // pred_fallthru
      _
    // Predicated region
    $region14: #{objectcloud_encoder_pallas.2} parent=1 // pred_check
      _
    $region15: #{objectcloud_encoder_pallas.2} parent=1 // pred_check_branch
      %24 = sbr.rel (0) target = $region17
    $region16: #{objectcloud_encoder_pallas.2} parent=1 // pred_region
      _
    $region17: #{objectcloud_encoder_pallas.2} parent=1 // pred_fallthru
      _
    // Predicated region
    $region18: #{objectcloud_encoder_pallas.2} parent=1 // pred_check
      _
    $region19: #{objectcloud_encoder_pallas.2} parent=1 // pred_check_branch
      %26 = sbr.rel (0) target = $region21
    $region20: #{objectcloud_encoder_pallas.2} parent=1 // pred_region
      _
    $region21: #{objectcloud_encoder_pallas.2} parent=1 // pred_fallthru
      _
    // Predicated region
    $region22: #{objectcloud_encoder_pallas.2} parent=1 // pred_check
      _
    $region23: #{objectcloud_encoder_pallas.2} parent=1 // pred_check_branch
      %28 = sbr.rel (0) target = $region25
    $region24: #{objectcloud_encoder_pallas.2} parent=1 // pred_region
      _
    $region25: #{objectcloud_encoder_pallas.2} parent=1 // pred_fallthru
      _
    // Predicated region
    $region26: #{objectcloud_encoder_pallas.2} parent=1 // pred_check
      _
    $region27: #{objectcloud_encoder_pallas.2} parent=1 // pred_check_branch
      %30 = sbr.rel (0) target = $region29
    $region28: #{objectcloud_encoder_pallas.2} parent=1 // pred_region
      _
    $region29: #{objectcloud_encoder_pallas.2} parent=1 // pred_fallthru
      _
    // Predicated region
    $region30: #{objectcloud_encoder_pallas.2} parent=1 // pred_check
      _
    $region31: #{objectcloud_encoder_pallas.2} parent=1 // pred_check_branch
      %32 = sbr.rel (0) target = $region33
    $region32: #{objectcloud_encoder_pallas.2} parent=1 // pred_region
      _
    $region33: #{objectcloud_encoder_pallas.2} parent=1 // pred_fallthru
      _
    // Predicated region
    $region34: #{objectcloud_encoder_pallas.2} parent=1 // pred_check
      _
    $region35: #{objectcloud_encoder_pallas.2} parent=1 // pred_check_branch
      %34 = sbr.rel (0) target = $region37
    $region36: #{objectcloud_encoder_pallas.2} parent=1 // pred_region
      _
    $region37: #{objectcloud_encoder_pallas.2} parent=1 // pred_fallthru
      _
    // Predicated region
    $region38: #{objectcloud_encoder_pallas.2} parent=1 // pred_check
      _
    $region39: #{objectcloud_encoder_pallas.2} parent=1 // pred_check_branch
      %36 = sbr.rel (0) target = $region41
    $region40: #{objectcloud_encoder_pallas.2} parent=1 // pred_region
      %38 = vsyncadd [#allocation3], 0
      %s39 = sshll.u32 %s9, 4
      %s40 = int_to_ptr.hbm [resolvable:$true] %s39
      %s41 = sshll.u32 [#allocation2], 4
      %s42 = int_to_ptr.vmem [resolvable:$true] %s41
      %47 = dma.hbm_to_vmem [thread:$0]  %s40, 65536, %s42, [#allocation3], 1024, 1024, 64
    $region41: #{objectcloud_encoder_pallas.2} parent=1 // pred_fallthru
      _
    // Predicated region
    $region42: #{objectcloud_encoder_pallas.2} parent=1 // pred_check
      _
    $region43: #{objectcloud_encoder_pallas.2} parent=1 // pred_check_branch
      %49 = sbr.rel (0) target = $region45
    $region44: #{objectcloud_encoder_pallas.2} parent=1 // pred_region
      _
    $region45: #{objectcloud_encoder_pallas.2} parent=1 // pred_fallthru
      _
    // Predicated region
    $region46: #{objectcloud_encoder_pallas.2} parent=1 // pred_check
      _
    $region47: #{objectcloud_encoder_pallas.2} parent=1 // pred_check_branch
      %51 = sbr.rel (0) target = $region49
    $region48: #{objectcloud_encoder_pallas.2} parent=1 // pred_region
      %53 = dma.done [#allocation3], 65536
    $region49: #{objectcloud_encoder_pallas.2} parent=1 // pred_fallthru
      _
    %v54 = vld [vmem:[%s0] sm:$0xff]
    %v55 = vld [vmem:[%s0 + $0x8] sm:$0xff]
    %v56 = vld [vmem:[%s0 + $0x10] sm:$0xff]
    %v57 = vld [vmem:[%s0 + $0x18] sm:$0xff]
    %v58 = vld [vmem:[%s1] sm:$0x3]
    %v59 = vrot.slane %v58, 1
    %v60 = vlaneseq
    %v61 = vshrl.u32 %v60, 7
    %v62 = vadd.s32 %v61, 8
    %v63 = vperm.slane %v58, 0
    %v64 = vperm.slane %v59, 0
    %vm65 = vcmp.lt.s32.totalorder %v61, %v63
    %vm66 = vcmp.lt.s32.totalorder %v62, %v63
    %vm67 = vcmp.lt.s32.totalorder %v61, %v64
    %vm68 = vcmp.lt.s32.totalorder %v62, %v64
    %vm69 = vcmp.gt.s32.totalorder %v58, 0
    %v70 = vld [vmem:[%s2] sm:$0xf]
    %v71 = vld [vmem:[%s3] sm:$0x1]
    %v73 = vperm.slane %v71, 0
    %vm75 = vcmask 31744
    %v77 = vsel %vm75, %v54, 0
    %v80 = vsel %vm75, %v55, 0
    %v83 = vsel %vm75, %v56, 0
    %v86 = vsel %vm75, %v57, 0
    %vm88 = vcmask 1043456
    %v90 = vsel %vm88, %v70, 0
    %92 = vmatpush.msra.mxu0 0.0
    %93 = vmatpush.msra.mxu0 0.0
    %94 = vmatpush.msra.mxu0 0.0
    %95 = vmatpush.msra.mxu0 0.0
    %96 = vmatpush.msra.mxu0 0.0
    %97 = vmatpush.msra.mxu0 0.0
    %98 = vmatpush.msra.mxu0 0.0
    %99 = vmatpush.msra.mxu0 0.0
    %100 = vmatpush.msra.mxu0 0.0
    %101 = vmatpush.msra.mxu0 0.0
    %102 = vmatpush.msra.mxu0 0.0
    %103 = vmatpush.msra.mxu0 0.0
    %104 = vmatpush.msra.mxu0 0.0
    %105 = vmatpush.msra.mxu0 0.0
    %106 = vmatpush.msra.mxu0 0.0
    %107 = vmatpush.msra.mxu0 %v90
    %108 = vmatmul.f32.gmra.mxu0 %v77
    %v109 = vpop.f32.mrf.mxu0
    %v110 = vadd.f32 %v73, %v109
    %111 = vmatmul.f32.gmra.mxu0 %v80
    %v112 = vpop.f32.mrf.mxu0
    %v113 = vadd.f32 %v73, %v112
    %114 = vmatmul.f32.gmra.mxu0 %v83
    %v115 = vpop.f32.mrf.mxu0
    %v116 = vadd.f32 %v73, %v115
    %117 = vmatmul.f32.gmra.mxu0 %v86
    %v118 = vpop.f32.mrf.mxu0
    %v119 = vadd.f32 %v73, %v118
    %120 = vdwg.mxu0
    %vm121 = vcmp.gt.f32.partialorder %v110, 0.0
    %vm122 = vcmp.gt.f32.partialorder %v113, 0.0
    %vm123 = vcmp.gt.f32.partialorder %v116, 0.0
    %vm124 = vcmp.gt.f32.partialorder %v119, 0.0
    %v125 = vmul.f32 %v110, 0.1
    %v126 = vmul.f32 %v113, 0.1
    %v127 = vmul.f32 %v116, 0.1
    %v128 = vmul.f32 %v119, 0.1
    %v129 = vsel %vm121, %v110, %v125
    %v130 = vsel %vm122, %v113, %v126
    %v131 = vsel %vm123, %v116, %v127
    %v132 = vsel %vm124, %v119, %v128
    %v133 = vld [vmem:[%s4] sm:$0xff]
    %v134 = vld [vmem:[%s4 + $0x8] sm:$0xff]
    %v135 = vld [vmem:[%s4 + $0x10] sm:$0xff]
    %v136 = vld [vmem:[%s4 + $0x18] sm:$0xff]
    %v137 = vld [vmem:[%s4 + $0x20] sm:$0xff]
    %v138 = vld [vmem:[%s4 + $0x28] sm:$0xff]
    %v139 = vld [vmem:[%s4 + $0x30] sm:$0xff]
    %v140 = vld [vmem:[%s4 + $0x38] sm:$0xff]
    %v141 = vld [vmem:[%s4 + $0x40] sm:$0xff]
    %v142 = vld [vmem:[%s4 + $0x48] sm:$0xff]
    %v143 = vld [vmem:[%s4 + $0x50] sm:$0xff]
    %v144 = vld [vmem:[%s4 + $0x58] sm:$0xff]
    %v145 = vld [vmem:[%s4 + $0x60] sm:$0xff]
    %v146 = vld [vmem:[%s4 + $0x68] sm:$0xff]
    %v147 = vld [vmem:[%s4 + $0x70] sm:$0xff]
    %v148 = vld [vmem:[%s4 + $0x78] sm:$0xff]
    %v149 = vld [vmem:[%s4 + $0x80] sm:$0xff]
    %v150 = vld [vmem:[%s4 + $0x88] sm:$0xff]
    %v151 = vld [vmem:[%s4 + $0x90] sm:$0xff]
    %v152 = vld [vmem:[%s4 + $0x98] sm:$0xff]
    %v153 = vld [vmem:[%s4 + $0xa0] sm:$0xff]
    %v154 = vld [vmem:[%s4 + $0xa8] sm:$0xff]
    %v155 = vld [vmem:[%s4 + $0xb0] sm:$0xff]
    %v156 = vld [vmem:[%s4 + $0xb8] sm:$0xff]
    %v157 = vld [vmem:[%s4 + $0xc0] sm:$0xff]
    %v158 = vld [vmem:[%s4 + $0xc8] sm:$0xff]
    %v159 = vld [vmem:[%s4 + $0xd0] sm:$0xff]
    %v160 = vld [vmem:[%s4 + $0xd8] sm:$0xff]
    %v161 = vld [vmem:[%s4 + $0xe0] sm:$0xff]
    %v162 = vld [vmem:[%s4 + $0xe8] sm:$0xff]
    %v163 = vld [vmem:[%s4 + $0xf0] sm:$0xff]
    %v164 = vld [vmem:[%s4 + $0xf8] sm:$0xff]
    %v165 = vld [vmem:[%s5] sm:$0x3]
    %v167 = vperm.slane %v165, 0
    %v168 = vperm.slane %v165, 1
    %171 = vmatpush.msra.mxu0 %v163
    %172 = vmatpush.msra.mxu0 %v161
    %173 = vmatpush.msra.mxu0 %v159
    %174 = vmatpush.msra.mxu0 %v157
    %175 = vmatpush.msra.mxu0 %v155
    %176 = vmatpush.msra.mxu0 %v153
    %177 = vmatpush.msra.mxu0 %v151
    %178 = vmatpush.msra.mxu0 %v149
    %179 = vmatpush.msra.mxu0 %v147
    %180 = vmatpush.msra.mxu0 %v145
    %181 = vmatpush.msra.mxu0 %v143
    %182 = vmatpush.msra.mxu0 %v141
    %183 = vmatpush.msra.mxu0 %v139
    %184 = vmatpush.msra.mxu0 %v137
    %185 = vmatpush.msra.mxu0 %v135
    %186 = vmatpush.msra.mxu0 %v133
    %187 = vmatmul.f32.gmra.mxu0 %v129
    %v188 = vpop.f32.mrf.mxu0
    %v189 = vadd.f32 %v167, %v188
    %190 = vmatmul.f32.gmra.mxu0 %v130
    %v191 = vpop.f32.mrf.mxu0
    %v192 = vadd.f32 %v167, %v191
    %193 = vmatmul.f32.gmra.mxu0 %v131
    %v194 = vpop.f32.mrf.mxu0
    %v195 = vadd.f32 %v167, %v194
    %196 = vmatmul.f32.gmra.mxu0 %v132
    %v197 = vpop.f32.mrf.mxu0
    %v198 = vadd.f32 %v167, %v197
    %199 = vdwg.mxu0
    %200 = vmatpush.msra.mxu0 %v164
    %201 = vmatpush.msra.mxu0 %v162
    %202 = vmatpush.msra.mxu0 %v160
    %203 = vmatpush.msra.mxu0 %v158
    %204 = vmatpush.msra.mxu0 %v156
    %205 = vmatpush.msra.mxu0 %v154
    %206 = vmatpush.msra.mxu0 %v152
    %207 = vmatpush.msra.mxu0 %v150
    %208 = vmatpush.msra.mxu0 %v148
    %209 = vmatpush.msra.mxu0 %v146
    %210 = vmatpush.msra.mxu0 %v144
    %211 = vmatpush.msra.mxu0 %v142
    %212 = vmatpush.msra.mxu0 %v140
    %213 = vmatpush.msra.mxu0 %v138
    %214 = vmatpush.msra.mxu0 %v136
    %215 = vmatpush.msra.mxu0 %v134
    %216 = vmatmul.f32.gmra.mxu0 %v129
    %v217 = vpop.f32.mrf.mxu0
    %v218 = vadd.f32 %v168, %v217
    %219 = vmatmul.f32.gmra.mxu0 %v130
    %v220 = vpop.f32.mrf.mxu0
    %v221 = vadd.f32 %v168, %v220
    %222 = vmatmul.f32.gmra.mxu0 %v131
    %v223 = vpop.f32.mrf.mxu0
    %v224 = vadd.f32 %v168, %v223
    %225 = vmatmul.f32.gmra.mxu0 %v132
    %v226 = vpop.f32.mrf.mxu0
    %v227 = vadd.f32 %v168, %v226
    %228 = vdwg.mxu0
    %vm229 = vcmp.gt.f32.partialorder %v189, 0.0
    %vm230 = vcmp.gt.f32.partialorder %v218, 0.0
    %vm231 = vcmp.gt.f32.partialorder %v192, 0.0
    %vm232 = vcmp.gt.f32.partialorder %v221, 0.0
    %vm233 = vcmp.gt.f32.partialorder %v195, 0.0
    %vm234 = vcmp.gt.f32.partialorder %v224, 0.0
    %vm235 = vcmp.gt.f32.partialorder %v198, 0.0
    %vm236 = vcmp.gt.f32.partialorder %v227, 0.0
    %v237 = vmul.f32 %v189, 0.1
    %v238 = vmul.f32 %v218, 0.1
    %v239 = vmul.f32 %v192, 0.1
    %v240 = vmul.f32 %v221, 0.1
    %v241 = vmul.f32 %v195, 0.1
    %v242 = vmul.f32 %v224, 0.1
    %v243 = vmul.f32 %v198, 0.1
    %v244 = vmul.f32 %v227, 0.1
    %v245 = vsel %vm229, %v189, %v237
    %v246 = vsel %vm230, %v218, %v238
    %v247 = vsel %vm231, %v192, %v239
    %v248 = vsel %vm232, %v221, %v240
    %v249 = vsel %vm233, %v195, %v241
    %v250 = vsel %vm234, %v224, %v242
    %v251 = vsel %vm235, %v198, %v243
    %v252 = vsel %vm236, %v227, %v244
    %v253 = vsel %vm65, 1, 0
    %v254 = vsel %vm66, 1, 0
    %v255 = vsel %vm67, 1, 0
    %v256 = vsel %vm68, 1, 0
    %257 = vset.pattern.permute.xlu0 0
    %258 = vperm.xlu0 %257, %v253
    %v259 = vpop.permute.xlu0 %258
    %260 = vset.pattern.permute.xlu0 0
    %261 = vperm.xlu0 %260, %v254
    %v262 = vpop.permute.xlu0 %261
    %263 = vset.pattern.permute.xlu0 0
    %264 = vperm.xlu0 %263, %v255
    %v265 = vpop.permute.xlu0 %264
    %266 = vset.pattern.permute.xlu0 0
    %267 = vperm.xlu0 %266, %v256
    %v268 = vpop.permute.xlu0 %267
    %vm269 = vcmp.eq.s32.totalorder %v259, 1
    %vm270 = vcmp.eq.s32.totalorder %v262, 1
    %vm271 = vcmp.eq.s32.totalorder %v265, 1
    %vm272 = vcmp.eq.s32.totalorder %v268, 1
    %v273 = vsel %vm269, %v245, -3e+38
    %v274 = vsel %vm269, %v246, -3e+38
    %v275 = vsel %vm270, %v247, -3e+38
    %v276 = vsel %vm270, %v248, -3e+38
    %v277 = vsel %vm271, %v249, -3e+38
    %v278 = vsel %vm271, %v250, -3e+38
    %v279 = vsel %vm272, %v251, -3e+38
    %v280 = vsel %vm272, %v252, -3e+38
    %v281 = vmax.f32 %v273, %v275
    %v282 = vrot.slane %v281, 4
    %v283 = vmax.f32 %v281, %v282
    %v284 = vrot.slane %v283, 2
    %v285 = vmax.f32 %v283, %v284
    %v286 = vrot.slane %v285, 1
    %v287 = vmax.f32 %v285, %v286
    %v288 = vmax.f32 %v274, %v276
    %v289 = vrot.slane %v288, 4
    %v290 = vmax.f32 %v288, %v289
    %v291 = vrot.slane %v290, 2
    %v292 = vmax.f32 %v290, %v291
    %v293 = vrot.slane %v292, 1
    %v294 = vmax.f32 %v292, %v293
    %v295 = vmax.f32 %v277, %v279
    %v296 = vrot.slane %v295, 4
    %v297 = vmax.f32 %v295, %v296
    %v298 = vrot.slane %v297, 2
    %v299 = vmax.f32 %v297, %v298
    %v300 = vrot.slane %v299, 1
    %v301 = vmax.f32 %v299, %v300
    %v302 = vmax.f32 %v278, %v280
    %v303 = vrot.slane %v302, 4
    %v304 = vmax.f32 %v302, %v303
    %v305 = vrot.slane %v304, 2
    %v306 = vmax.f32 %v304, %v305
    %v307 = vrot.slane %v306, 1
    %v308 = vmax.f32 %v306, %v307
    %v309 = vsel %vm69, 1, 0
    %310 = vset.pattern.permute.xlu0 0
    %311 = vperm.xlu0 %310, %v309
    %v312 = vpop.permute.xlu0 %311
    %vm313 = vcmp.eq.s32.totalorder %v312, 1
    %vm318 = vcmask 1041409
    %v319 = vsel %vm318, %v301, %v287
    %v320 = vsel %vm318, %v308, %v294
    %v323 = vsel %vm313, %v319, 0.0
    %v324 = vsel %vm313, %v320, 0.0
    %v325 = vld [vmem:[%s6] sm:$0xff]
    %v326 = vld [vmem:[%s6 + $0x8] sm:$0xff]
    %v327 = vld [vmem:[%s6 + $0x10] sm:$0xff]
    %v328 = vld [vmem:[%s6 + $0x18] sm:$0xff]
    %v329 = vld [vmem:[%s6 + $0x20] sm:$0xff]
    %v330 = vld [vmem:[%s6 + $0x28] sm:$0xff]
    %v331 = vld [vmem:[%s6 + $0x30] sm:$0xff]
    %v332 = vld [vmem:[%s6 + $0x38] sm:$0xff]
    %v333 = vld [vmem:[%s6 + $0x40] sm:$0xff]
    %v334 = vld [vmem:[%s6 + $0x48] sm:$0xff]
    %v335 = vld [vmem:[%s6 + $0x50] sm:$0xff]
    %v336 = vld [vmem:[%s6 + $0x58] sm:$0xff]
    %v337 = vld [vmem:[%s6 + $0x60] sm:$0xff]
    %v338 = vld [vmem:[%s6 + $0x68] sm:$0xff]
    %v339 = vld [vmem:[%s6 + $0x70] sm:$0xff]
    %v340 = vld [vmem:[%s6 + $0x78] sm:$0xff]
    %v341 = vld [vmem:[%s6 + $0x80] sm:$0xff]
    %v342 = vld [vmem:[%s6 + $0x88] sm:$0xff]
    %v343 = vld [vmem:[%s6 + $0x90] sm:$0xff]
    %v344 = vld [vmem:[%s6 + $0x98] sm:$0xff]
    %v345 = vld [vmem:[%s6 + $0xa0] sm:$0xff]
    %v346 = vld [vmem:[%s6 + $0xa8] sm:$0xff]
    %v347 = vld [vmem:[%s6 + $0xb0] sm:$0xff]
    %v348 = vld [vmem:[%s6 + $0xb8] sm:$0xff]
    %v349 = vld [vmem:[%s6 + $0xc0] sm:$0xff]
    %v350 = vld [vmem:[%s6 + $0xc8] sm:$0xff]
    %v351 = vld [vmem:[%s6 + $0xd0] sm:$0xff]
    %v352 = vld [vmem:[%s6 + $0xd8] sm:$0xff]
    %v353 = vld [vmem:[%s6 + $0xe0] sm:$0xff]
    %v354 = vld [vmem:[%s6 + $0xe8] sm:$0xff]
    %v355 = vld [vmem:[%s6 + $0xf0] sm:$0xff]
    %v356 = vld [vmem:[%s6 + $0xf8] sm:$0xff]
    %v357 = vld [vmem:[%s6 + $0x100] sm:$0xff]
    %v358 = vld [vmem:[%s6 + $0x108] sm:$0xff]
    %v359 = vld [vmem:[%s6 + $0x110] sm:$0xff]
    %v360 = vld [vmem:[%s6 + $0x118] sm:$0xff]
    %v361 = vld [vmem:[%s6 + $0x120] sm:$0xff]
    %v362 = vld [vmem:[%s6 + $0x128] sm:$0xff]
    %v363 = vld [vmem:[%s6 + $0x130] sm:$0xff]
    %v364 = vld [vmem:[%s6 + $0x138] sm:$0xff]
    %v365 = vld [vmem:[%s6 + $0x140] sm:$0xff]
    %v366 = vld [vmem:[%s6 + $0x148] sm:$0xff]
    %v367 = vld [vmem:[%s6 + $0x150] sm:$0xff]
    %v368 = vld [vmem:[%s6 + $0x158] sm:$0xff]
    %v369 = vld [vmem:[%s6 + $0x160] sm:$0xff]
    %v370 = vld [vmem:[%s6 + $0x168] sm:$0xff]
    %v371 = vld [vmem:[%s6 + $0x170] sm:$0xff]
    %v372 = vld [vmem:[%s6 + $0x178] sm:$0xff]
    %v373 = vld [vmem:[%s6 + $0x180] sm:$0xff]
    %v374 = vld [vmem:[%s6 + $0x188] sm:$0xff]
    %v375 = vld [vmem:[%s6 + $0x190] sm:$0xff]
    %v376 = vld [vmem:[%s6 + $0x198] sm:$0xff]
    %v377 = vld [vmem:[%s6 + $0x1a0] sm:$0xff]
    %v378 = vld [vmem:[%s6 + $0x1a8] sm:$0xff]
    %v379 = vld [vmem:[%s6 + $0x1b0] sm:$0xff]
    %v380 = vld [vmem:[%s6 + $0x1b8] sm:$0xff]
    %v381 = vld [vmem:[%s6 + $0x1c0] sm:$0xff]
    %v382 = vld [vmem:[%s6 + $0x1c8] sm:$0xff]
    %v383 = vld [vmem:[%s6 + $0x1d0] sm:$0xff]
    %v384 = vld [vmem:[%s6 + $0x1d8] sm:$0xff]
    %v385 = vld [vmem:[%s6 + $0x1e0] sm:$0xff]
    %v386 = vld [vmem:[%s6 + $0x1e8] sm:$0xff]
    %v387 = vld [vmem:[%s6 + $0x1f0] sm:$0xff]
    %v388 = vld [vmem:[%s6 + $0x1f8] sm:$0xff]
    %v389 = vld [vmem:[%s6 + $0x200] sm:$0xff]
    %v390 = vld [vmem:[%s6 + $0x208] sm:$0xff]
    %v391 = vld [vmem:[%s6 + $0x210] sm:$0xff]
    %v392 = vld [vmem:[%s6 + $0x218] sm:$0xff]
    %v393 = vld [vmem:[%s6 + $0x220] sm:$0xff]
    %v394 = vld [vmem:[%s6 + $0x228] sm:$0xff]
    %v395 = vld [vmem:[%s6 + $0x230] sm:$0xff]
    %v396 = vld [vmem:[%s6 + $0x238] sm:$0xff]
    %v397 = vld [vmem:[%s6 + $0x240] sm:$0xff]
    %v398 = vld [vmem:[%s6 + $0x248] sm:$0xff]
    %v399 = vld [vmem:[%s6 + $0x250] sm:$0xff]
    %v400 = vld [vmem:[%s6 + $0x258] sm:$0xff]
    %v401 = vld [vmem:[%s6 + $0x260] sm:$0xff]
    %v402 = vld [vmem:[%s6 + $0x268] sm:$0xff]
    %v403 = vld [vmem:[%s6 + $0x270] sm:$0xff]
    %v404 = vld [vmem:[%s6 + $0x278] sm:$0xff]
    %v405 = vld [vmem:[%s6 + $0x280] sm:$0xff]
    %v406 = vld [vmem:[%s6 + $0x288] sm:$0xff]
    %v407 = vld [vmem:[%s6 + $0x290] sm:$0xff]
    %v408 = vld [vmem:[%s6 + $0x298] sm:$0xff]
    %v409 = vld [vmem:[%s6 + $0x2a0] sm:$0xff]
    %v410 = vld [vmem:[%s6 + $0x2a8] sm:$0xff]
    %v411 = vld [vmem:[%s6 + $0x2b0] sm:$0xff]
    %v412 = vld [vmem:[%s6 + $0x2b8] sm:$0xff]
    %v413 = vld [vmem:[%s6 + $0x2c0] sm:$0xff]
    %v414 = vld [vmem:[%s6 + $0x2c8] sm:$0xff]
    %v415 = vld [vmem:[%s6 + $0x2d0] sm:$0xff]
    %v416 = vld [vmem:[%s6 + $0x2d8] sm:$0xff]
    %v417 = vld [vmem:[%s6 + $0x2e0] sm:$0xff]
    %v418 = vld [vmem:[%s6 + $0x2e8] sm:$0xff]
    %v419 = vld [vmem:[%s6 + $0x2f0] sm:$0xff]
    %v420 = vld [vmem:[%s6 + $0x2f8] sm:$0xff]
    %v421 = vld [vmem:[%s6 + $0x300] sm:$0xff]
    %v422 = vld [vmem:[%s6 + $0x308] sm:$0xff]
    %v423 = vld [vmem:[%s6 + $0x310] sm:$0xff]
    %v424 = vld [vmem:[%s6 + $0x318] sm:$0xff]
    %v425 = vld [vmem:[%s6 + $0x320] sm:$0xff]
    %v426 = vld [vmem:[%s6 + $0x328] sm:$0xff]
    %v427 = vld [vmem:[%s6 + $0x330] sm:$0xff]
    %v428 = vld [vmem:[%s6 + $0x338] sm:$0xff]
    %v429 = vld [vmem:[%s6 + $0x340] sm:$0xff]
    %v430 = vld [vmem:[%s6 + $0x348] sm:$0xff]
    %v431 = vld [vmem:[%s6 + $0x350] sm:$0xff]
    %v432 = vld [vmem:[%s6 + $0x358] sm:$0xff]
    %v433 = vld [vmem:[%s6 + $0x360] sm:$0xff]
    %v434 = vld [vmem:[%s6 + $0x368] sm:$0xff]
    %v435 = vld [vmem:[%s6 + $0x370] sm:$0xff]
    %v436 = vld [vmem:[%s6 + $0x378] sm:$0xff]
    %v437 = vld [vmem:[%s6 + $0x380] sm:$0xff]
    %v438 = vld [vmem:[%s6 + $0x388] sm:$0xff]
    %v439 = vld [vmem:[%s6 + $0x390] sm:$0xff]
    %v440 = vld [vmem:[%s6 + $0x398] sm:$0xff]
    %v441 = vld [vmem:[%s6 + $0x3a0] sm:$0xff]
    %v442 = vld [vmem:[%s6 + $0x3a8] sm:$0xff]
    %v443 = vld [vmem:[%s6 + $0x3b0] sm:$0xff]
    %v444 = vld [vmem:[%s6 + $0x3b8] sm:$0xff]
    %v445 = vld [vmem:[%s6 + $0x3c0] sm:$0xff]
    %v446 = vld [vmem:[%s6 + $0x3c8] sm:$0xff]
    %v447 = vld [vmem:[%s6 + $0x3d0] sm:$0xff]
    %v448 = vld [vmem:[%s6 + $0x3d8] sm:$0xff]
    %v449 = vld [vmem:[%s6 + $0x3e0] sm:$0xff]
    %v450 = vld [vmem:[%s6 + $0x3e8] sm:$0xff]
    %v451 = vld [vmem:[%s6 + $0x3f0] sm:$0xff]
    %v452 = vld [vmem:[%s6 + $0x3f8] sm:$0xff]
    %453 = vmatpush.msra.mxu0 %v385
    %454 = vmatpush.msra.mxu0 %v381
    %455 = vmatpush.msra.mxu0 %v377
    %456 = vmatpush.msra.mxu0 %v373
    %457 = vmatpush.msra.mxu0 %v369
    %458 = vmatpush.msra.mxu0 %v365
    %459 = vmatpush.msra.mxu0 %v361
    %460 = vmatpush.msra.mxu0 %v357
    %461 = vmatpush.msra.mxu0 %v353
    %462 = vmatpush.msra.mxu0 %v349
    %463 = vmatpush.msra.mxu0 %v345
    %464 = vmatpush.msra.mxu0 %v341
    %465 = vmatpush.msra.mxu0 %v337
    %466 = vmatpush.msra.mxu0 %v333
    %467 = vmatpush.msra.mxu0 %v329
    %468 = vmatpush.msra.mxu0 %v325
    %469 = vmatmul.f32.gmra.mxu0 %v245
    %v470 = vpop.f32.mrf.mxu0
    %v471 = vadd.f32 0.0, %v470
    %472 = vmatmul.f32.gmra.mxu0 %v247
    %v473 = vpop.f32.mrf.mxu0
    %v474 = vadd.f32 0.0, %v473
    %475 = vmatmul.f32.gmra.mxu0 %v249
    %v476 = vpop.f32.mrf.mxu0
    %v477 = vadd.f32 0.0, %v476
    %478 = vmatmul.f32.gmra.mxu0 %v251
    %v479 = vpop.f32.mrf.mxu0
    %v480 = vadd.f32 0.0, %v479
    %481 = vdwg.mxu0
    %482 = vmatpush.msra.mxu0 %v449
    %483 = vmatpush.msra.mxu0 %v445
    %484 = vmatpush.msra.mxu0 %v441
    %485 = vmatpush.msra.mxu0 %v437
    %486 = vmatpush.msra.mxu0 %v433
    %487 = vmatpush.msra.mxu0 %v429
    %488 = vmatpush.msra.mxu0 %v425
    %489 = vmatpush.msra.mxu0 %v421
    %490 = vmatpush.msra.mxu0 %v417
    %491 = vmatpush.msra.mxu0 %v413
    %492 = vmatpush.msra.mxu0 %v409
    %493 = vmatpush.msra.mxu0 %v405
    %494 = vmatpush.msra.mxu0 %v401
    %495 = vmatpush.msra.mxu0 %v397
    %496 = vmatpush.msra.mxu0 %v393
    %497 = vmatpush.msra.mxu0 %v389
    %498 = vmatmul.f32.gmra.mxu0 %v246
    %v499 = vpop.f32.mrf.mxu0
    %v500 = vadd.f32 %v471, %v499
    %501 = vmatmul.f32.gmra.mxu0 %v248
    %v502 = vpop.f32.mrf.mxu0
    %v503 = vadd.f32 %v474, %v502
    %504 = vmatmul.f32.gmra.mxu0 %v250
    %v505 = vpop.f32.mrf.mxu0
    %v506 = vadd.f32 %v477, %v505
    %507 = vmatmul.f32.gmra.mxu0 %v252
    %v508 = vpop.f32.mrf.mxu0
    %v509 = vadd.f32 %v480, %v508
    %510 = vdwg.mxu0
    %511 = vmatpush.msra.mxu0 %v386
    %512 = vmatpush.msra.mxu0 %v382
    %513 = vmatpush.msra.mxu0 %v378
    %514 = vmatpush.msra.mxu0 %v374
    %515 = vmatpush.msra.mxu0 %v370
    %516 = vmatpush.msra.mxu0 %v366
    %517 = vmatpush.msra.mxu0 %v362
    %518 = vmatpush.msra.mxu0 %v358
    %519 = vmatpush.msra.mxu0 %v354
    %520 = vmatpush.msra.mxu0 %v350
    %521 = vmatpush.msra.mxu0 %v346
    %522 = vmatpush.msra.mxu0 %v342
    %523 = vmatpush.msra.mxu0 %v338
    %524 = vmatpush.msra.mxu0 %v334
    %525 = vmatpush.msra.mxu0 %v330
    %526 = vmatpush.msra.mxu0 %v326
    %527 = vmatmul.f32.gmra.mxu0 %v245
    %v528 = vpop.f32.mrf.mxu0
    %v529 = vadd.f32 0.0, %v528
    %530 = vmatmul.f32.gmra.mxu0 %v247
    %v531 = vpop.f32.mrf.mxu0
    %v532 = vadd.f32 0.0, %v531
    %533 = vmatmul.f32.gmra.mxu0 %v249
    %v534 = vpop.f32.mrf.mxu0
    %v535 = vadd.f32 0.0, %v534
    %536 = vmatmul.f32.gmra.mxu0 %v251
    %v537 = vpop.f32.mrf.mxu0
    %v538 = vadd.f32 0.0, %v537
    %539 = vdwg.mxu0
    %540 = vmatpush.msra.mxu0 %v450
    %541 = vmatpush.msra.mxu0 %v446
    %542 = vmatpush.msra.mxu0 %v442
    %543 = vmatpush.msra.mxu0 %v438
    %544 = vmatpush.msra.mxu0 %v434
    %545 = vmatpush.msra.mxu0 %v430
    %546 = vmatpush.msra.mxu0 %v426
    %547 = vmatpush.msra.mxu0 %v422
    %548 = vmatpush.msra.mxu0 %v418
    %549 = vmatpush.msra.mxu0 %v414
    %550 = vmatpush.msra.mxu0 %v410
    %551 = vmatpush.msra.mxu0 %v406
    %552 = vmatpush.msra.mxu0 %v402
    %553 = vmatpush.msra.mxu0 %v398
    %554 = vmatpush.msra.mxu0 %v394
    %555 = vmatpush.msra.mxu0 %v390
    %556 = vmatmul.f32.gmra.mxu0 %v246
    %v557 = vpop.f32.mrf.mxu0
    %v558 = vadd.f32 %v529, %v557
    %559 = vmatmul.f32.gmra.mxu0 %v248
    %v560 = vpop.f32.mrf.mxu0
    %v561 = vadd.f32 %v532, %v560
    %562 = vmatmul.f32.gmra.mxu0 %v250
    %v563 = vpop.f32.mrf.mxu0
    %v564 = vadd.f32 %v535, %v563
    %565 = vmatmul.f32.gmra.mxu0 %v252
    %v566 = vpop.f32.mrf.mxu0
    %v567 = vadd.f32 %v538, %v566
    %568 = vdwg.mxu0
    %569 = vmatpush.msra.mxu0 %v387
    %570 = vmatpush.msra.mxu0 %v383
    %571 = vmatpush.msra.mxu0 %v379
    %572 = vmatpush.msra.mxu0 %v375
    %573 = vmatpush.msra.mxu0 %v371
    %574 = vmatpush.msra.mxu0 %v367
    %575 = vmatpush.msra.mxu0 %v363
    %576 = vmatpush.msra.mxu0 %v359
    %577 = vmatpush.msra.mxu0 %v355
    %578 = vmatpush.msra.mxu0 %v351
    %579 = vmatpush.msra.mxu0 %v347
    %580 = vmatpush.msra.mxu0 %v343
    %581 = vmatpush.msra.mxu0 %v339
    %582 = vmatpush.msra.mxu0 %v335
    %583 = vmatpush.msra.mxu0 %v331
    %584 = vmatpush.msra.mxu0 %v327
    %585 = vmatmul.f32.gmra.mxu0 %v245
    %v586 = vpop.f32.mrf.mxu0
    %v587 = vadd.f32 0.0, %v586
    %588 = vmatmul.f32.gmra.mxu0 %v247
    %v589 = vpop.f32.mrf.mxu0
    %v590 = vadd.f32 0.0, %v589
    %591 = vmatmul.f32.gmra.mxu0 %v249
    %v592 = vpop.f32.mrf.mxu0
    %v593 = vadd.f32 0.0, %v592
    %594 = vmatmul.f32.gmra.mxu0 %v251
    %v595 = vpop.f32.mrf.mxu0
    %v596 = vadd.f32 0.0, %v595
    %597 = vdwg.mxu0
    %598 = vmatpush.msra.mxu0 %v451
    %599 = vmatpush.msra.mxu0 %v447
    %600 = vmatpush.msra.mxu0 %v443
    %601 = vmatpush.msra.mxu0 %v439
    %602 = vmatpush.msra.mxu0 %v435
    %603 = vmatpush.msra.mxu0 %v431
    %604 = vmatpush.msra.mxu0 %v427
    %605 = vmatpush.msra.mxu0 %v423
    %606 = vmatpush.msra.mxu0 %v419
    %607 = vmatpush.msra.mxu0 %v415
    %608 = vmatpush.msra.mxu0 %v411
    %609 = vmatpush.msra.mxu0 %v407
    %610 = vmatpush.msra.mxu0 %v403
    %611 = vmatpush.msra.mxu0 %v399
    %612 = vmatpush.msra.mxu0 %v395
    %613 = vmatpush.msra.mxu0 %v391
    %614 = vmatmul.f32.gmra.mxu0 %v246
    %v615 = vpop.f32.mrf.mxu0
    %v616 = vadd.f32 %v587, %v615
    %617 = vmatmul.f32.gmra.mxu0 %v248
    %v618 = vpop.f32.mrf.mxu0
    %v619 = vadd.f32 %v590, %v618
    %620 = vmatmul.f32.gmra.mxu0 %v250
    %v621 = vpop.f32.mrf.mxu0
    %v622 = vadd.f32 %v593, %v621
    %623 = vmatmul.f32.gmra.mxu0 %v252
    %v624 = vpop.f32.mrf.mxu0
    %v625 = vadd.f32 %v596, %v624
    %626 = vdwg.mxu0
    %627 = vmatpush.msra.mxu0 %v388
    %628 = vmatpush.msra.mxu0 %v384
    %629 = vmatpush.msra.mxu0 %v380
    %630 = vmatpush.msra.mxu0 %v376
    %631 = vmatpush.msra.mxu0 %v372
    %632 = vmatpush.msra.mxu0 %v368
    %633 = vmatpush.msra.mxu0 %v364
    %634 = vmatpush.msra.mxu0 %v360
    %635 = vmatpush.msra.mxu0 %v356
    %636 = vmatpush.msra.mxu0 %v352
    %637 = vmatpush.msra.mxu0 %v348
    %638 = vmatpush.msra.mxu0 %v344
    %639 = vmatpush.msra.mxu0 %v340
    %640 = vmatpush.msra.mxu0 %v336
    %641 = vmatpush.msra.mxu0 %v332
    %642 = vmatpush.msra.mxu0 %v328
    %643 = vmatmul.f32.gmra.mxu0 %v245
    %v644 = vpop.f32.mrf.mxu0
    %v645 = vadd.f32 0.0, %v644
    %646 = vmatmul.f32.gmra.mxu0 %v247
    %v647 = vpop.f32.mrf.mxu0
    %v648 = vadd.f32 0.0, %v647
    %649 = vmatmul.f32.gmra.mxu0 %v249
    %v650 = vpop.f32.mrf.mxu0
    %v651 = vadd.f32 0.0, %v650
    %652 = vmatmul.f32.gmra.mxu0 %v251
    %v653 = vpop.f32.mrf.mxu0
    %v654 = vadd.f32 0.0, %v653
    %655 = vdwg.mxu0
    %656 = vmatpush.msra.mxu0 %v452
    %657 = vmatpush.msra.mxu0 %v448
    %658 = vmatpush.msra.mxu0 %v444
    %659 = vmatpush.msra.mxu0 %v440
    %660 = vmatpush.msra.mxu0 %v436
    %661 = vmatpush.msra.mxu0 %v432
    %662 = vmatpush.msra.mxu0 %v428
    %663 = vmatpush.msra.mxu0 %v424
    %664 = vmatpush.msra.mxu0 %v420
    %665 = vmatpush.msra.mxu0 %v416
    %666 = vmatpush.msra.mxu0 %v412
    %667 = vmatpush.msra.mxu0 %v408
    %668 = vmatpush.msra.mxu0 %v404
    %669 = vmatpush.msra.mxu0 %v400
    %670 = vmatpush.msra.mxu0 %v396
    %671 = vmatpush.msra.mxu0 %v392
    %672 = vmatmul.f32.gmra.mxu0 %v246
    %v673 = vpop.f32.mrf.mxu0
    %v674 = vadd.f32 %v645, %v673
    %675 = vmatmul.f32.gmra.mxu0 %v248
    %v676 = vpop.f32.mrf.mxu0
    %v677 = vadd.f32 %v648, %v676
    %678 = vmatmul.f32.gmra.mxu0 %v250
    %v679 = vpop.f32.mrf.mxu0
    %v680 = vadd.f32 %v651, %v679
    %681 = vmatmul.f32.gmra.mxu0 %v252
    %v682 = vpop.f32.mrf.mxu0
    %v683 = vadd.f32 %v654, %v682
    %684 = vdwg.mxu0
    %v685 = vld [vmem:[%s7] sm:$0xff]
    %v686 = vld [vmem:[%s7 + $0x8] sm:$0xff]
    %v687 = vld [vmem:[%s7 + $0x10] sm:$0xff]
    %v688 = vld [vmem:[%s7 + $0x18] sm:$0xff]
    %v689 = vld [vmem:[%s7 + $0x20] sm:$0xff]
    %v690 = vld [vmem:[%s7 + $0x28] sm:$0xff]
    %v691 = vld [vmem:[%s7 + $0x30] sm:$0xff]
    %v692 = vld [vmem:[%s7 + $0x38] sm:$0xff]
    %v693 = vld [vmem:[%s7 + $0x40] sm:$0xff]
    %v694 = vld [vmem:[%s7 + $0x48] sm:$0xff]
    %v695 = vld [vmem:[%s7 + $0x50] sm:$0xff]
    %v696 = vld [vmem:[%s7 + $0x58] sm:$0xff]
    %v697 = vld [vmem:[%s7 + $0x60] sm:$0xff]
    %v698 = vld [vmem:[%s7 + $0x68] sm:$0xff]
    %v699 = vld [vmem:[%s7 + $0x70] sm:$0xff]
    %v700 = vld [vmem:[%s7 + $0x78] sm:$0xff]
    %v701 = vld [vmem:[%s7 + $0x80] sm:$0xff]
    %v702 = vld [vmem:[%s7 + $0x88] sm:$0xff]
    %v703 = vld [vmem:[%s7 + $0x90] sm:$0xff]
    %v704 = vld [vmem:[%s7 + $0x98] sm:$0xff]
    %v705 = vld [vmem:[%s7 + $0xa0] sm:$0xff]
    %v706 = vld [vmem:[%s7 + $0xa8] sm:$0xff]
    %v707 = vld [vmem:[%s7 + $0xb0] sm:$0xff]
    %v708 = vld [vmem:[%s7 + $0xb8] sm:$0xff]
    %v709 = vld [vmem:[%s7 + $0xc0] sm:$0xff]
    %v710 = vld [vmem:[%s7 + $0xc8] sm:$0xff]
    %v711 = vld [vmem:[%s7 + $0xd0] sm:$0xff]
    %v712 = vld [vmem:[%s7 + $0xd8] sm:$0xff]
    %v713 = vld [vmem:[%s7 + $0xe0] sm:$0xff]
    %v714 = vld [vmem:[%s7 + $0xe8] sm:$0xff]
    %v715 = vld [vmem:[%s7 + $0xf0] sm:$0xff]
    %v716 = vld [vmem:[%s7 + $0xf8] sm:$0xff]
    %v717 = vld [vmem:[%s7 + $0x100] sm:$0xff]
    %v718 = vld [vmem:[%s7 + $0x108] sm:$0xff]
    %v719 = vld [vmem:[%s7 + $0x110] sm:$0xff]
    %v720 = vld [vmem:[%s7 + $0x118] sm:$0xff]
    %v721 = vld [vmem:[%s7 + $0x120] sm:$0xff]
    %v722 = vld [vmem:[%s7 + $0x128] sm:$0xff]
    %v723 = vld [vmem:[%s7 + $0x130] sm:$0xff]
    %v724 = vld [vmem:[%s7 + $0x138] sm:$0xff]
    %v725 = vld [vmem:[%s7 + $0x140] sm:$0xff]
    %v726 = vld [vmem:[%s7 + $0x148] sm:$0xff]
    %v727 = vld [vmem:[%s7 + $0x150] sm:$0xff]
    %v728 = vld [vmem:[%s7 + $0x158] sm:$0xff]
    %v729 = vld [vmem:[%s7 + $0x160] sm:$0xff]
    %v730 = vld [vmem:[%s7 + $0x168] sm:$0xff]
    %v731 = vld [vmem:[%s7 + $0x170] sm:$0xff]
    %v732 = vld [vmem:[%s7 + $0x178] sm:$0xff]
    %v733 = vld [vmem:[%s7 + $0x180] sm:$0xff]
    %v734 = vld [vmem:[%s7 + $0x188] sm:$0xff]
    %v735 = vld [vmem:[%s7 + $0x190] sm:$0xff]
    %v736 = vld [vmem:[%s7 + $0x198] sm:$0xff]
    %v737 = vld [vmem:[%s7 + $0x1a0] sm:$0xff]
    %v738 = vld [vmem:[%s7 + $0x1a8] sm:$0xff]
    %v739 = vld [vmem:[%s7 + $0x1b0] sm:$0xff]
    %v740 = vld [vmem:[%s7 + $0x1b8] sm:$0xff]
    %v741 = vld [vmem:[%s7 + $0x1c0] sm:$0xff]
    %v742 = vld [vmem:[%s7 + $0x1c8] sm:$0xff]
    %v743 = vld [vmem:[%s7 + $0x1d0] sm:$0xff]
    %v744 = vld [vmem:[%s7 + $0x1d8] sm:$0xff]
    %v745 = vld [vmem:[%s7 + $0x1e0] sm:$0xff]
    %v746 = vld [vmem:[%s7 + $0x1e8] sm:$0xff]
    %v747 = vld [vmem:[%s7 + $0x1f0] sm:$0xff]
    %v748 = vld [vmem:[%s7 + $0x1f8] sm:$0xff]
    %v749 = vld [vmem:[%s7 + $0x200] sm:$0xff]
    %v750 = vld [vmem:[%s7 + $0x208] sm:$0xff]
    %v751 = vld [vmem:[%s7 + $0x210] sm:$0xff]
    %v752 = vld [vmem:[%s7 + $0x218] sm:$0xff]
    %v753 = vld [vmem:[%s7 + $0x220] sm:$0xff]
    %v754 = vld [vmem:[%s7 + $0x228] sm:$0xff]
    %v755 = vld [vmem:[%s7 + $0x230] sm:$0xff]
    %v756 = vld [vmem:[%s7 + $0x238] sm:$0xff]
    %v757 = vld [vmem:[%s7 + $0x240] sm:$0xff]
    %v758 = vld [vmem:[%s7 + $0x248] sm:$0xff]
    %v759 = vld [vmem:[%s7 + $0x250] sm:$0xff]
    %v760 = vld [vmem:[%s7 + $0x258] sm:$0xff]
    %v761 = vld [vmem:[%s7 + $0x260] sm:$0xff]
    %v762 = vld [vmem:[%s7 + $0x268] sm:$0xff]
    %v763 = vld [vmem:[%s7 + $0x270] sm:$0xff]
    %v764 = vld [vmem:[%s7 + $0x278] sm:$0xff]
    %v765 = vld [vmem:[%s7 + $0x280] sm:$0xff]
    %v766 = vld [vmem:[%s7 + $0x288] sm:$0xff]
    %v767 = vld [vmem:[%s7 + $0x290] sm:$0xff]
    %v768 = vld [vmem:[%s7 + $0x298] sm:$0xff]
    %v769 = vld [vmem:[%s7 + $0x2a0] sm:$0xff]
    %v770 = vld [vmem:[%s7 + $0x2a8] sm:$0xff]
    %v771 = vld [vmem:[%s7 + $0x2b0] sm:$0xff]
    %v772 = vld [vmem:[%s7 + $0x2b8] sm:$0xff]
    %v773 = vld [vmem:[%s7 + $0x2c0] sm:$0xff]
    %v774 = vld [vmem:[%s7 + $0x2c8] sm:$0xff]
    %v775 = vld [vmem:[%s7 + $0x2d0] sm:$0xff]
    %v776 = vld [vmem:[%s7 + $0x2d8] sm:$0xff]
    %v777 = vld [vmem:[%s7 + $0x2e0] sm:$0xff]
    %v778 = vld [vmem:[%s7 + $0x2e8] sm:$0xff]
    %v779 = vld [vmem:[%s7 + $0x2f0] sm:$0xff]
    %v780 = vld [vmem:[%s7 + $0x2f8] sm:$0xff]
    %v781 = vld [vmem:[%s7 + $0x300] sm:$0xff]
    %v782 = vld [vmem:[%s7 + $0x308] sm:$0xff]
    %v783 = vld [vmem:[%s7 + $0x310] sm:$0xff]
    %v784 = vld [vmem:[%s7 + $0x318] sm:$0xff]
    %v785 = vld [vmem:[%s7 + $0x320] sm:$0xff]
    %v786 = vld [vmem:[%s7 + $0x328] sm:$0xff]
    %v787 = vld [vmem:[%s7 + $0x330] sm:$0xff]
    %v788 = vld [vmem:[%s7 + $0x338] sm:$0xff]
    %v789 = vld [vmem:[%s7 + $0x340] sm:$0xff]
    %v790 = vld [vmem:[%s7 + $0x348] sm:$0xff]
    %v791 = vld [vmem:[%s7 + $0x350] sm:$0xff]
    %v792 = vld [vmem:[%s7 + $0x358] sm:$0xff]
    %v793 = vld [vmem:[%s7 + $0x360] sm:$0xff]
    %v794 = vld [vmem:[%s7 + $0x368] sm:$0xff]
    %v795 = vld [vmem:[%s7 + $0x370] sm:$0xff]
    %v796 = vld [vmem:[%s7 + $0x378] sm:$0xff]
    %v797 = vld [vmem:[%s7 + $0x380] sm:$0xff]
    %v798 = vld [vmem:[%s7 + $0x388] sm:$0xff]
    %v799 = vld [vmem:[%s7 + $0x390] sm:$0xff]
    %v800 = vld [vmem:[%s7 + $0x398] sm:$0xff]
    %v801 = vld [vmem:[%s7 + $0x3a0] sm:$0xff]
    %v802 = vld [vmem:[%s7 + $0x3a8] sm:$0xff]
    %v803 = vld [vmem:[%s7 + $0x3b0] sm:$0xff]
    %v804 = vld [vmem:[%s7 + $0x3b8] sm:$0xff]
    %v805 = vld [vmem:[%s7 + $0x3c0] sm:$0xff]
    %v806 = vld [vmem:[%s7 + $0x3c8] sm:$0xff]
    %v807 = vld [vmem:[%s7 + $0x3d0] sm:$0xff]
    %v808 = vld [vmem:[%s7 + $0x3d8] sm:$0xff]
    %v809 = vld [vmem:[%s7 + $0x3e0] sm:$0xff]
    %v810 = vld [vmem:[%s7 + $0x3e8] sm:$0xff]
    %v811 = vld [vmem:[%s7 + $0x3f0] sm:$0xff]
    %v812 = vld [vmem:[%s7 + $0x3f8] sm:$0xff]
    %v813 = vld [vmem:[%s8] sm:$0xf]
    %v815 = vperm.slane %v813, 0
    %v816 = vperm.slane %v813, 1
    %v817 = vperm.slane %v813, 2
    %v818 = vperm.slane %v813, 3
    %823 = vmatpush.msra.mxu0 %v745
    %824 = vmatpush.msra.mxu0 %v741
    %825 = vmatpush.msra.mxu0 %v737
    %826 = vmatpush.msra.mxu0 %v733
    %827 = vmatpush.msra.mxu0 %v729
    %828 = vmatpush.msra.mxu0 %v725
    %829 = vmatpush.msra.mxu0 %v721
    %830 = vmatpush.msra.mxu0 %v717
    %831 = vmatpush.msra.mxu0 %v713
    %832 = vmatpush.msra.mxu0 %v709
    %833 = vmatpush.msra.mxu0 %v705
    %834 = vmatpush.msra.mxu0 %v701
    %835 = vmatpush.msra.mxu0 %v697
    %836 = vmatpush.msra.mxu0 %v693
    %837 = vmatpush.msra.mxu0 %v689
    %838 = vmatpush.msra.mxu0 %v685
    %839 = vmatmul.f32.gmra.mxu0 %v323
    %v840 = vpop.f32.mrf.mxu0
    %v841 = vadd.f32 %v815, %v840
    %842 = vdwg.mxu0
    %843 = vmatpush.msra.mxu0 %v809
    %844 = vmatpush.msra.mxu0 %v805
    %845 = vmatpush.msra.mxu0 %v801
    %846 = vmatpush.msra.mxu0 %v797
    %847 = vmatpush.msra.mxu0 %v793
    %848 = vmatpush.msra.mxu0 %v789
    %849 = vmatpush.msra.mxu0 %v785
    %850 = vmatpush.msra.mxu0 %v781
    %851 = vmatpush.msra.mxu0 %v777
    %852 = vmatpush.msra.mxu0 %v773
    %853 = vmatpush.msra.mxu0 %v769
    %854 = vmatpush.msra.mxu0 %v765
    %855 = vmatpush.msra.mxu0 %v761
    %856 = vmatpush.msra.mxu0 %v757
    %857 = vmatpush.msra.mxu0 %v753
    %858 = vmatpush.msra.mxu0 %v749
    %859 = vmatmul.f32.gmra.mxu0 %v324
    %v860 = vpop.f32.mrf.mxu0
    %v861 = vadd.f32 %v841, %v860
    %862 = vdwg.mxu0
    %863 = vmatpush.msra.mxu0 %v746
    %864 = vmatpush.msra.mxu0 %v742
    %865 = vmatpush.msra.mxu0 %v738
    %866 = vmatpush.msra.mxu0 %v734
    %867 = vmatpush.msra.mxu0 %v730
    %868 = vmatpush.msra.mxu0 %v726
    %869 = vmatpush.msra.mxu0 %v722
    %870 = vmatpush.msra.mxu0 %v718
    %871 = vmatpush.msra.mxu0 %v714
    %872 = vmatpush.msra.mxu0 %v710
    %873 = vmatpush.msra.mxu0 %v706
    %874 = vmatpush.msra.mxu0 %v702
    %875 = vmatpush.msra.mxu0 %v698
    %876 = vmatpush.msra.mxu0 %v694
    %877 = vmatpush.msra.mxu0 %v690
    %878 = vmatpush.msra.mxu0 %v686
    %879 = vmatmul.f32.gmra.mxu0 %v323
    %v880 = vpop.f32.mrf.mxu0
    %v881 = vadd.f32 %v816, %v880
    %882 = vdwg.mxu0
    %883 = vmatpush.msra.mxu0 %v810
    %884 = vmatpush.msra.mxu0 %v806
    %885 = vmatpush.msra.mxu0 %v802
    %886 = vmatpush.msra.mxu0 %v798
    %887 = vmatpush.msra.mxu0 %v794
    %888 = vmatpush.msra.mxu0 %v790
    %889 = vmatpush.msra.mxu0 %v786
    %890 = vmatpush.msra.mxu0 %v782
    %891 = vmatpush.msra.mxu0 %v778
    %892 = vmatpush.msra.mxu0 %v774
    %893 = vmatpush.msra.mxu0 %v770
    %894 = vmatpush.msra.mxu0 %v766
    %895 = vmatpush.msra.mxu0 %v762
    %896 = vmatpush.msra.mxu0 %v758
    %897 = vmatpush.msra.mxu0 %v754
    %898 = vmatpush.msra.mxu0 %v750
    %899 = vmatmul.f32.gmra.mxu0 %v324
    %v900 = vpop.f32.mrf.mxu0
    %v901 = vadd.f32 %v881, %v900
    %902 = vdwg.mxu0
    %903 = vmatpush.msra.mxu0 %v747
    %904 = vmatpush.msra.mxu0 %v743
    %905 = vmatpush.msra.mxu0 %v739
    %906 = vmatpush.msra.mxu0 %v735
    %907 = vmatpush.msra.mxu0 %v731
    %908 = vmatpush.msra.mxu0 %v727
    %909 = vmatpush.msra.mxu0 %v723
    %910 = vmatpush.msra.mxu0 %v719
    %911 = vmatpush.msra.mxu0 %v715
    %912 = vmatpush.msra.mxu0 %v711
    %913 = vmatpush.msra.mxu0 %v707
    %914 = vmatpush.msra.mxu0 %v703
    %915 = vmatpush.msra.mxu0 %v699
    %916 = vmatpush.msra.mxu0 %v695
    %917 = vmatpush.msra.mxu0 %v691
    %918 = vmatpush.msra.mxu0 %v687
    %919 = vmatmul.f32.gmra.mxu0 %v323
    %v920 = vpop.f32.mrf.mxu0
    %v921 = vadd.f32 %v817, %v920
    %922 = vdwg.mxu0
    %923 = vmatpush.msra.mxu0 %v811
    %924 = vmatpush.msra.mxu0 %v807
    %925 = vmatpush.msra.mxu0 %v803
    %926 = vmatpush.msra.mxu0 %v799
    %927 = vmatpush.msra.mxu0 %v795
    %928 = vmatpush.msra.mxu0 %v791
    %929 = vmatpush.msra.mxu0 %v787
    %930 = vmatpush.msra.mxu0 %v783
    %931 = vmatpush.msra.mxu0 %v779
    %932 = vmatpush.msra.mxu0 %v775
    %933 = vmatpush.msra.mxu0 %v771
    %934 = vmatpush.msra.mxu0 %v767
    %935 = vmatpush.msra.mxu0 %v763
    %936 = vmatpush.msra.mxu0 %v759
    %937 = vmatpush.msra.mxu0 %v755
    %938 = vmatpush.msra.mxu0 %v751
    %939 = vmatmul.f32.gmra.mxu0 %v324
    %v940 = vpop.f32.mrf.mxu0
    %v941 = vadd.f32 %v921, %v940
    %942 = vdwg.mxu0
    %943 = vmatpush.msra.mxu0 %v748
    %944 = vmatpush.msra.mxu0 %v744
    %945 = vmatpush.msra.mxu0 %v740
    %946 = vmatpush.msra.mxu0 %v736
    %947 = vmatpush.msra.mxu0 %v732
    %948 = vmatpush.msra.mxu0 %v728
    %949 = vmatpush.msra.mxu0 %v724
    %950 = vmatpush.msra.mxu0 %v720
    %951 = vmatpush.msra.mxu0 %v716
    %952 = vmatpush.msra.mxu0 %v712
    %953 = vmatpush.msra.mxu0 %v708
    %954 = vmatpush.msra.mxu0 %v704
    %955 = vmatpush.msra.mxu0 %v700
    %956 = vmatpush.msra.mxu0 %v696
    %957 = vmatpush.msra.mxu0 %v692
    %958 = vmatpush.msra.mxu0 %v688
    %959 = vmatmul.f32.gmra.mxu0 %v323
    %v960 = vpop.f32.mrf.mxu0
    %v961 = vadd.f32 %v818, %v960
    %962 = vdwg.mxu0
    %963 = vmatpush.msra.mxu0 %v812
    %964 = vmatpush.msra.mxu0 %v808
    %965 = vmatpush.msra.mxu0 %v804
    %966 = vmatpush.msra.mxu0 %v800
    %967 = vmatpush.msra.mxu0 %v796
    %968 = vmatpush.msra.mxu0 %v792
    %969 = vmatpush.msra.mxu0 %v788
    %970 = vmatpush.msra.mxu0 %v784
    %971 = vmatpush.msra.mxu0 %v780
    %972 = vmatpush.msra.mxu0 %v776
    %973 = vmatpush.msra.mxu0 %v772
    %974 = vmatpush.msra.mxu0 %v768
    %975 = vmatpush.msra.mxu0 %v764
    %976 = vmatpush.msra.mxu0 %v760
    %977 = vmatpush.msra.mxu0 %v756
    %978 = vmatpush.msra.mxu0 %v752
    %979 = vmatmul.f32.gmra.mxu0 %v324
    %v980 = vpop.f32.mrf.mxu0
    %v981 = vadd.f32 %v961, %v980
    %982 = vdwg.mxu0
    %v987 = vrot.slane %v901, 7
    %v988 = vrot.slane %v941, 6
    %v989 = vrot.slane %v981, 5
    %vm990 = vcmask 1040384
    %v991 = vsel %vm990, %v861, %v987
    %vm992 = vcmask 1042434
    %v993 = vsel %vm992, %v988, %v989
    %vm994 = vcmask 1041408
    %v995 = vsel %vm994, %v991, %v993
    %v996 = vsel %vm318, %v861, %v987
    %vm997 = vcmask 1043459
    %v998 = vsel %vm997, %v988, %v989
    %vm999 = vcmask 1042433
    %v1000 = vsel %vm999, %v996, %v998
    %v1001 = vrot.slane %v1000, 1
    %v1002 = vperm.slane %v995, 0
    %v1003 = vperm.slane %v995, 1
    %v1004 = vperm.slane %v995, 2
    %v1005 = vperm.slane %v995, 3
    %v1006 = vperm.slane %v1001, 0
    %v1007 = vperm.slane %v1001, 1
    %v1008 = vperm.slane %v1001, 2
    %v1009 = vperm.slane %v1001, 3
    %v1018 = vadd.f32 %v500, %v1002
    %v1019 = vadd.f32 %v558, %v1003
    %v1020 = vadd.f32 %v616, %v1004
    %v1021 = vadd.f32 %v674, %v1005
    %v1022 = vadd.f32 %v503, %v1002
    %v1023 = vadd.f32 %v561, %v1003
    %v1024 = vadd.f32 %v619, %v1004
    %v1025 = vadd.f32 %v677, %v1005
    %v1026 = vadd.f32 %v506, %v1006
    %v1027 = vadd.f32 %v564, %v1007
    %v1028 = vadd.f32 %v622, %v1008
    %v1029 = vadd.f32 %v680, %v1009
    %v1030 = vadd.f32 %v509, %v1006
    %v1031 = vadd.f32 %v567, %v1007
    %v1032 = vadd.f32 %v625, %v1008
    %v1033 = vadd.f32 %v683, %v1009
    %vm1034 = vcmp.gt.f32.partialorder %v1018, 0.0
    %vm1035 = vcmp.gt.f32.partialorder %v1019, 0.0
    %vm1036 = vcmp.gt.f32.partialorder %v1020, 0.0
    %vm1037 = vcmp.gt.f32.partialorder %v1021, 0.0
    %vm1038 = vcmp.gt.f32.partialorder %v1022, 0.0
    %vm1039 = vcmp.gt.f32.partialorder %v1023, 0.0
    %vm1040 = vcmp.gt.f32.partialorder %v1024, 0.0
    %vm1041 = vcmp.gt.f32.partialorder %v1025, 0.0
    %vm1042 = vcmp.gt.f32.partialorder %v1026, 0.0
    %vm1043 = vcmp.gt.f32.partialorder %v1027, 0.0
    %vm1044 = vcmp.gt.f32.partialorder %v1028, 0.0
    %vm1045 = vcmp.gt.f32.partialorder %v1029, 0.0
    %vm1046 = vcmp.gt.f32.partialorder %v1030, 0.0
    %vm1047 = vcmp.gt.f32.partialorder %v1031, 0.0
    %vm1048 = vcmp.gt.f32.partialorder %v1032, 0.0
    %vm1049 = vcmp.gt.f32.partialorder %v1033, 0.0
    %v1050 = vmul.f32 %v1018, 0.1
    %v1051 = vmul.f32 %v1019, 0.1
    %v1052 = vmul.f32 %v1020, 0.1
    %v1053 = vmul.f32 %v1021, 0.1
    %v1054 = vmul.f32 %v1022, 0.1
    %v1055 = vmul.f32 %v1023, 0.1
    %v1056 = vmul.f32 %v1024, 0.1
    %v1057 = vmul.f32 %v1025, 0.1
    %v1058 = vmul.f32 %v1026, 0.1
    %v1059 = vmul.f32 %v1027, 0.1
    %v1060 = vmul.f32 %v1028, 0.1
    %v1061 = vmul.f32 %v1029, 0.1
    %v1062 = vmul.f32 %v1030, 0.1
    %v1063 = vmul.f32 %v1031, 0.1
    %v1064 = vmul.f32 %v1032, 0.1
    %v1065 = vmul.f32 %v1033, 0.1
    %v1066 = vsel %vm1034, %v1018, %v1050
    %v1067 = vsel %vm1035, %v1019, %v1051
    %v1068 = vsel %vm1036, %v1020, %v1052
    %v1069 = vsel %vm1037, %v1021, %v1053
    %v1070 = vsel %vm1038, %v1022, %v1054
    %v1071 = vsel %vm1039, %v1023, %v1055
    %v1072 = vsel %vm1040, %v1024, %v1056
    %v1073 = vsel %vm1041, %v1025, %v1057
    %v1074 = vsel %vm1042, %v1026, %v1058
    %v1075 = vsel %vm1043, %v1027, %v1059
    %v1076 = vsel %vm1044, %v1028, %v1060
    %v1077 = vsel %vm1045, %v1029, %v1061
    %v1078 = vsel %vm1046, %v1030, %v1062
    %v1079 = vsel %vm1047, %v1031, %v1063
    %v1080 = vsel %vm1048, %v1032, %v1064
    %v1081 = vsel %vm1049, %v1033, %v1065
    %v1082 = vld [vmem:[#allocation2] sm:$0xff]
    %v1083 = vld [vmem:[#allocation2 + $0x8] sm:$0xff]
    %v1084 = vld [vmem:[#allocation2 + $0x10] sm:$0xff]
    %v1085 = vld [vmem:[#allocation2 + $0x18] sm:$0xff]
    %v1086 = vld [vmem:[#allocation2 + $0x20] sm:$0xff]
    %v1087 = vld [vmem:[#allocation2 + $0x28] sm:$0xff]
    %v1088 = vld [vmem:[#allocation2 + $0x30] sm:$0xff]
    %v1089 = vld [vmem:[#allocation2 + $0x38] sm:$0xff]
    %v1090 = vld [vmem:[#allocation2 + $0x40] sm:$0xff]
    %v1091 = vld [vmem:[#allocation2 + $0x48] sm:$0xff]
    %v1092 = vld [vmem:[#allocation2 + $0x50] sm:$0xff]
    %v1093 = vld [vmem:[#allocation2 + $0x58] sm:$0xff]
    %v1094 = vld [vmem:[#allocation2 + $0x60] sm:$0xff]
    %v1095 = vld [vmem:[#allocation2 + $0x68] sm:$0xff]
    %v1096 = vld [vmem:[#allocation2 + $0x70] sm:$0xff]
    %v1097 = vld [vmem:[#allocation2 + $0x78] sm:$0xff]
    %v1098 = vld [vmem:[#allocation2 + $0x80] sm:$0xff]
    %v1099 = vld [vmem:[#allocation2 + $0x88] sm:$0xff]
    %v1100 = vld [vmem:[#allocation2 + $0x90] sm:$0xff]
    %v1101 = vld [vmem:[#allocation2 + $0x98] sm:$0xff]
    %v1102 = vld [vmem:[#allocation2 + $0xa0] sm:$0xff]
    %v1103 = vld [vmem:[#allocation2 + $0xa8] sm:$0xff]
    %v1104 = vld [vmem:[#allocation2 + $0xb0] sm:$0xff]
    %v1105 = vld [vmem:[#allocation2 + $0xb8] sm:$0xff]
    %v1106 = vld [vmem:[#allocation2 + $0xc0] sm:$0xff]
    %v1107 = vld [vmem:[#allocation2 + $0xc8] sm:$0xff]
    %v1108 = vld [vmem:[#allocation2 + $0xd0] sm:$0xff]
    %v1109 = vld [vmem:[#allocation2 + $0xd8] sm:$0xff]
    %v1110 = vld [vmem:[#allocation2 + $0xe0] sm:$0xff]
    %v1111 = vld [vmem:[#allocation2 + $0xe8] sm:$0xff]
    %v1112 = vld [vmem:[#allocation2 + $0xf0] sm:$0xff]
    %v1113 = vld [vmem:[#allocation2 + $0xf8] sm:$0xff]
    %v1114 = vld [vmem:[#allocation2 + $0x100] sm:$0xff]
    %v1115 = vld [vmem:[#allocation2 + $0x108] sm:$0xff]
    %v1116 = vld [vmem:[#allocation2 + $0x110] sm:$0xff]
    %v1117 = vld [vmem:[#allocation2 + $0x118] sm:$0xff]
    %v1118 = vld [vmem:[#allocation2 + $0x120] sm:$0xff]
    %v1119 = vld [vmem:[#allocation2 + $0x128] sm:$0xff]
    %v1120 = vld [vmem:[#allocation2 + $0x130] sm:$0xff]
    %v1121 = vld [vmem:[#allocation2 + $0x138] sm:$0xff]
    %v1122 = vld [vmem:[#allocation2 + $0x140] sm:$0xff]
    %v1123 = vld [vmem:[#allocation2 + $0x148] sm:$0xff]
    %v1124 = vld [vmem:[#allocation2 + $0x150] sm:$0xff]
    %v1125 = vld [vmem:[#allocation2 + $0x158] sm:$0xff]
    %v1126 = vld [vmem:[#allocation2 + $0x160] sm:$0xff]
    %v1127 = vld [vmem:[#allocation2 + $0x168] sm:$0xff]
    %v1128 = vld [vmem:[#allocation2 + $0x170] sm:$0xff]
    %v1129 = vld [vmem:[#allocation2 + $0x178] sm:$0xff]
    %v1130 = vld [vmem:[#allocation2 + $0x180] sm:$0xff]
    %v1131 = vld [vmem:[#allocation2 + $0x188] sm:$0xff]
    %v1132 = vld [vmem:[#allocation2 + $0x190] sm:$0xff]
    %v1133 = vld [vmem:[#allocation2 + $0x198] sm:$0xff]
    %v1134 = vld [vmem:[#allocation2 + $0x1a0] sm:$0xff]
    %v1135 = vld [vmem:[#allocation2 + $0x1a8] sm:$0xff]
    %v1136 = vld [vmem:[#allocation2 + $0x1b0] sm:$0xff]
    %v1137 = vld [vmem:[#allocation2 + $0x1b8] sm:$0xff]
    %v1138 = vld [vmem:[#allocation2 + $0x1c0] sm:$0xff]
    %v1139 = vld [vmem:[#allocation2 + $0x1c8] sm:$0xff]
    %v1140 = vld [vmem:[#allocation2 + $0x1d0] sm:$0xff]
    %v1141 = vld [vmem:[#allocation2 + $0x1d8] sm:$0xff]
    %v1142 = vld [vmem:[#allocation2 + $0x1e0] sm:$0xff]
    %v1143 = vld [vmem:[#allocation2 + $0x1e8] sm:$0xff]
    %v1144 = vld [vmem:[#allocation2 + $0x1f0] sm:$0xff]
    %v1145 = vld [vmem:[#allocation2 + $0x1f8] sm:$0xff]
    %v1146 = vld [vmem:[#allocation2 + $0x200] sm:$0xff]
    %v1147 = vld [vmem:[#allocation2 + $0x208] sm:$0xff]
    %v1148 = vld [vmem:[#allocation2 + $0x210] sm:$0xff]
    %v1149 = vld [vmem:[#allocation2 + $0x218] sm:$0xff]
    %v1150 = vld [vmem:[#allocation2 + $0x220] sm:$0xff]
    %v1151 = vld [vmem:[#allocation2 + $0x228] sm:$0xff]
    %v1152 = vld [vmem:[#allocation2 + $0x230] sm:$0xff]
    %v1153 = vld [vmem:[#allocation2 + $0x238] sm:$0xff]
    %v1154 = vld [vmem:[#allocation2 + $0x240] sm:$0xff]
    %v1155 = vld [vmem:[#allocation2 + $0x248] sm:$0xff]
    %v1156 = vld [vmem:[#allocation2 + $0x250] sm:$0xff]
    %v1157 = vld [vmem:[#allocation2 + $0x258] sm:$0xff]
    %v1158 = vld [vmem:[#allocation2 + $0x260] sm:$0xff]
    %v1159 = vld [vmem:[#allocation2 + $0x268] sm:$0xff]
    %v1160 = vld [vmem:[#allocation2 + $0x270] sm:$0xff]
    %v1161 = vld [vmem:[#allocation2 + $0x278] sm:$0xff]
    %v1162 = vld [vmem:[#allocation2 + $0x280] sm:$0xff]
    %v1163 = vld [vmem:[#allocation2 + $0x288] sm:$0xff]
    %v1164 = vld [vmem:[#allocation2 + $0x290] sm:$0xff]
    %v1165 = vld [vmem:[#allocation2 + $0x298] sm:$0xff]
    %v1166 = vld [vmem:[#allocation2 + $0x2a0] sm:$0xff]
    %v1167 = vld [vmem:[#allocation2 + $0x2a8] sm:$0xff]
    %v1168 = vld [vmem:[#allocation2 + $0x2b0] sm:$0xff]
    %v1169 = vld [vmem:[#allocation2 + $0x2b8] sm:$0xff]
    %v1170 = vld [vmem:[#allocation2 + $0x2c0] sm:$0xff]
    %v1171 = vld [vmem:[#allocation2 + $0x2c8] sm:$0xff]
    %v1172 = vld [vmem:[#allocation2 + $0x2d0] sm:$0xff]
    %v1173 = vld [vmem:[#allocation2 + $0x2d8] sm:$0xff]
    %v1174 = vld [vmem:[#allocation2 + $0x2e0] sm:$0xff]
    %v1175 = vld [vmem:[#allocation2 + $0x2e8] sm:$0xff]
    %v1176 = vld [vmem:[#allocation2 + $0x2f0] sm:$0xff]
    %v1177 = vld [vmem:[#allocation2 + $0x2f8] sm:$0xff]
    %v1178 = vld [vmem:[#allocation2 + $0x300] sm:$0xff]
    %v1179 = vld [vmem:[#allocation2 + $0x308] sm:$0xff]
    %v1180 = vld [vmem:[#allocation2 + $0x310] sm:$0xff]
    %v1181 = vld [vmem:[#allocation2 + $0x318] sm:$0xff]
    %v1182 = vld [vmem:[#allocation2 + $0x320] sm:$0xff]
    %v1183 = vld [vmem:[#allocation2 + $0x328] sm:$0xff]
    %v1184 = vld [vmem:[#allocation2 + $0x330] sm:$0xff]
    %v1185 = vld [vmem:[#allocation2 + $0x338] sm:$0xff]
    %v1186 = vld [vmem:[#allocation2 + $0x340] sm:$0xff]
    %v1187 = vld [vmem:[#allocation2 + $0x348] sm:$0xff]
    %v1188 = vld [vmem:[#allocation2 + $0x350] sm:$0xff]
    %v1189 = vld [vmem:[#allocation2 + $0x358] sm:$0xff]
    %v1190 = vld [vmem:[#allocation2 + $0x360] sm:$0xff]
    %v1191 = vld [vmem:[#allocation2 + $0x368] sm:$0xff]
    %v1192 = vld [vmem:[#allocation2 + $0x370] sm:$0xff]
    %v1193 = vld [vmem:[#allocation2 + $0x378] sm:$0xff]
    %v1194 = vld [vmem:[#allocation2 + $0x380] sm:$0xff]
    %v1195 = vld [vmem:[#allocation2 + $0x388] sm:$0xff]
    %v1196 = vld [vmem:[#allocation2 + $0x390] sm:$0xff]
    %v1197 = vld [vmem:[#allocation2 + $0x398] sm:$0xff]
    %v1198 = vld [vmem:[#allocation2 + $0x3a0] sm:$0xff]
    %v1199 = vld [vmem:[#allocation2 + $0x3a8] sm:$0xff]
    %v1200 = vld [vmem:[#allocation2 + $0x3b0] sm:$0xff]
    %v1201 = vld [vmem:[#allocation2 + $0x3b8] sm:$0xff]
    %v1202 = vld [vmem:[#allocation2 + $0x3c0] sm:$0xff]
    %v1203 = vld [vmem:[#allocation2 + $0x3c8] sm:$0xff]
    %v1204 = vld [vmem:[#allocation2 + $0x3d0] sm:$0xff]
    %v1205 = vld [vmem:[#allocation2 + $0x3d8] sm:$0xff]
    %v1206 = vld [vmem:[#allocation2 + $0x3e0] sm:$0xff]
    %v1207 = vld [vmem:[#allocation2 + $0x3e8] sm:$0xff]
    %v1208 = vld [vmem:[#allocation2 + $0x3f0] sm:$0xff]
    %v1209 = vld [vmem:[#allocation2 + $0x3f8] sm:$0xff]
    %v1210 = vld [vmem:[#allocation2 + $0x400] sm:$0xff]
    %v1211 = vld [vmem:[#allocation2 + $0x408] sm:$0xff]
    %v1212 = vld [vmem:[#allocation2 + $0x410] sm:$0xff]
    %v1213 = vld [vmem:[#allocation2 + $0x418] sm:$0xff]
    %v1214 = vld [vmem:[#allocation2 + $0x420] sm:$0xff]
    %v1215 = vld [vmem:[#allocation2 + $0x428] sm:$0xff]
    %v1216 = vld [vmem:[#allocation2 + $0x430] sm:$0xff]
    %v1217 = vld [vmem:[#allocation2 + $0x438] sm:$0xff]
    %v1218 = vld [vmem:[#allocation2 + $0x440] sm:$0xff]
    %v1219 = vld [vmem:[#allocation2 + $0x448] sm:$0xff]
    %v1220 = vld [vmem:[#allocation2 + $0x450] sm:$0xff]
    %v1221 = vld [vmem:[#allocation2 + $0x458] sm:$0xff]
    %v1222 = vld [vmem:[#allocation2 + $0x460] sm:$0xff]
    %v1223 = vld [vmem:[#allocation2 + $0x468] sm:$0xff]
    %v1224 = vld [vmem:[#allocation2 + $0x470] sm:$0xff]
    %v1225 = vld [vmem:[#allocation2 + $0x478] sm:$0xff]
    %v1226 = vld [vmem:[#allocation2 + $0x480] sm:$0xff]
    %v1227 = vld [vmem:[#allocation2 + $0x488] sm:$0xff]
    %v1228 = vld [vmem:[#allocation2 + $0x490] sm:$0xff]
    %v1229 = vld [vmem:[#allocation2 + $0x498] sm:$0xff]
    %v1230 = vld [vmem:[#allocation2 + $0x4a0] sm:$0xff]
    %v1231 = vld [vmem:[#allocation2 + $0x4a8] sm:$0xff]
    %v1232 = vld [vmem:[#allocation2 + $0x4b0] sm:$0xff]
    %v1233 = vld [vmem:[#allocation2 + $0x4b8] sm:$0xff]
    %v1234 = vld [vmem:[#allocation2 + $0x4c0] sm:$0xff]
    %v1235 = vld [vmem:[#allocation2 + $0x4c8] sm:$0xff]
    %v1236 = vld [vmem:[#allocation2 + $0x4d0] sm:$0xff]
    %v1237 = vld [vmem:[#allocation2 + $0x4d8] sm:$0xff]
    %v1238 = vld [vmem:[#allocation2 + $0x4e0] sm:$0xff]
    %v1239 = vld [vmem:[#allocation2 + $0x4e8] sm:$0xff]
    %v1240 = vld [vmem:[#allocation2 + $0x4f0] sm:$0xff]
    %v1241 = vld [vmem:[#allocation2 + $0x4f8] sm:$0xff]
    %v1242 = vld [vmem:[#allocation2 + $0x500] sm:$0xff]
    %v1243 = vld [vmem:[#allocation2 + $0x508] sm:$0xff]
    %v1244 = vld [vmem:[#allocation2 + $0x510] sm:$0xff]
    %v1245 = vld [vmem:[#allocation2 + $0x518] sm:$0xff]
    %v1246 = vld [vmem:[#allocation2 + $0x520] sm:$0xff]
    %v1247 = vld [vmem:[#allocation2 + $0x528] sm:$0xff]
    %v1248 = vld [vmem:[#allocation2 + $0x530] sm:$0xff]
    %v1249 = vld [vmem:[#allocation2 + $0x538] sm:$0xff]
    %v1250 = vld [vmem:[#allocation2 + $0x540] sm:$0xff]
    %v1251 = vld [vmem:[#allocation2 + $0x548] sm:$0xff]
    %v1252 = vld [vmem:[#allocation2 + $0x550] sm:$0xff]
    %v1253 = vld [vmem:[#allocation2 + $0x558] sm:$0xff]
    %v1254 = vld [vmem:[#allocation2 + $0x560] sm:$0xff]
    %v1255 = vld [vmem:[#allocation2 + $0x568] sm:$0xff]
    %v1256 = vld [vmem:[#allocation2 + $0x570] sm:$0xff]
    %v1257 = vld [vmem:[#allocation2 + $0x578] sm:$0xff]
    %v1258 = vld [vmem:[#allocation2 + $0x580] sm:$0xff]
    %v1259 = vld [vmem:[#allocation2 + $0x588] sm:$0xff]
    %v1260 = vld [vmem:[#allocation2 + $0x590] sm:$0xff]
    %v1261 = vld [vmem:[#allocation2 + $0x598] sm:$0xff]
    %v1262 = vld [vmem:[#allocation2 + $0x5a0] sm:$0xff]
    %v1263 = vld [vmem:[#allocation2 + $0x5a8] sm:$0xff]
    %v1264 = vld [vmem:[#allocation2 + $0x5b0] sm:$0xff]
    %v1265 = vld [vmem:[#allocation2 + $0x5b8] sm:$0xff]
    %v1266 = vld [vmem:[#allocation2 + $0x5c0] sm:$0xff]
    %v1267 = vld [vmem:[#allocation2 + $0x5c8] sm:$0xff]
    %v1268 = vld [vmem:[#allocation2 + $0x5d0] sm:$0xff]
    %v1269 = vld [vmem:[#allocation2 + $0x5d8] sm:$0xff]
    %v1270 = vld [vmem:[#allocation2 + $0x5e0] sm:$0xff]
    %v1271 = vld [vmem:[#allocation2 + $0x5e8] sm:$0xff]
    %v1272 = vld [vmem:[#allocation2 + $0x5f0] sm:$0xff]
    %v1273 = vld [vmem:[#allocation2 + $0x5f8] sm:$0xff]
    %v1274 = vld [vmem:[#allocation2 + $0x600] sm:$0xff]
    %v1275 = vld [vmem:[#allocation2 + $0x608] sm:$0xff]
    %v1276 = vld [vmem:[#allocation2 + $0x610] sm:$0xff]
    %v1277 = vld [vmem:[#allocation2 + $0x618] sm:$0xff]
    %v1278 = vld [vmem:[#allocation2 + $0x620] sm:$0xff]
    %v1279 = vld [vmem:[#allocation2 + $0x628] sm:$0xff]
    %v1280 = vld [vmem:[#allocation2 + $0x630] sm:$0xff]
    %v1281 = vld [vmem:[#allocation2 + $0x638] sm:$0xff]
    %v1282 = vld [vmem:[#allocation2 + $0x640] sm:$0xff]
    %v1283 = vld [vmem:[#allocation2 + $0x648] sm:$0xff]
    %v1284 = vld [vmem:[#allocation2 + $0x650] sm:$0xff]
    %v1285 = vld [vmem:[#allocation2 + $0x658] sm:$0xff]
    %v1286 = vld [vmem:[#allocation2 + $0x660] sm:$0xff]
    %v1287 = vld [vmem:[#allocation2 + $0x668] sm:$0xff]
    %v1288 = vld [vmem:[#allocation2 + $0x670] sm:$0xff]
    %v1289 = vld [vmem:[#allocation2 + $0x678] sm:$0xff]
    %v1290 = vld [vmem:[#allocation2 + $0x680] sm:$0xff]
    %v1291 = vld [vmem:[#allocation2 + $0x688] sm:$0xff]
    %v1292 = vld [vmem:[#allocation2 + $0x690] sm:$0xff]
    %v1293 = vld [vmem:[#allocation2 + $0x698] sm:$0xff]
    %v1294 = vld [vmem:[#allocation2 + $0x6a0] sm:$0xff]
    %v1295 = vld [vmem:[#allocation2 + $0x6a8] sm:$0xff]
    %v1296 = vld [vmem:[#allocation2 + $0x6b0] sm:$0xff]
    %v1297 = vld [vmem:[#allocation2 + $0x6b8] sm:$0xff]
    %v1298 = vld [vmem:[#allocation2 + $0x6c0] sm:$0xff]
    %v1299 = vld [vmem:[#allocation2 + $0x6c8] sm:$0xff]
    %v1300 = vld [vmem:[#allocation2 + $0x6d0] sm:$0xff]
    %v1301 = vld [vmem:[#allocation2 + $0x6d8] sm:$0xff]
    %v1302 = vld [vmem:[#allocation2 + $0x6e0] sm:$0xff]
    %v1303 = vld [vmem:[#allocation2 + $0x6e8] sm:$0xff]
    %v1304 = vld [vmem:[#allocation2 + $0x6f0] sm:$0xff]
    %v1305 = vld [vmem:[#allocation2 + $0x6f8] sm:$0xff]
    %v1306 = vld [vmem:[#allocation2 + $0x700] sm:$0xff]
    %v1307 = vld [vmem:[#allocation2 + $0x708] sm:$0xff]
    %v1308 = vld [vmem:[#allocation2 + $0x710] sm:$0xff]
    %v1309 = vld [vmem:[#allocation2 + $0x718] sm:$0xff]
    %v1310 = vld [vmem:[#allocation2 + $0x720] sm:$0xff]
    %v1311 = vld [vmem:[#allocation2 + $0x728] sm:$0xff]
    %v1312 = vld [vmem:[#allocation2 + $0x730] sm:$0xff]
    %v1313 = vld [vmem:[#allocation2 + $0x738] sm:$0xff]
    %v1314 = vld [vmem:[#allocation2 + $0x740] sm:$0xff]
    %v1315 = vld [vmem:[#allocation2 + $0x748] sm:$0xff]
    %v1316 = vld [vmem:[#allocation2 + $0x750] sm:$0xff]
    %v1317 = vld [vmem:[#allocation2 + $0x758] sm:$0xff]
    %v1318 = vld [vmem:[#allocation2 + $0x760] sm:$0xff]
    %v1319 = vld [vmem:[#allocation2 + $0x768] sm:$0xff]
    %v1320 = vld [vmem:[#allocation2 + $0x770] sm:$0xff]
    %v1321 = vld [vmem:[#allocation2 + $0x778] sm:$0xff]
    %v1322 = vld [vmem:[#allocation2 + $0x780] sm:$0xff]
    %v1323 = vld [vmem:[#allocation2 + $0x788] sm:$0xff]
    %v1324 = vld [vmem:[#allocation2 + $0x790] sm:$0xff]
    %v1325 = vld [vmem:[#allocation2 + $0x798] sm:$0xff]
    %v1326 = vld [vmem:[#allocation2 + $0x7a0] sm:$0xff]
    %v1327 = vld [vmem:[#allocation2 + $0x7a8] sm:$0xff]
    %v1328 = vld [vmem:[#allocation2 + $0x7b0] sm:$0xff]
    %v1329 = vld [vmem:[#allocation2 + $0x7b8] sm:$0xff]
    %v1330 = vld [vmem:[#allocation2 + $0x7c0] sm:$0xff]
    %v1331 = vld [vmem:[#allocation2 + $0x7c8] sm:$0xff]
    %v1332 = vld [vmem:[#allocation2 + $0x7d0] sm:$0xff]
    %v1333 = vld [vmem:[#allocation2 + $0x7d8] sm:$0xff]
    %v1334 = vld [vmem:[#allocation2 + $0x7e0] sm:$0xff]
    %v1335 = vld [vmem:[#allocation2 + $0x7e8] sm:$0xff]
    %v1336 = vld [vmem:[#allocation2 + $0x7f0] sm:$0xff]
    %v1337 = vld [vmem:[#allocation2 + $0x7f8] sm:$0xff]
    %v1338 = vld [vmem:[#allocation2 + $0x800] sm:$0xff]
    %v1339 = vld [vmem:[#allocation2 + $0x808] sm:$0xff]
    %v1340 = vld [vmem:[#allocation2 + $0x810] sm:$0xff]
    %v1341 = vld [vmem:[#allocation2 + $0x818] sm:$0xff]
    %v1342 = vld [vmem:[#allocation2 + $0x820] sm:$0xff]
    %v1343 = vld [vmem:[#allocation2 + $0x828] sm:$0xff]
    %v1344 = vld [vmem:[#allocation2 + $0x830] sm:$0xff]
    %v1345 = vld [vmem:[#allocation2 + $0x838] sm:$0xff]
    %v1346 = vld [vmem:[#allocation2 + $0x840] sm:$0xff]
    %v1347 = vld [vmem:[#allocation2 + $0x848] sm:$0xff]
    %v1348 = vld [vmem:[#allocation2 + $0x850] sm:$0xff]
    %v1349 = vld [vmem:[#allocation2 + $0x858] sm:$0xff]
    %v1350 = vld [vmem:[#allocation2 + $0x860] sm:$0xff]
    %v1351 = vld [vmem:[#allocation2 + $0x868] sm:$0xff]
    %v1352 = vld [vmem:[#allocation2 + $0x870] sm:$0xff]
    %v1353 = vld [vmem:[#allocation2 + $0x878] sm:$0xff]
    %v1354 = vld [vmem:[#allocation2 + $0x880] sm:$0xff]
    %v1355 = vld [vmem:[#allocation2 + $0x888] sm:$0xff]
    %v1356 = vld [vmem:[#allocation2 + $0x890] sm:$0xff]
    %v1357 = vld [vmem:[#allocation2 + $0x898] sm:$0xff]
    %v1358 = vld [vmem:[#allocation2 + $0x8a0] sm:$0xff]
    %v1359 = vld [vmem:[#allocation2 + $0x8a8] sm:$0xff]
    %v1360 = vld [vmem:[#allocation2 + $0x8b0] sm:$0xff]
    %v1361 = vld [vmem:[#allocation2 + $0x8b8] sm:$0xff]
    %v1362 = vld [vmem:[#allocation2 + $0x8c0] sm:$0xff]
    %v1363 = vld [vmem:[#allocation2 + $0x8c8] sm:$0xff]
    %v1364 = vld [vmem:[#allocation2 + $0x8d0] sm:$0xff]
    %v1365 = vld [vmem:[#allocation2 + $0x8d8] sm:$0xff]
    %v1366 = vld [vmem:[#allocation2 + $0x8e0] sm:$0xff]
    %v1367 = vld [vmem:[#allocation2 + $0x8e8] sm:$0xff]
    %v1368 = vld [vmem:[#allocation2 + $0x8f0] sm:$0xff]
    %v1369 = vld [vmem:[#allocation2 + $0x8f8] sm:$0xff]
    %v1370 = vld [vmem:[#allocation2 + $0x900] sm:$0xff]
    %v1371 = vld [vmem:[#allocation2 + $0x908] sm:$0xff]
    %v1372 = vld [vmem:[#allocation2 + $0x910] sm:$0xff]
    %v1373 = vld [vmem:[#allocation2 + $0x918] sm:$0xff]
    %v1374 = vld [vmem:[#allocation2 + $0x920] sm:$0xff]
    %v1375 = vld [vmem:[#allocation2 + $0x928] sm:$0xff]
    %v1376 = vld [vmem:[#allocation2 + $0x930] sm:$0xff]
    %v1377 = vld [vmem:[#allocation2 + $0x938] sm:$0xff]
    %v1378 = vld [vmem:[#allocation2 + $0x940] sm:$0xff]
    %v1379 = vld [vmem:[#allocation2 + $0x948] sm:$0xff]
    %v1380 = vld [vmem:[#allocation2 + $0x950] sm:$0xff]
    %v1381 = vld [vmem:[#allocation2 + $0x958] sm:$0xff]
    %v1382 = vld [vmem:[#allocation2 + $0x960] sm:$0xff]
    %v1383 = vld [vmem:[#allocation2 + $0x968] sm:$0xff]
    %v1384 = vld [vmem:[#allocation2 + $0x970] sm:$0xff]
    %v1385 = vld [vmem:[#allocation2 + $0x978] sm:$0xff]
    %v1386 = vld [vmem:[#allocation2 + $0x980] sm:$0xff]
    %v1387 = vld [vmem:[#allocation2 + $0x988] sm:$0xff]
    %v1388 = vld [vmem:[#allocation2 + $0x990] sm:$0xff]
    %v1389 = vld [vmem:[#allocation2 + $0x998] sm:$0xff]
    %v1390 = vld [vmem:[#allocation2 + $0x9a0] sm:$0xff]
    %v1391 = vld [vmem:[#allocation2 + $0x9a8] sm:$0xff]
    %v1392 = vld [vmem:[#allocation2 + $0x9b0] sm:$0xff]
    %v1393 = vld [vmem:[#allocation2 + $0x9b8] sm:$0xff]
    %v1394 = vld [vmem:[#allocation2 + $0x9c0] sm:$0xff]
    %v1395 = vld [vmem:[#allocation2 + $0x9c8] sm:$0xff]
    %v1396 = vld [vmem:[#allocation2 + $0x9d0] sm:$0xff]
    %v1397 = vld [vmem:[#allocation2 + $0x9d8] sm:$0xff]
    %v1398 = vld [vmem:[#allocation2 + $0x9e0] sm:$0xff]
    %v1399 = vld [vmem:[#allocation2 + $0x9e8] sm:$0xff]
    %v1400 = vld [vmem:[#allocation2 + $0x9f0] sm:$0xff]
    %v1401 = vld [vmem:[#allocation2 + $0x9f8] sm:$0xff]
    %v1402 = vld [vmem:[#allocation2 + $0xa00] sm:$0xff]
    %v1403 = vld [vmem:[#allocation2 + $0xa08] sm:$0xff]
    %v1404 = vld [vmem:[#allocation2 + $0xa10] sm:$0xff]
    %v1405 = vld [vmem:[#allocation2 + $0xa18] sm:$0xff]
    %v1406 = vld [vmem:[#allocation2 + $0xa20] sm:$0xff]
    %v1407 = vld [vmem:[#allocation2 + $0xa28] sm:$0xff]
    %v1408 = vld [vmem:[#allocation2 + $0xa30] sm:$0xff]
    %v1409 = vld [vmem:[#allocation2 + $0xa38] sm:$0xff]
    %v1410 = vld [vmem:[#allocation2 + $0xa40] sm:$0xff]
    %v1411 = vld [vmem:[#allocation2 + $0xa48] sm:$0xff]
    %v1412 = vld [vmem:[#allocation2 + $0xa50] sm:$0xff]
    %v1413 = vld [vmem:[#allocation2 + $0xa58] sm:$0xff]
    %v1414 = vld [vmem:[#allocation2 + $0xa60] sm:$0xff]
    %v1415 = vld [vmem:[#allocation2 + $0xa68] sm:$0xff]
    %v1416 = vld [vmem:[#allocation2 + $0xa70] sm:$0xff]
    %v1417 = vld [vmem:[#allocation2 + $0xa78] sm:$0xff]
    %v1418 = vld [vmem:[#allocation2 + $0xa80] sm:$0xff]
    %v1419 = vld [vmem:[#allocation2 + $0xa88] sm:$0xff]
    %v1420 = vld [vmem:[#allocation2 + $0xa90] sm:$0xff]
    %v1421 = vld [vmem:[#allocation2 + $0xa98] sm:$0xff]
    %v1422 = vld [vmem:[#allocation2 + $0xaa0] sm:$0xff]
    %v1423 = vld [vmem:[#allocation2 + $0xaa8] sm:$0xff]
    %v1424 = vld [vmem:[#allocation2 + $0xab0] sm:$0xff]
    %v1425 = vld [vmem:[#allocation2 + $0xab8] sm:$0xff]
    %v1426 = vld [vmem:[#allocation2 + $0xac0] sm:$0xff]
    %v1427 = vld [vmem:[#allocation2 + $0xac8] sm:$0xff]
    %v1428 = vld [vmem:[#allocation2 + $0xad0] sm:$0xff]
    %v1429 = vld [vmem:[#allocation2 + $0xad8] sm:$0xff]
    %v1430 = vld [vmem:[#allocation2 + $0xae0] sm:$0xff]
    %v1431 = vld [vmem:[#allocation2 + $0xae8] sm:$0xff]
    %v1432 = vld [vmem:[#allocation2 + $0xaf0] sm:$0xff]
    %v1433 = vld [vmem:[#allocation2 + $0xaf8] sm:$0xff]
    %v1434 = vld [vmem:[#allocation2 + $0xb00] sm:$0xff]
    %v1435 = vld [vmem:[#allocation2 + $0xb08] sm:$0xff]
    %v1436 = vld [vmem:[#allocation2 + $0xb10] sm:$0xff]
    %v1437 = vld [vmem:[#allocation2 + $0xb18] sm:$0xff]
    %v1438 = vld [vmem:[#allocation2 + $0xb20] sm:$0xff]
    %v1439 = vld [vmem:[#allocation2 + $0xb28] sm:$0xff]
    %v1440 = vld [vmem:[#allocation2 + $0xb30] sm:$0xff]
    %v1441 = vld [vmem:[#allocation2 + $0xb38] sm:$0xff]
    %v1442 = vld [vmem:[#allocation2 + $0xb40] sm:$0xff]
    %v1443 = vld [vmem:[#allocation2 + $0xb48] sm:$0xff]
    %v1444 = vld [vmem:[#allocation2 + $0xb50] sm:$0xff]
    %v1445 = vld [vmem:[#allocation2 + $0xb58] sm:$0xff]
    %v1446 = vld [vmem:[#allocation2 + $0xb60] sm:$0xff]
    %v1447 = vld [vmem:[#allocation2 + $0xb68] sm:$0xff]
    %v1448 = vld [vmem:[#allocation2 + $0xb70] sm:$0xff]
    %v1449 = vld [vmem:[#allocation2 + $0xb78] sm:$0xff]
    %v1450 = vld [vmem:[#allocation2 + $0xb80] sm:$0xff]
    %v1451 = vld [vmem:[#allocation2 + $0xb88] sm:$0xff]
    %v1452 = vld [vmem:[#allocation2 + $0xb90] sm:$0xff]
    %v1453 = vld [vmem:[#allocation2 + $0xb98] sm:$0xff]
    %v1454 = vld [vmem:[#allocation2 + $0xba0] sm:$0xff]
    %v1455 = vld [vmem:[#allocation2 + $0xba8] sm:$0xff]
    %v1456 = vld [vmem:[#allocation2 + $0xbb0] sm:$0xff]
    %v1457 = vld [vmem:[#allocation2 + $0xbb8] sm:$0xff]
    %v1458 = vld [vmem:[#allocation2 + $0xbc0] sm:$0xff]
    %v1459 = vld [vmem:[#allocation2 + $0xbc8] sm:$0xff]
    %v1460 = vld [vmem:[#allocation2 + $0xbd0] sm:$0xff]
    %v1461 = vld [vmem:[#allocation2 + $0xbd8] sm:$0xff]
    %v1462 = vld [vmem:[#allocation2 + $0xbe0] sm:$0xff]
    %v1463 = vld [vmem:[#allocation2 + $0xbe8] sm:$0xff]
    %v1464 = vld [vmem:[#allocation2 + $0xbf0] sm:$0xff]
    %v1465 = vld [vmem:[#allocation2 + $0xbf8] sm:$0xff]
    %v1466 = vld [vmem:[#allocation2 + $0xc00] sm:$0xff]
    %v1467 = vld [vmem:[#allocation2 + $0xc08] sm:$0xff]
    %v1468 = vld [vmem:[#allocation2 + $0xc10] sm:$0xff]
    %v1469 = vld [vmem:[#allocation2 + $0xc18] sm:$0xff]
    %v1470 = vld [vmem:[#allocation2 + $0xc20] sm:$0xff]
    %v1471 = vld [vmem:[#allocation2 + $0xc28] sm:$0xff]
    %v1472 = vld [vmem:[#allocation2 + $0xc30] sm:$0xff]
    %v1473 = vld [vmem:[#allocation2 + $0xc38] sm:$0xff]
    %v1474 = vld [vmem:[#allocation2 + $0xc40] sm:$0xff]
    %v1475 = vld [vmem:[#allocation2 + $0xc48] sm:$0xff]
    %v1476 = vld [vmem:[#allocation2 + $0xc50] sm:$0xff]
    %v1477 = vld [vmem:[#allocation2 + $0xc58] sm:$0xff]
    %v1478 = vld [vmem:[#allocation2 + $0xc60] sm:$0xff]
    %v1479 = vld [vmem:[#allocation2 + $0xc68] sm:$0xff]
    %v1480 = vld [vmem:[#allocation2 + $0xc70] sm:$0xff]
    %v1481 = vld [vmem:[#allocation2 + $0xc78] sm:$0xff]
    %v1482 = vld [vmem:[#allocation2 + $0xc80] sm:$0xff]
    %v1483 = vld [vmem:[#allocation2 + $0xc88] sm:$0xff]
    %v1484 = vld [vmem:[#allocation2 + $0xc90] sm:$0xff]
    %v1485 = vld [vmem:[#allocation2 + $0xc98] sm:$0xff]
    %v1486 = vld [vmem:[#allocation2 + $0xca0] sm:$0xff]
    %v1487 = vld [vmem:[#allocation2 + $0xca8] sm:$0xff]
    %v1488 = vld [vmem:[#allocation2 + $0xcb0] sm:$0xff]
    %v1489 = vld [vmem:[#allocation2 + $0xcb8] sm:$0xff]
    %v1490 = vld [vmem:[#allocation2 + $0xcc0] sm:$0xff]
    %v1491 = vld [vmem:[#allocation2 + $0xcc8] sm:$0xff]
    %v1492 = vld [vmem:[#allocation2 + $0xcd0] sm:$0xff]
    %v1493 = vld [vmem:[#allocation2 + $0xcd8] sm:$0xff]
    %v1494 = vld [vmem:[#allocation2 + $0xce0] sm:$0xff]
    %v1495 = vld [vmem:[#allocation2 + $0xce8] sm:$0xff]
    %v1496 = vld [vmem:[#allocation2 + $0xcf0] sm:$0xff]
    %v1497 = vld [vmem:[#allocation2 + $0xcf8] sm:$0xff]
    %v1498 = vld [vmem:[#allocation2 + $0xd00] sm:$0xff]
    %v1499 = vld [vmem:[#allocation2 + $0xd08] sm:$0xff]
    %v1500 = vld [vmem:[#allocation2 + $0xd10] sm:$0xff]
    %v1501 = vld [vmem:[#allocation2 + $0xd18] sm:$0xff]
    %v1502 = vld [vmem:[#allocation2 + $0xd20] sm:$0xff]
    %v1503 = vld [vmem:[#allocation2 + $0xd28] sm:$0xff]
    %v1504 = vld [vmem:[#allocation2 + $0xd30] sm:$0xff]
    %v1505 = vld [vmem:[#allocation2 + $0xd38] sm:$0xff]
    %v1506 = vld [vmem:[#allocation2 + $0xd40] sm:$0xff]
    %v1507 = vld [vmem:[#allocation2 + $0xd48] sm:$0xff]
    %v1508 = vld [vmem:[#allocation2 + $0xd50] sm:$0xff]
    %v1509 = vld [vmem:[#allocation2 + $0xd58] sm:$0xff]
    %v1510 = vld [vmem:[#allocation2 + $0xd60] sm:$0xff]
    %v1511 = vld [vmem:[#allocation2 + $0xd68] sm:$0xff]
    %v1512 = vld [vmem:[#allocation2 + $0xd70] sm:$0xff]
    %v1513 = vld [vmem:[#allocation2 + $0xd78] sm:$0xff]
    %v1514 = vld [vmem:[#allocation2 + $0xd80] sm:$0xff]
    %v1515 = vld [vmem:[#allocation2 + $0xd88] sm:$0xff]
    %v1516 = vld [vmem:[#allocation2 + $0xd90] sm:$0xff]
    %v1517 = vld [vmem:[#allocation2 + $0xd98] sm:$0xff]
    %v1518 = vld [vmem:[#allocation2 + $0xda0] sm:$0xff]
    %v1519 = vld [vmem:[#allocation2 + $0xda8] sm:$0xff]
    %v1520 = vld [vmem:[#allocation2 + $0xdb0] sm:$0xff]
    %v1521 = vld [vmem:[#allocation2 + $0xdb8] sm:$0xff]
    %v1522 = vld [vmem:[#allocation2 + $0xdc0] sm:$0xff]
    %v1523 = vld [vmem:[#allocation2 + $0xdc8] sm:$0xff]
    %v1524 = vld [vmem:[#allocation2 + $0xdd0] sm:$0xff]
    %v1525 = vld [vmem:[#allocation2 + $0xdd8] sm:$0xff]
    %v1526 = vld [vmem:[#allocation2 + $0xde0] sm:$0xff]
    %v1527 = vld [vmem:[#allocation2 + $0xde8] sm:$0xff]
    %v1528 = vld [vmem:[#allocation2 + $0xdf0] sm:$0xff]
    %v1529 = vld [vmem:[#allocation2 + $0xdf8] sm:$0xff]
    %v1530 = vld [vmem:[#allocation2 + $0xe00] sm:$0xff]
    %v1531 = vld [vmem:[#allocation2 + $0xe08] sm:$0xff]
    %v1532 = vld [vmem:[#allocation2 + $0xe10] sm:$0xff]
    %v1533 = vld [vmem:[#allocation2 + $0xe18] sm:$0xff]
    %v1534 = vld [vmem:[#allocation2 + $0xe20] sm:$0xff]
    %v1535 = vld [vmem:[#allocation2 + $0xe28] sm:$0xff]
    %v1536 = vld [vmem:[#allocation2 + $0xe30] sm:$0xff]
    %v1537 = vld [vmem:[#allocation2 + $0xe38] sm:$0xff]
    %v1538 = vld [vmem:[#allocation2 + $0xe40] sm:$0xff]
    %v1539 = vld [vmem:[#allocation2 + $0xe48] sm:$0xff]
    %v1540 = vld [vmem:[#allocation2 + $0xe50] sm:$0xff]
    %v1541 = vld [vmem:[#allocation2 + $0xe58] sm:$0xff]
    %v1542 = vld [vmem:[#allocation2 + $0xe60] sm:$0xff]
    %v1543 = vld [vmem:[#allocation2 + $0xe68] sm:$0xff]
    %v1544 = vld [vmem:[#allocation2 + $0xe70] sm:$0xff]
    %v1545 = vld [vmem:[#allocation2 + $0xe78] sm:$0xff]
    %v1546 = vld [vmem:[#allocation2 + $0xe80] sm:$0xff]
    %v1547 = vld [vmem:[#allocation2 + $0xe88] sm:$0xff]
    %v1548 = vld [vmem:[#allocation2 + $0xe90] sm:$0xff]
    %v1549 = vld [vmem:[#allocation2 + $0xe98] sm:$0xff]
    %v1550 = vld [vmem:[#allocation2 + $0xea0] sm:$0xff]
    %v1551 = vld [vmem:[#allocation2 + $0xea8] sm:$0xff]
    %v1552 = vld [vmem:[#allocation2 + $0xeb0] sm:$0xff]
    %v1553 = vld [vmem:[#allocation2 + $0xeb8] sm:$0xff]
    %v1554 = vld [vmem:[#allocation2 + $0xec0] sm:$0xff]
    %v1555 = vld [vmem:[#allocation2 + $0xec8] sm:$0xff]
    %v1556 = vld [vmem:[#allocation2 + $0xed0] sm:$0xff]
    %v1557 = vld [vmem:[#allocation2 + $0xed8] sm:$0xff]
    %v1558 = vld [vmem:[#allocation2 + $0xee0] sm:$0xff]
    %v1559 = vld [vmem:[#allocation2 + $0xee8] sm:$0xff]
    %v1560 = vld [vmem:[#allocation2 + $0xef0] sm:$0xff]
    %v1561 = vld [vmem:[#allocation2 + $0xef8] sm:$0xff]
    %v1562 = vld [vmem:[#allocation2 + $0xf00] sm:$0xff]
    %v1563 = vld [vmem:[#allocation2 + $0xf08] sm:$0xff]
    %v1564 = vld [vmem:[#allocation2 + $0xf10] sm:$0xff]
    %v1565 = vld [vmem:[#allocation2 + $0xf18] sm:$0xff]
    %v1566 = vld [vmem:[#allocation2 + $0xf20] sm:$0xff]
    %v1567 = vld [vmem:[#allocation2 + $0xf28] sm:$0xff]
    %v1568 = vld [vmem:[#allocation2 + $0xf30] sm:$0xff]
    %v1569 = vld [vmem:[#allocation2 + $0xf38] sm:$0xff]
    %v1570 = vld [vmem:[#allocation2 + $0xf40] sm:$0xff]
    %v1571 = vld [vmem:[#allocation2 + $0xf48] sm:$0xff]
    %v1572 = vld [vmem:[#allocation2 + $0xf50] sm:$0xff]
    %v1573 = vld [vmem:[#allocation2 + $0xf58] sm:$0xff]
    %v1574 = vld [vmem:[#allocation2 + $0xf60] sm:$0xff]
    %v1575 = vld [vmem:[#allocation2 + $0xf68] sm:$0xff]
    %v1576 = vld [vmem:[#allocation2 + $0xf70] sm:$0xff]
    %v1577 = vld [vmem:[#allocation2 + $0xf78] sm:$0xff]
    %v1578 = vld [vmem:[#allocation2 + $0xf80] sm:$0xff]
    %v1579 = vld [vmem:[#allocation2 + $0xf88] sm:$0xff]
    %v1580 = vld [vmem:[#allocation2 + $0xf90] sm:$0xff]
    %v1581 = vld [vmem:[#allocation2 + $0xf98] sm:$0xff]
    %v1582 = vld [vmem:[#allocation2 + $0xfa0] sm:$0xff]
    %v1583 = vld [vmem:[#allocation2 + $0xfa8] sm:$0xff]
    %v1584 = vld [vmem:[#allocation2 + $0xfb0] sm:$0xff]
    %v1585 = vld [vmem:[#allocation2 + $0xfb8] sm:$0xff]
    %v1586 = vld [vmem:[#allocation2 + $0xfc0] sm:$0xff]
    %v1587 = vld [vmem:[#allocation2 + $0xfc8] sm:$0xff]
    %v1588 = vld [vmem:[#allocation2 + $0xfd0] sm:$0xff]
    %v1589 = vld [vmem:[#allocation2 + $0xfd8] sm:$0xff]
    %v1590 = vld [vmem:[#allocation2 + $0xfe0] sm:$0xff]
    %v1591 = vld [vmem:[#allocation2 + $0xfe8] sm:$0xff]
    %v1592 = vld [vmem:[#allocation2 + $0xff0] sm:$0xff]
    %v1593 = vld [vmem:[#allocation2 + $0xff8] sm:$0xff]
    %v1594 = vld [vmem:[%s10] sm:$0xff]
    %v1596 = vperm.slane %v1594, 0
    %v1597 = vperm.slane %v1594, 1
    %v1598 = vperm.slane %v1594, 2
    %v1599 = vperm.slane %v1594, 3
    %v1600 = vperm.slane %v1594, 4
    %v1601 = vperm.slane %v1594, 5
    %v1602 = vperm.slane %v1594, 6
    %v1603 = vperm.slane %v1594, 7
    %1612 = vmatpush.msra.mxu0 %v1202
    %1613 = vmatpush.msra.mxu0 %v1194
    %1614 = vmatpush.msra.mxu0 %v1186
    %1615 = vmatpush.msra.mxu0 %v1178
    %1616 = vmatpush.msra.mxu0 %v1170
    %1617 = vmatpush.msra.mxu0 %v1162
    %1618 = vmatpush.msra.mxu0 %v1154
    %1619 = vmatpush.msra.mxu0 %v1146
    %1620 = vmatpush.msra.mxu0 %v1138
    %1621 = vmatpush.msra.mxu0 %v1130
    %1622 = vmatpush.msra.mxu0 %v1122
    %1623 = vmatpush.msra.mxu0 %v1114
    %1624 = vmatpush.msra.mxu0 %v1106
    %1625 = vmatpush.msra.mxu0 %v1098
    %1626 = vmatpush.msra.mxu0 %v1090
    %1627 = vmatpush.msra.mxu0 %v1082
    %1628 = vmatmul.f32.gmra.mxu0 %v1066
    %v1629 = vpop.f32.mrf.mxu0
    %v1630 = vadd.f32 %v1596, %v1629
    %1631 = vmatmul.f32.gmra.mxu0 %v1070
    %v1632 = vpop.f32.mrf.mxu0
    %v1633 = vadd.f32 %v1596, %v1632
    %1634 = vmatmul.f32.gmra.mxu0 %v1074
    %v1635 = vpop.f32.mrf.mxu0
    %v1636 = vadd.f32 %v1596, %v1635
    %1637 = vmatmul.f32.gmra.mxu0 %v1078
    %v1638 = vpop.f32.mrf.mxu0
    %v1639 = vadd.f32 %v1596, %v1638
    %1640 = vdwg.mxu0
    %1641 = vmatpush.msra.mxu0 %v1330
    %1642 = vmatpush.msra.mxu0 %v1322
    %1643 = vmatpush.msra.mxu0 %v1314
    %1644 = vmatpush.msra.mxu0 %v1306
    %1645 = vmatpush.msra.mxu0 %v1298
    %1646 = vmatpush.msra.mxu0 %v1290
    %1647 = vmatpush.msra.mxu0 %v1282
    %1648 = vmatpush.msra.mxu0 %v1274
    %1649 = vmatpush.msra.mxu0 %v1266
    %1650 = vmatpush.msra.mxu0 %v1258
    %1651 = vmatpush.msra.mxu0 %v1250
    %1652 = vmatpush.msra.mxu0 %v1242
    %1653 = vmatpush.msra.mxu0 %v1234
    %1654 = vmatpush.msra.mxu0 %v1226
    %1655 = vmatpush.msra.mxu0 %v1218
    %1656 = vmatpush.msra.mxu0 %v1210
    %1657 = vmatmul.f32.gmra.mxu0 %v1067
    %v1658 = vpop.f32.mrf.mxu0
    %v1659 = vadd.f32 %v1630, %v1658
    %1660 = vmatmul.f32.gmra.mxu0 %v1071
    %v1661 = vpop.f32.mrf.mxu0
    %v1662 = vadd.f32 %v1633, %v1661
    %1663 = vmatmul.f32.gmra.mxu0 %v1075
    %v1664 = vpop.f32.mrf.mxu0
    %v1665 = vadd.f32 %v1636, %v1664
    %1666 = vmatmul.f32.gmra.mxu0 %v1079
    %v1667 = vpop.f32.mrf.mxu0
    %v1668 = vadd.f32 %v1639, %v1667
    %1669 = vdwg.mxu0
    %1670 = vmatpush.msra.mxu0 %v1458
    %1671 = vmatpush.msra.mxu0 %v1450
    %1672 = vmatpush.msra.mxu0 %v1442
    %1673 = vmatpush.msra.mxu0 %v1434
    %1674 = vmatpush.msra.mxu0 %v1426
    %1675 = vmatpush.msra.mxu0 %v1418
    %1676 = vmatpush.msra.mxu0 %v1410
    %1677 = vmatpush.msra.mxu0 %v1402
    %1678 = vmatpush.msra.mxu0 %v1394
    %1679 = vmatpush.msra.mxu0 %v1386
    %1680 = vmatpush.msra.mxu0 %v1378
    %1681 = vmatpush.msra.mxu0 %v1370
    %1682 = vmatpush.msra.mxu0 %v1362
    %1683 = vmatpush.msra.mxu0 %v1354
    %1684 = vmatpush.msra.mxu0 %v1346
    %1685 = vmatpush.msra.mxu0 %v1338
    %1686 = vmatmul.f32.gmra.mxu0 %v1068
    %v1687 = vpop.f32.mrf.mxu0
    %v1688 = vadd.f32 %v1659, %v1687
    %1689 = vmatmul.f32.gmra.mxu0 %v1072
    %v1690 = vpop.f32.mrf.mxu0
    %v1691 = vadd.f32 %v1662, %v1690
    %1692 = vmatmul.f32.gmra.mxu0 %v1076
    %v1693 = vpop.f32.mrf.mxu0
    %v1694 = vadd.f32 %v1665, %v1693
    %1695 = vmatmul.f32.gmra.mxu0 %v1080
    %v1696 = vpop.f32.mrf.mxu0
    %v1697 = vadd.f32 %v1668, %v1696
    %1698 = vdwg.mxu0
    %1699 = vmatpush.msra.mxu0 %v1586
    %1700 = vmatpush.msra.mxu0 %v1578
    %1701 = vmatpush.msra.mxu0 %v1570
    %1702 = vmatpush.msra.mxu0 %v1562
    %1703 = vmatpush.msra.mxu0 %v1554
    %1704 = vmatpush.msra.mxu0 %v1546
    %1705 = vmatpush.msra.mxu0 %v1538
    %1706 = vmatpush.msra.mxu0 %v1530
    %1707 = vmatpush.msra.mxu0 %v1522
    %1708 = vmatpush.msra.mxu0 %v1514
    %1709 = vmatpush.msra.mxu0 %v1506
    %1710 = vmatpush.msra.mxu0 %v1498
    %1711 = vmatpush.msra.mxu0 %v1490
    %1712 = vmatpush.msra.mxu0 %v1482
    %1713 = vmatpush.msra.mxu0 %v1474
    %1714 = vmatpush.msra.mxu0 %v1466
    %1715 = vmatmul.f32.gmra.mxu0 %v1069
    %v1716 = vpop.f32.mrf.mxu0
    %v1717 = vadd.f32 %v1688, %v1716
    %1718 = vmatmul.f32.gmra.mxu0 %v1073
    %v1719 = vpop.f32.mrf.mxu0
    %v1720 = vadd.f32 %v1691, %v1719
    %1721 = vmatmul.f32.gmra.mxu0 %v1077
    %v1722 = vpop.f32.mrf.mxu0
    %v1723 = vadd.f32 %v1694, %v1722
    %1724 = vmatmul.f32.gmra.mxu0 %v1081
    %v1725 = vpop.f32.mrf.mxu0
    %v1726 = vadd.f32 %v1697, %v1725
    %1727 = vdwg.mxu0
    %1728 = vmatpush.msra.mxu0 %v1203
    %1729 = vmatpush.msra.mxu0 %v1195
    %1730 = vmatpush.msra.mxu0 %v1187
    %1731 = vmatpush.msra.mxu0 %v1179
    %1732 = vmatpush.msra.mxu0 %v1171
    %1733 = vmatpush.msra.mxu0 %v1163
    %1734 = vmatpush.msra.mxu0 %v1155
    %1735 = vmatpush.msra.mxu0 %v1147
    %1736 = vmatpush.msra.mxu0 %v1139
    %1737 = vmatpush.msra.mxu0 %v1131
    %1738 = vmatpush.msra.mxu0 %v1123
    %1739 = vmatpush.msra.mxu0 %v1115
    %1740 = vmatpush.msra.mxu0 %v1107
    %1741 = vmatpush.msra.mxu0 %v1099
    %1742 = vmatpush.msra.mxu0 %v1091
    %1743 = vmatpush.msra.mxu0 %v1083
    %1744 = vmatmul.f32.gmra.mxu0 %v1066
    %v1745 = vpop.f32.mrf.mxu0
    %v1746 = vadd.f32 %v1597, %v1745
    %1747 = vmatmul.f32.gmra.mxu0 %v1070
    %v1748 = vpop.f32.mrf.mxu0
    %v1749 = vadd.f32 %v1597, %v1748
    %1750 = vmatmul.f32.gmra.mxu0 %v1074
    %v1751 = vpop.f32.mrf.mxu0
    %v1752 = vadd.f32 %v1597, %v1751
    %1753 = vmatmul.f32.gmra.mxu0 %v1078
    %v1754 = vpop.f32.mrf.mxu0
    %v1755 = vadd.f32 %v1597, %v1754
    %1756 = vdwg.mxu0
    %1757 = vmatpush.msra.mxu0 %v1331
    %1758 = vmatpush.msra.mxu0 %v1323
    %1759 = vmatpush.msra.mxu0 %v1315
    %1760 = vmatpush.msra.mxu0 %v1307
    %1761 = vmatpush.msra.mxu0 %v1299
    %1762 = vmatpush.msra.mxu0 %v1291
    %1763 = vmatpush.msra.mxu0 %v1283
    %1764 = vmatpush.msra.mxu0 %v1275
    %1765 = vmatpush.msra.mxu0 %v1267
    %1766 = vmatpush.msra.mxu0 %v1259
    %1767 = vmatpush.msra.mxu0 %v1251
    %1768 = vmatpush.msra.mxu0 %v1243
    %1769 = vmatpush.msra.mxu0 %v1235
    %1770 = vmatpush.msra.mxu0 %v1227
    %1771 = vmatpush.msra.mxu0 %v1219
    %1772 = vmatpush.msra.mxu0 %v1211
    %1773 = vmatmul.f32.gmra.mxu0 %v1067
    %v1774 = vpop.f32.mrf.mxu0
    %v1775 = vadd.f32 %v1746, %v1774
    %1776 = vmatmul.f32.gmra.mxu0 %v1071
    %v1777 = vpop.f32.mrf.mxu0
    %v1778 = vadd.f32 %v1749, %v1777
    %1779 = vmatmul.f32.gmra.mxu0 %v1075
    %v1780 = vpop.f32.mrf.mxu0
    %v1781 = vadd.f32 %v1752, %v1780
    %1782 = vmatmul.f32.gmra.mxu0 %v1079
    %v1783 = vpop.f32.mrf.mxu0
    %v1784 = vadd.f32 %v1755, %v1783
    %1785 = vdwg.mxu0
    %1786 = vmatpush.msra.mxu0 %v1459
    %1787 = vmatpush.msra.mxu0 %v1451
    %1788 = vmatpush.msra.mxu0 %v1443
    %1789 = vmatpush.msra.mxu0 %v1435
    %1790 = vmatpush.msra.mxu0 %v1427
    %1791 = vmatpush.msra.mxu0 %v1419
    %1792 = vmatpush.msra.mxu0 %v1411
    %1793 = vmatpush.msra.mxu0 %v1403
    %1794 = vmatpush.msra.mxu0 %v1395
    %1795 = vmatpush.msra.mxu0 %v1387
    %1796 = vmatpush.msra.mxu0 %v1379
    %1797 = vmatpush.msra.mxu0 %v1371
    %1798 = vmatpush.msra.mxu0 %v1363
    %1799 = vmatpush.msra.mxu0 %v1355
    %1800 = vmatpush.msra.mxu0 %v1347
    %1801 = vmatpush.msra.mxu0 %v1339
    %1802 = vmatmul.f32.gmra.mxu0 %v1068
    %v1803 = vpop.f32.mrf.mxu0
    %v1804 = vadd.f32 %v1775, %v1803
    %1805 = vmatmul.f32.gmra.mxu0 %v1072
    %v1806 = vpop.f32.mrf.mxu0
    %v1807 = vadd.f32 %v1778, %v1806
    %1808 = vmatmul.f32.gmra.mxu0 %v1076
    %v1809 = vpop.f32.mrf.mxu0
    %v1810 = vadd.f32 %v1781, %v1809
    %1811 = vmatmul.f32.gmra.mxu0 %v1080
    %v1812 = vpop.f32.mrf.mxu0
    %v1813 = vadd.f32 %v1784, %v1812
    %1814 = vdwg.mxu0
    %1815 = vmatpush.msra.mxu0 %v1587
    %1816 = vmatpush.msra.mxu0 %v1579
    %1817 = vmatpush.msra.mxu0 %v1571
    %1818 = vmatpush.msra.mxu0 %v1563
    %1819 = vmatpush.msra.mxu0 %v1555
    %1820 = vmatpush.msra.mxu0 %v1547
    %1821 = vmatpush.msra.mxu0 %v1539
    %1822 = vmatpush.msra.mxu0 %v1531
    %1823 = vmatpush.msra.mxu0 %v1523
    %1824 = vmatpush.msra.mxu0 %v1515
    %1825 = vmatpush.msra.mxu0 %v1507
    %1826 = vmatpush.msra.mxu0 %v1499
    %1827 = vmatpush.msra.mxu0 %v1491
    %1828 = vmatpush.msra.mxu0 %v1483
    %1829 = vmatpush.msra.mxu0 %v1475
    %1830 = vmatpush.msra.mxu0 %v1467
    %1831 = vmatmul.f32.gmra.mxu0 %v1069
    %v1832 = vpop.f32.mrf.mxu0
    %v1833 = vadd.f32 %v1804, %v1832
    %1834 = vmatmul.f32.gmra.mxu0 %v1073
    %v1835 = vpop.f32.mrf.mxu0
    %v1836 = vadd.f32 %v1807, %v1835
    %1837 = vmatmul.f32.gmra.mxu0 %v1077
    %v1838 = vpop.f32.mrf.mxu0
    %v1839 = vadd.f32 %v1810, %v1838
    %1840 = vmatmul.f32.gmra.mxu0 %v1081
    %v1841 = vpop.f32.mrf.mxu0
    %v1842 = vadd.f32 %v1813, %v1841
    %1843 = vdwg.mxu0
    %1844 = vmatpush.msra.mxu0 %v1204
    %1845 = vmatpush.msra.mxu0 %v1196
    %1846 = vmatpush.msra.mxu0 %v1188
    %1847 = vmatpush.msra.mxu0 %v1180
    %1848 = vmatpush.msra.mxu0 %v1172
    %1849 = vmatpush.msra.mxu0 %v1164
    %1850 = vmatpush.msra.mxu0 %v1156
    %1851 = vmatpush.msra.mxu0 %v1148
    %1852 = vmatpush.msra.mxu0 %v1140
    %1853 = vmatpush.msra.mxu0 %v1132
    %1854 = vmatpush.msra.mxu0 %v1124
    %1855 = vmatpush.msra.mxu0 %v1116
    %1856 = vmatpush.msra.mxu0 %v1108
    %1857 = vmatpush.msra.mxu0 %v1100
    %1858 = vmatpush.msra.mxu0 %v1092
    %1859 = vmatpush.msra.mxu0 %v1084
    %1860 = vmatmul.f32.gmra.mxu0 %v1066
    %v1861 = vpop.f32.mrf.mxu0
    %v1862 = vadd.f32 %v1598, %v1861
    %1863 = vmatmul.f32.gmra.mxu0 %v1070
    %v1864 = vpop.f32.mrf.mxu0
    %v1865 = vadd.f32 %v1598, %v1864
    %1866 = vmatmul.f32.gmra.mxu0 %v1074
    %v1867 = vpop.f32.mrf.mxu0
    %v1868 = vadd.f32 %v1598, %v1867
    %1869 = vmatmul.f32.gmra.mxu0 %v1078
    %v1870 = vpop.f32.mrf.mxu0
    %v1871 = vadd.f32 %v1598, %v1870
    %1872 = vdwg.mxu0
    %1873 = vmatpush.msra.mxu0 %v1332
    %1874 = vmatpush.msra.mxu0 %v1324
    %1875 = vmatpush.msra.mxu0 %v1316
    %1876 = vmatpush.msra.mxu0 %v1308
    %1877 = vmatpush.msra.mxu0 %v1300
    %1878 = vmatpush.msra.mxu0 %v1292
    %1879 = vmatpush.msra.mxu0 %v1284
    %1880 = vmatpush.msra.mxu0 %v1276
    %1881 = vmatpush.msra.mxu0 %v1268
    %1882 = vmatpush.msra.mxu0 %v1260
    %1883 = vmatpush.msra.mxu0 %v1252
    %1884 = vmatpush.msra.mxu0 %v1244
    %1885 = vmatpush.msra.mxu0 %v1236
    %1886 = vmatpush.msra.mxu0 %v1228
    %1887 = vmatpush.msra.mxu0 %v1220
    %1888 = vmatpush.msra.mxu0 %v1212
    %1889 = vmatmul.f32.gmra.mxu0 %v1067
    %v1890 = vpop.f32.mrf.mxu0
    %v1891 = vadd.f32 %v1862, %v1890
    %1892 = vmatmul.f32.gmra.mxu0 %v1071
    %v1893 = vpop.f32.mrf.mxu0
    %v1894 = vadd.f32 %v1865, %v1893
    %1895 = vmatmul.f32.gmra.mxu0 %v1075
    %v1896 = vpop.f32.mrf.mxu0
    %v1897 = vadd.f32 %v1868, %v1896
    %1898 = vmatmul.f32.gmra.mxu0 %v1079
    %v1899 = vpop.f32.mrf.mxu0
    %v1900 = vadd.f32 %v1871, %v1899
    %1901 = vdwg.mxu0
    %1902 = vmatpush.msra.mxu0 %v1460
    %1903 = vmatpush.msra.mxu0 %v1452
    %1904 = vmatpush.msra.mxu0 %v1444
    %1905 = vmatpush.msra.mxu0 %v1436
    %1906 = vmatpush.msra.mxu0 %v1428
    %1907 = vmatpush.msra.mxu0 %v1420
    %1908 = vmatpush.msra.mxu0 %v1412
    %1909 = vmatpush.msra.mxu0 %v1404
    %1910 = vmatpush.msra.mxu0 %v1396
    %1911 = vmatpush.msra.mxu0 %v1388
    %1912 = vmatpush.msra.mxu0 %v1380
    %1913 = vmatpush.msra.mxu0 %v1372
    %1914 = vmatpush.msra.mxu0 %v1364
    %1915 = vmatpush.msra.mxu0 %v1356
    %1916 = vmatpush.msra.mxu0 %v1348
    %1917 = vmatpush.msra.mxu0 %v1340
    %1918 = vmatmul.f32.gmra.mxu0 %v1068
    %v1919 = vpop.f32.mrf.mxu0
    %v1920 = vadd.f32 %v1891, %v1919
    %1921 = vmatmul.f32.gmra.mxu0 %v1072
    %v1922 = vpop.f32.mrf.mxu0
    %v1923 = vadd.f32 %v1894, %v1922
    %1924 = vmatmul.f32.gmra.mxu0 %v1076
    %v1925 = vpop.f32.mrf.mxu0
    %v1926 = vadd.f32 %v1897, %v1925
    %1927 = vmatmul.f32.gmra.mxu0 %v1080
    %v1928 = vpop.f32.mrf.mxu0
    %v1929 = vadd.f32 %v1900, %v1928
    %1930 = vdwg.mxu0
    %1931 = vmatpush.msra.mxu0 %v1588
    %1932 = vmatpush.msra.mxu0 %v1580
    %1933 = vmatpush.msra.mxu0 %v1572
    %1934 = vmatpush.msra.mxu0 %v1564
    %1935 = vmatpush.msra.mxu0 %v1556
    %1936 = vmatpush.msra.mxu0 %v1548
    %1937 = vmatpush.msra.mxu0 %v1540
    %1938 = vmatpush.msra.mxu0 %v1532
    %1939 = vmatpush.msra.mxu0 %v1524
    %1940 = vmatpush.msra.mxu0 %v1516
    %1941 = vmatpush.msra.mxu0 %v1508
    %1942 = vmatpush.msra.mxu0 %v1500
    %1943 = vmatpush.msra.mxu0 %v1492
    %1944 = vmatpush.msra.mxu0 %v1484
    %1945 = vmatpush.msra.mxu0 %v1476
    %1946 = vmatpush.msra.mxu0 %v1468
    %1947 = vmatmul.f32.gmra.mxu0 %v1069
    %v1948 = vpop.f32.mrf.mxu0
    %v1949 = vadd.f32 %v1920, %v1948
    %1950 = vmatmul.f32.gmra.mxu0 %v1073
    %v1951 = vpop.f32.mrf.mxu0
    %v1952 = vadd.f32 %v1923, %v1951
    %1953 = vmatmul.f32.gmra.mxu0 %v1077
    %v1954 = vpop.f32.mrf.mxu0
    %v1955 = vadd.f32 %v1926, %v1954
    %1956 = vmatmul.f32.gmra.mxu0 %v1081
    %v1957 = vpop.f32.mrf.mxu0
    %v1958 = vadd.f32 %v1929, %v1957
    %1959 = vdwg.mxu0
    %1960 = vmatpush.msra.mxu0 %v1205
    %1961 = vmatpush.msra.mxu0 %v1197
    %1962 = vmatpush.msra.mxu0 %v1189
    %1963 = vmatpush.msra.mxu0 %v1181
    %1964 = vmatpush.msra.mxu0 %v1173
    %1965 = vmatpush.msra.mxu0 %v1165
    %1966 = vmatpush.msra.mxu0 %v1157
    %1967 = vmatpush.msra.mxu0 %v1149
    %1968 = vmatpush.msra.mxu0 %v1141
    %1969 = vmatpush.msra.mxu0 %v1133
    %1970 = vmatpush.msra.mxu0 %v1125
    %1971 = vmatpush.msra.mxu0 %v1117
    %1972 = vmatpush.msra.mxu0 %v1109
    %1973 = vmatpush.msra.mxu0 %v1101
    %1974 = vmatpush.msra.mxu0 %v1093
    %1975 = vmatpush.msra.mxu0 %v1085
    %1976 = vmatmul.f32.gmra.mxu0 %v1066
    %v1977 = vpop.f32.mrf.mxu0
    %v1978 = vadd.f32 %v1599, %v1977
    %1979 = vmatmul.f32.gmra.mxu0 %v1070
    %v1980 = vpop.f32.mrf.mxu0
    %v1981 = vadd.f32 %v1599, %v1980
    %1982 = vmatmul.f32.gmra.mxu0 %v1074
    %v1983 = vpop.f32.mrf.mxu0
    %v1984 = vadd.f32 %v1599, %v1983
    %1985 = vmatmul.f32.gmra.mxu0 %v1078
    %v1986 = vpop.f32.mrf.mxu0
    %v1987 = vadd.f32 %v1599, %v1986
    %1988 = vdwg.mxu0
    %1989 = vmatpush.msra.mxu0 %v1333
    %1990 = vmatpush.msra.mxu0 %v1325
    %1991 = vmatpush.msra.mxu0 %v1317
    %1992 = vmatpush.msra.mxu0 %v1309
    %1993 = vmatpush.msra.mxu0 %v1301
    %1994 = vmatpush.msra.mxu0 %v1293
    %1995 = vmatpush.msra.mxu0 %v1285
    %1996 = vmatpush.msra.mxu0 %v1277
    %1997 = vmatpush.msra.mxu0 %v1269
    %1998 = vmatpush.msra.mxu0 %v1261
    %1999 = vmatpush.msra.mxu0 %v1253
    %2000 = vmatpush.msra.mxu0 %v1245
    %2001 = vmatpush.msra.mxu0 %v1237
    %2002 = vmatpush.msra.mxu0 %v1229
    %2003 = vmatpush.msra.mxu0 %v1221
    %2004 = vmatpush.msra.mxu0 %v1213
    %2005 = vmatmul.f32.gmra.mxu0 %v1067
    %v2006 = vpop.f32.mrf.mxu0
    %v2007 = vadd.f32 %v1978, %v2006
    %2008 = vmatmul.f32.gmra.mxu0 %v1071
    %v2009 = vpop.f32.mrf.mxu0
    %v2010 = vadd.f32 %v1981, %v2009
    %2011 = vmatmul.f32.gmra.mxu0 %v1075
    %v2012 = vpop.f32.mrf.mxu0
    %v2013 = vadd.f32 %v1984, %v2012
    %2014 = vmatmul.f32.gmra.mxu0 %v1079
    %v2015 = vpop.f32.mrf.mxu0
    %v2016 = vadd.f32 %v1987, %v2015
    %2017 = vdwg.mxu0
    %2018 = vmatpush.msra.mxu0 %v1461
    %2019 = vmatpush.msra.mxu0 %v1453
    %2020 = vmatpush.msra.mxu0 %v1445
    %2021 = vmatpush.msra.mxu0 %v1437
    %2022 = vmatpush.msra.mxu0 %v1429
    %2023 = vmatpush.msra.mxu0 %v1421
    %2024 = vmatpush.msra.mxu0 %v1413
    %2025 = vmatpush.msra.mxu0 %v1405
    %2026 = vmatpush.msra.mxu0 %v1397
    %2027 = vmatpush.msra.mxu0 %v1389
    %2028 = vmatpush.msra.mxu0 %v1381
    %2029 = vmatpush.msra.mxu0 %v1373
    %2030 = vmatpush.msra.mxu0 %v1365
    %2031 = vmatpush.msra.mxu0 %v1357
    %2032 = vmatpush.msra.mxu0 %v1349
    %2033 = vmatpush.msra.mxu0 %v1341
    %2034 = vmatmul.f32.gmra.mxu0 %v1068
    %v2035 = vpop.f32.mrf.mxu0
    %v2036 = vadd.f32 %v2007, %v2035
    %2037 = vmatmul.f32.gmra.mxu0 %v1072
    %v2038 = vpop.f32.mrf.mxu0
    %v2039 = vadd.f32 %v2010, %v2038
    %2040 = vmatmul.f32.gmra.mxu0 %v1076
    %v2041 = vpop.f32.mrf.mxu0
    %v2042 = vadd.f32 %v2013, %v2041
    %2043 = vmatmul.f32.gmra.mxu0 %v1080
    %v2044 = vpop.f32.mrf.mxu0
    %v2045 = vadd.f32 %v2016, %v2044
    %2046 = vdwg.mxu0
    %2047 = vmatpush.msra.mxu0 %v1589
    %2048 = vmatpush.msra.mxu0 %v1581
    %2049 = vmatpush.msra.mxu0 %v1573
    %2050 = vmatpush.msra.mxu0 %v1565
    %2051 = vmatpush.msra.mxu0 %v1557
    %2052 = vmatpush.msra.mxu0 %v1549
    %2053 = vmatpush.msra.mxu0 %v1541
    %2054 = vmatpush.msra.mxu0 %v1533
    %2055 = vmatpush.msra.mxu0 %v1525
    %2056 = vmatpush.msra.mxu0 %v1517
    %2057 = vmatpush.msra.mxu0 %v1509
    %2058 = vmatpush.msra.mxu0 %v1501
    %2059 = vmatpush.msra.mxu0 %v1493
    %2060 = vmatpush.msra.mxu0 %v1485
    %2061 = vmatpush.msra.mxu0 %v1477
    %2062 = vmatpush.msra.mxu0 %v1469
    %2063 = vmatmul.f32.gmra.mxu0 %v1069
    %v2064 = vpop.f32.mrf.mxu0
    %v2065 = vadd.f32 %v2036, %v2064
    %2066 = vmatmul.f32.gmra.mxu0 %v1073
    %v2067 = vpop.f32.mrf.mxu0
    %v2068 = vadd.f32 %v2039, %v2067
    %2069 = vmatmul.f32.gmra.mxu0 %v1077
    %v2070 = vpop.f32.mrf.mxu0
    %v2071 = vadd.f32 %v2042, %v2070
    %2072 = vmatmul.f32.gmra.mxu0 %v1081
    %v2073 = vpop.f32.mrf.mxu0
    %v2074 = vadd.f32 %v2045, %v2073
    %2075 = vdwg.mxu0
    %2076 = vmatpush.msra.mxu0 %v1206
    %2077 = vmatpush.msra.mxu0 %v1198
    %2078 = vmatpush.msra.mxu0 %v1190
    %2079 = vmatpush.msra.mxu0 %v1182
    %2080 = vmatpush.msra.mxu0 %v1174
    %2081 = vmatpush.msra.mxu0 %v1166
    %2082 = vmatpush.msra.mxu0 %v1158
    %2083 = vmatpush.msra.mxu0 %v1150
    %2084 = vmatpush.msra.mxu0 %v1142
    %2085 = vmatpush.msra.mxu0 %v1134
    %2086 = vmatpush.msra.mxu0 %v1126
    %2087 = vmatpush.msra.mxu0 %v1118
    %2088 = vmatpush.msra.mxu0 %v1110
    %2089 = vmatpush.msra.mxu0 %v1102
    %2090 = vmatpush.msra.mxu0 %v1094
    %2091 = vmatpush.msra.mxu0 %v1086
    %2092 = vmatmul.f32.gmra.mxu0 %v1066
    %v2093 = vpop.f32.mrf.mxu0
    %v2094 = vadd.f32 %v1600, %v2093
    %2095 = vmatmul.f32.gmra.mxu0 %v1070
    %v2096 = vpop.f32.mrf.mxu0
    %v2097 = vadd.f32 %v1600, %v2096
    %2098 = vmatmul.f32.gmra.mxu0 %v1074
    %v2099 = vpop.f32.mrf.mxu0
    %v2100 = vadd.f32 %v1600, %v2099
    %2101 = vmatmul.f32.gmra.mxu0 %v1078
    %v2102 = vpop.f32.mrf.mxu0
    %v2103 = vadd.f32 %v1600, %v2102
    %2104 = vdwg.mxu0
    %2105 = vmatpush.msra.mxu0 %v1334
    %2106 = vmatpush.msra.mxu0 %v1326
    %2107 = vmatpush.msra.mxu0 %v1318
    %2108 = vmatpush.msra.mxu0 %v1310
    %2109 = vmatpush.msra.mxu0 %v1302
    %2110 = vmatpush.msra.mxu0 %v1294
    %2111 = vmatpush.msra.mxu0 %v1286
    %2112 = vmatpush.msra.mxu0 %v1278
    %2113 = vmatpush.msra.mxu0 %v1270
    %2114 = vmatpush.msra.mxu0 %v1262
    %2115 = vmatpush.msra.mxu0 %v1254
    %2116 = vmatpush.msra.mxu0 %v1246
    %2117 = vmatpush.msra.mxu0 %v1238
    %2118 = vmatpush.msra.mxu0 %v1230
    %2119 = vmatpush.msra.mxu0 %v1222
    %2120 = vmatpush.msra.mxu0 %v1214
    %2121 = vmatmul.f32.gmra.mxu0 %v1067
    %v2122 = vpop.f32.mrf.mxu0
    %v2123 = vadd.f32 %v2094, %v2122
    %2124 = vmatmul.f32.gmra.mxu0 %v1071
    %v2125 = vpop.f32.mrf.mxu0
    %v2126 = vadd.f32 %v2097, %v2125
    %2127 = vmatmul.f32.gmra.mxu0 %v1075
    %v2128 = vpop.f32.mrf.mxu0
    %v2129 = vadd.f32 %v2100, %v2128
    %2130 = vmatmul.f32.gmra.mxu0 %v1079
    %v2131 = vpop.f32.mrf.mxu0
    %v2132 = vadd.f32 %v2103, %v2131
    %2133 = vdwg.mxu0
    %2134 = vmatpush.msra.mxu0 %v1462
    %2135 = vmatpush.msra.mxu0 %v1454
    %2136 = vmatpush.msra.mxu0 %v1446
    %2137 = vmatpush.msra.mxu0 %v1438
    %2138 = vmatpush.msra.mxu0 %v1430
    %2139 = vmatpush.msra.mxu0 %v1422
    %2140 = vmatpush.msra.mxu0 %v1414
    %2141 = vmatpush.msra.mxu0 %v1406
    %2142 = vmatpush.msra.mxu0 %v1398
    %2143 = vmatpush.msra.mxu0 %v1390
    %2144 = vmatpush.msra.mxu0 %v1382
    %2145 = vmatpush.msra.mxu0 %v1374
    %2146 = vmatpush.msra.mxu0 %v1366
    %2147 = vmatpush.msra.mxu0 %v1358
    %2148 = vmatpush.msra.mxu0 %v1350
    %2149 = vmatpush.msra.mxu0 %v1342
    %2150 = vmatmul.f32.gmra.mxu0 %v1068
    %v2151 = vpop.f32.mrf.mxu0
    %v2152 = vadd.f32 %v2123, %v2151
    %2153 = vmatmul.f32.gmra.mxu0 %v1072
    %v2154 = vpop.f32.mrf.mxu0
    %v2155 = vadd.f32 %v2126, %v2154
    %2156 = vmatmul.f32.gmra.mxu0 %v1076
    %v2157 = vpop.f32.mrf.mxu0
    %v2158 = vadd.f32 %v2129, %v2157
    %2159 = vmatmul.f32.gmra.mxu0 %v1080
    %v2160 = vpop.f32.mrf.mxu0
    %v2161 = vadd.f32 %v2132, %v2160
    %2162 = vdwg.mxu0
    %2163 = vmatpush.msra.mxu0 %v1590
    %2164 = vmatpush.msra.mxu0 %v1582
    %2165 = vmatpush.msra.mxu0 %v1574
    %2166 = vmatpush.msra.mxu0 %v1566
    %2167 = vmatpush.msra.mxu0 %v1558
    %2168 = vmatpush.msra.mxu0 %v1550
    %2169 = vmatpush.msra.mxu0 %v1542
    %2170 = vmatpush.msra.mxu0 %v1534
    %2171 = vmatpush.msra.mxu0 %v1526
    %2172 = vmatpush.msra.mxu0 %v1518
    %2173 = vmatpush.msra.mxu0 %v1510
    %2174 = vmatpush.msra.mxu0 %v1502
    %2175 = vmatpush.msra.mxu0 %v1494
    %2176 = vmatpush.msra.mxu0 %v1486
    %2177 = vmatpush.msra.mxu0 %v1478
    %2178 = vmatpush.msra.mxu0 %v1470
    %2179 = vmatmul.f32.gmra.mxu0 %v1069
    %v2180 = vpop.f32.mrf.mxu0
    %v2181 = vadd.f32 %v2152, %v2180
    %2182 = vmatmul.f32.gmra.mxu0 %v1073
    %v2183 = vpop.f32.mrf.mxu0
    %v2184 = vadd.f32 %v2155, %v2183
    %2185 = vmatmul.f32.gmra.mxu0 %v1077
    %v2186 = vpop.f32.mrf.mxu0
    %v2187 = vadd.f32 %v2158, %v2186
    %2188 = vmatmul.f32.gmra.mxu0 %v1081
    %v2189 = vpop.f32.mrf.mxu0
    %v2190 = vadd.f32 %v2161, %v2189
    %2191 = vdwg.mxu0
    %2192 = vmatpush.msra.mxu0 %v1207
    %2193 = vmatpush.msra.mxu0 %v1199
    %2194 = vmatpush.msra.mxu0 %v1191
    %2195 = vmatpush.msra.mxu0 %v1183
    %2196 = vmatpush.msra.mxu0 %v1175
    %2197 = vmatpush.msra.mxu0 %v1167
    %2198 = vmatpush.msra.mxu0 %v1159
    %2199 = vmatpush.msra.mxu0 %v1151
    %2200 = vmatpush.msra.mxu0 %v1143
    %2201 = vmatpush.msra.mxu0 %v1135
    %2202 = vmatpush.msra.mxu0 %v1127
    %2203 = vmatpush.msra.mxu0 %v1119
    %2204 = vmatpush.msra.mxu0 %v1111
    %2205 = vmatpush.msra.mxu0 %v1103
    %2206 = vmatpush.msra.mxu0 %v1095
    %2207 = vmatpush.msra.mxu0 %v1087
    %2208 = vmatmul.f32.gmra.mxu0 %v1066
    %v2209 = vpop.f32.mrf.mxu0
    %v2210 = vadd.f32 %v1601, %v2209
    %2211 = vmatmul.f32.gmra.mxu0 %v1070
    %v2212 = vpop.f32.mrf.mxu0
    %v2213 = vadd.f32 %v1601, %v2212
    %2214 = vmatmul.f32.gmra.mxu0 %v1074
    %v2215 = vpop.f32.mrf.mxu0
    %v2216 = vadd.f32 %v1601, %v2215
    %2217 = vmatmul.f32.gmra.mxu0 %v1078
    %v2218 = vpop.f32.mrf.mxu0
    %v2219 = vadd.f32 %v1601, %v2218
    %2220 = vdwg.mxu0
    %2221 = vmatpush.msra.mxu0 %v1335
    %2222 = vmatpush.msra.mxu0 %v1327
    %2223 = vmatpush.msra.mxu0 %v1319
    %2224 = vmatpush.msra.mxu0 %v1311
    %2225 = vmatpush.msra.mxu0 %v1303
    %2226 = vmatpush.msra.mxu0 %v1295
    %2227 = vmatpush.msra.mxu0 %v1287
    %2228 = vmatpush.msra.mxu0 %v1279
    %2229 = vmatpush.msra.mxu0 %v1271
    %2230 = vmatpush.msra.mxu0 %v1263
    %2231 = vmatpush.msra.mxu0 %v1255
    %2232 = vmatpush.msra.mxu0 %v1247
    %2233 = vmatpush.msra.mxu0 %v1239
    %2234 = vmatpush.msra.mxu0 %v1231
    %2235 = vmatpush.msra.mxu0 %v1223
    %2236 = vmatpush.msra.mxu0 %v1215
    %2237 = vmatmul.f32.gmra.mxu0 %v1067
    %v2238 = vpop.f32.mrf.mxu0
    %v2239 = vadd.f32 %v2210, %v2238
    %2240 = vmatmul.f32.gmra.mxu0 %v1071
    %v2241 = vpop.f32.mrf.mxu0
    %v2242 = vadd.f32 %v2213, %v2241
    %2243 = vmatmul.f32.gmra.mxu0 %v1075
    %v2244 = vpop.f32.mrf.mxu0
    %v2245 = vadd.f32 %v2216, %v2244
    %2246 = vmatmul.f32.gmra.mxu0 %v1079
    %v2247 = vpop.f32.mrf.mxu0
    %v2248 = vadd.f32 %v2219, %v2247
    %2249 = vdwg.mxu0
    %2250 = vmatpush.msra.mxu0 %v1463
    %2251 = vmatpush.msra.mxu0 %v1455
    %2252 = vmatpush.msra.mxu0 %v1447
    %2253 = vmatpush.msra.mxu0 %v1439
    %2254 = vmatpush.msra.mxu0 %v1431
    %2255 = vmatpush.msra.mxu0 %v1423
    %2256 = vmatpush.msra.mxu0 %v1415
    %2257 = vmatpush.msra.mxu0 %v1407
    %2258 = vmatpush.msra.mxu0 %v1399
    %2259 = vmatpush.msra.mxu0 %v1391
    %2260 = vmatpush.msra.mxu0 %v1383
    %2261 = vmatpush.msra.mxu0 %v1375
    %2262 = vmatpush.msra.mxu0 %v1367
    %2263 = vmatpush.msra.mxu0 %v1359
    %2264 = vmatpush.msra.mxu0 %v1351
    %2265 = vmatpush.msra.mxu0 %v1343
    %2266 = vmatmul.f32.gmra.mxu0 %v1068
    %v2267 = vpop.f32.mrf.mxu0
    %v2268 = vadd.f32 %v2239, %v2267
    %2269 = vmatmul.f32.gmra.mxu0 %v1072
    %v2270 = vpop.f32.mrf.mxu0
    %v2271 = vadd.f32 %v2242, %v2270
    %2272 = vmatmul.f32.gmra.mxu0 %v1076
    %v2273 = vpop.f32.mrf.mxu0
    %v2274 = vadd.f32 %v2245, %v2273
    %2275 = vmatmul.f32.gmra.mxu0 %v1080
    %v2276 = vpop.f32.mrf.mxu0
    %v2277 = vadd.f32 %v2248, %v2276
    %2278 = vdwg.mxu0
    %2279 = vmatpush.msra.mxu0 %v1591
    %2280 = vmatpush.msra.mxu0 %v1583
    %2281 = vmatpush.msra.mxu0 %v1575
    %2282 = vmatpush.msra.mxu0 %v1567
    %2283 = vmatpush.msra.mxu0 %v1559
    %2284 = vmatpush.msra.mxu0 %v1551
    %2285 = vmatpush.msra.mxu0 %v1543
    %2286 = vmatpush.msra.mxu0 %v1535
    %2287 = vmatpush.msra.mxu0 %v1527
    %2288 = vmatpush.msra.mxu0 %v1519
    %2289 = vmatpush.msra.mxu0 %v1511
    %2290 = vmatpush.msra.mxu0 %v1503
    %2291 = vmatpush.msra.mxu0 %v1495
    %2292 = vmatpush.msra.mxu0 %v1487
    %2293 = vmatpush.msra.mxu0 %v1479
    %2294 = vmatpush.msra.mxu0 %v1471
    %2295 = vmatmul.f32.gmra.mxu0 %v1069
    %v2296 = vpop.f32.mrf.mxu0
    %v2297 = vadd.f32 %v2268, %v2296
    %2298 = vmatmul.f32.gmra.mxu0 %v1073
    %v2299 = vpop.f32.mrf.mxu0
    %v2300 = vadd.f32 %v2271, %v2299
    %2301 = vmatmul.f32.gmra.mxu0 %v1077
    %v2302 = vpop.f32.mrf.mxu0
    %v2303 = vadd.f32 %v2274, %v2302
    %2304 = vmatmul.f32.gmra.mxu0 %v1081
    %v2305 = vpop.f32.mrf.mxu0
    %v2306 = vadd.f32 %v2277, %v2305
    %2307 = vdwg.mxu0
    %2308 = vmatpush.msra.mxu0 %v1208
    %2309 = vmatpush.msra.mxu0 %v1200
    %2310 = vmatpush.msra.mxu0 %v1192
    %2311 = vmatpush.msra.mxu0 %v1184
    %2312 = vmatpush.msra.mxu0 %v1176
    %2313 = vmatpush.msra.mxu0 %v1168
    %2314 = vmatpush.msra.mxu0 %v1160
    %2315 = vmatpush.msra.mxu0 %v1152
    %2316 = vmatpush.msra.mxu0 %v1144
    %2317 = vmatpush.msra.mxu0 %v1136
    %2318 = vmatpush.msra.mxu0 %v1128
    %2319 = vmatpush.msra.mxu0 %v1120
    %2320 = vmatpush.msra.mxu0 %v1112
    %2321 = vmatpush.msra.mxu0 %v1104
    %2322 = vmatpush.msra.mxu0 %v1096
    %2323 = vmatpush.msra.mxu0 %v1088
    %2324 = vmatmul.f32.gmra.mxu0 %v1066
    %v2325 = vpop.f32.mrf.mxu0
    %v2326 = vadd.f32 %v1602, %v2325
    %2327 = vmatmul.f32.gmra.mxu0 %v1070
    %v2328 = vpop.f32.mrf.mxu0
    %v2329 = vadd.f32 %v1602, %v2328
    %2330 = vmatmul.f32.gmra.mxu0 %v1074
    %v2331 = vpop.f32.mrf.mxu0
    %v2332 = vadd.f32 %v1602, %v2331
    %2333 = vmatmul.f32.gmra.mxu0 %v1078
    %v2334 = vpop.f32.mrf.mxu0
    %v2335 = vadd.f32 %v1602, %v2334
    %2336 = vdwg.mxu0
    %2337 = vmatpush.msra.mxu0 %v1336
    %2338 = vmatpush.msra.mxu0 %v1328
    %2339 = vmatpush.msra.mxu0 %v1320
    %2340 = vmatpush.msra.mxu0 %v1312
    %2341 = vmatpush.msra.mxu0 %v1304
    %2342 = vmatpush.msra.mxu0 %v1296
    %2343 = vmatpush.msra.mxu0 %v1288
    %2344 = vmatpush.msra.mxu0 %v1280
    %2345 = vmatpush.msra.mxu0 %v1272
    %2346 = vmatpush.msra.mxu0 %v1264
    %2347 = vmatpush.msra.mxu0 %v1256
    %2348 = vmatpush.msra.mxu0 %v1248
    %2349 = vmatpush.msra.mxu0 %v1240
    %2350 = vmatpush.msra.mxu0 %v1232
    %2351 = vmatpush.msra.mxu0 %v1224
    %2352 = vmatpush.msra.mxu0 %v1216
    %2353 = vmatmul.f32.gmra.mxu0 %v1067
    %v2354 = vpop.f32.mrf.mxu0
    %v2355 = vadd.f32 %v2326, %v2354
    %2356 = vmatmul.f32.gmra.mxu0 %v1071
    %v2357 = vpop.f32.mrf.mxu0
    %v2358 = vadd.f32 %v2329, %v2357
    %2359 = vmatmul.f32.gmra.mxu0 %v1075
    %v2360 = vpop.f32.mrf.mxu0
    %v2361 = vadd.f32 %v2332, %v2360
    %2362 = vmatmul.f32.gmra.mxu0 %v1079
    %v2363 = vpop.f32.mrf.mxu0
    %v2364 = vadd.f32 %v2335, %v2363
    %2365 = vdwg.mxu0
    %2366 = vmatpush.msra.mxu0 %v1464
    %2367 = vmatpush.msra.mxu0 %v1456
    %2368 = vmatpush.msra.mxu0 %v1448
    %2369 = vmatpush.msra.mxu0 %v1440
    %2370 = vmatpush.msra.mxu0 %v1432
    %2371 = vmatpush.msra.mxu0 %v1424
    %2372 = vmatpush.msra.mxu0 %v1416
    %2373 = vmatpush.msra.mxu0 %v1408
    %2374 = vmatpush.msra.mxu0 %v1400
    %2375 = vmatpush.msra.mxu0 %v1392
    %2376 = vmatpush.msra.mxu0 %v1384
    %2377 = vmatpush.msra.mxu0 %v1376
    %2378 = vmatpush.msra.mxu0 %v1368
    %2379 = vmatpush.msra.mxu0 %v1360
    %2380 = vmatpush.msra.mxu0 %v1352
    %2381 = vmatpush.msra.mxu0 %v1344
    %2382 = vmatmul.f32.gmra.mxu0 %v1068
    %v2383 = vpop.f32.mrf.mxu0
    %v2384 = vadd.f32 %v2355, %v2383
    %2385 = vmatmul.f32.gmra.mxu0 %v1072
    %v2386 = vpop.f32.mrf.mxu0
    %v2387 = vadd.f32 %v2358, %v2386
    %2388 = vmatmul.f32.gmra.mxu0 %v1076
    %v2389 = vpop.f32.mrf.mxu0
    %v2390 = vadd.f32 %v2361, %v2389
    %2391 = vmatmul.f32.gmra.mxu0 %v1080
    %v2392 = vpop.f32.mrf.mxu0
    %v2393 = vadd.f32 %v2364, %v2392
    %2394 = vdwg.mxu0
    %2395 = vmatpush.msra.mxu0 %v1592
    %2396 = vmatpush.msra.mxu0 %v1584
    %2397 = vmatpush.msra.mxu0 %v1576
    %2398 = vmatpush.msra.mxu0 %v1568
    %2399 = vmatpush.msra.mxu0 %v1560
    %2400 = vmatpush.msra.mxu0 %v1552
    %2401 = vmatpush.msra.mxu0 %v1544
    %2402 = vmatpush.msra.mxu0 %v1536
    %2403 = vmatpush.msra.mxu0 %v1528
    %2404 = vmatpush.msra.mxu0 %v1520
    %2405 = vmatpush.msra.mxu0 %v1512
    %2406 = vmatpush.msra.mxu0 %v1504
    %2407 = vmatpush.msra.mxu0 %v1496
    %2408 = vmatpush.msra.mxu0 %v1488
    %2409 = vmatpush.msra.mxu0 %v1480
    %2410 = vmatpush.msra.mxu0 %v1472
    %2411 = vmatmul.f32.gmra.mxu0 %v1069
    %v2412 = vpop.f32.mrf.mxu0
    %v2413 = vadd.f32 %v2384, %v2412
    %2414 = vmatmul.f32.gmra.mxu0 %v1073
    %v2415 = vpop.f32.mrf.mxu0
    %v2416 = vadd.f32 %v2387, %v2415
    %2417 = vmatmul.f32.gmra.mxu0 %v1077
    %v2418 = vpop.f32.mrf.mxu0
    %v2419 = vadd.f32 %v2390, %v2418
    %2420 = vmatmul.f32.gmra.mxu0 %v1081
    %v2421 = vpop.f32.mrf.mxu0
    %v2422 = vadd.f32 %v2393, %v2421
    %2423 = vdwg.mxu0
    %2424 = vmatpush.msra.mxu0 %v1209
    %2425 = vmatpush.msra.mxu0 %v1201
    %2426 = vmatpush.msra.mxu0 %v1193
    %2427 = vmatpush.msra.mxu0 %v1185
    %2428 = vmatpush.msra.mxu0 %v1177
    %2429 = vmatpush.msra.mxu0 %v1169
    %2430 = vmatpush.msra.mxu0 %v1161
    %2431 = vmatpush.msra.mxu0 %v1153
    %2432 = vmatpush.msra.mxu0 %v1145
    %2433 = vmatpush.msra.mxu0 %v1137
    %2434 = vmatpush.msra.mxu0 %v1129
    %2435 = vmatpush.msra.mxu0 %v1121
    %2436 = vmatpush.msra.mxu0 %v1113
    %2437 = vmatpush.msra.mxu0 %v1105
    %2438 = vmatpush.msra.mxu0 %v1097
    %2439 = vmatpush.msra.mxu0 %v1089
    %2440 = vmatmul.f32.gmra.mxu0 %v1066
    %v2441 = vpop.f32.mrf.mxu0
    %v2442 = vadd.f32 %v1603, %v2441
    %2443 = vmatmul.f32.gmra.mxu0 %v1070
    %v2444 = vpop.f32.mrf.mxu0
    %v2445 = vadd.f32 %v1603, %v2444
    %2446 = vmatmul.f32.gmra.mxu0 %v1074
    %v2447 = vpop.f32.mrf.mxu0
    %v2448 = vadd.f32 %v1603, %v2447
    %2449 = vmatmul.f32.gmra.mxu0 %v1078
    %v2450 = vpop.f32.mrf.mxu0
    %v2451 = vadd.f32 %v1603, %v2450
    %2452 = vdwg.mxu0
    %2453 = vmatpush.msra.mxu0 %v1337
    %2454 = vmatpush.msra.mxu0 %v1329
    %2455 = vmatpush.msra.mxu0 %v1321
    %2456 = vmatpush.msra.mxu0 %v1313
    %2457 = vmatpush.msra.mxu0 %v1305
    %2458 = vmatpush.msra.mxu0 %v1297
    %2459 = vmatpush.msra.mxu0 %v1289
    %2460 = vmatpush.msra.mxu0 %v1281
    %2461 = vmatpush.msra.mxu0 %v1273
    %2462 = vmatpush.msra.mxu0 %v1265
    %2463 = vmatpush.msra.mxu0 %v1257
    %2464 = vmatpush.msra.mxu0 %v1249
    %2465 = vmatpush.msra.mxu0 %v1241
    %2466 = vmatpush.msra.mxu0 %v1233
    %2467 = vmatpush.msra.mxu0 %v1225
    %2468 = vmatpush.msra.mxu0 %v1217
    %2469 = vmatmul.f32.gmra.mxu0 %v1067
    %v2470 = vpop.f32.mrf.mxu0
    %v2471 = vadd.f32 %v2442, %v2470
    %2472 = vmatmul.f32.gmra.mxu0 %v1071
    %v2473 = vpop.f32.mrf.mxu0
    %v2474 = vadd.f32 %v2445, %v2473
    %2475 = vmatmul.f32.gmra.mxu0 %v1075
    %v2476 = vpop.f32.mrf.mxu0
    %v2477 = vadd.f32 %v2448, %v2476
    %2478 = vmatmul.f32.gmra.mxu0 %v1079
    %v2479 = vpop.f32.mrf.mxu0
    %v2480 = vadd.f32 %v2451, %v2479
    %2481 = vdwg.mxu0
    %2482 = vmatpush.msra.mxu0 %v1465
    %2483 = vmatpush.msra.mxu0 %v1457
    %2484 = vmatpush.msra.mxu0 %v1449
    %2485 = vmatpush.msra.mxu0 %v1441
    %2486 = vmatpush.msra.mxu0 %v1433
    %2487 = vmatpush.msra.mxu0 %v1425
    %2488 = vmatpush.msra.mxu0 %v1417
    %2489 = vmatpush.msra.mxu0 %v1409
    %2490 = vmatpush.msra.mxu0 %v1401
    %2491 = vmatpush.msra.mxu0 %v1393
    %2492 = vmatpush.msra.mxu0 %v1385
    %2493 = vmatpush.msra.mxu0 %v1377
    %2494 = vmatpush.msra.mxu0 %v1369
    %2495 = vmatpush.msra.mxu0 %v1361
    %2496 = vmatpush.msra.mxu0 %v1353
    %2497 = vmatpush.msra.mxu0 %v1345
    %2498 = vmatmul.f32.gmra.mxu0 %v1068
    %v2499 = vpop.f32.mrf.mxu0
    %v2500 = vadd.f32 %v2471, %v2499
    %2501 = vmatmul.f32.gmra.mxu0 %v1072
    %v2502 = vpop.f32.mrf.mxu0
    %v2503 = vadd.f32 %v2474, %v2502
    %2504 = vmatmul.f32.gmra.mxu0 %v1076
    %v2505 = vpop.f32.mrf.mxu0
    %v2506 = vadd.f32 %v2477, %v2505
    %2507 = vmatmul.f32.gmra.mxu0 %v1080
    %v2508 = vpop.f32.mrf.mxu0
    %v2509 = vadd.f32 %v2480, %v2508
    %2510 = vdwg.mxu0
    %2511 = vmatpush.msra.mxu0 %v1593
    %2512 = vmatpush.msra.mxu0 %v1585
    %2513 = vmatpush.msra.mxu0 %v1577
    %2514 = vmatpush.msra.mxu0 %v1569
    %2515 = vmatpush.msra.mxu0 %v1561
    %2516 = vmatpush.msra.mxu0 %v1553
    %2517 = vmatpush.msra.mxu0 %v1545
    %2518 = vmatpush.msra.mxu0 %v1537
    %2519 = vmatpush.msra.mxu0 %v1529
    %2520 = vmatpush.msra.mxu0 %v1521
    %2521 = vmatpush.msra.mxu0 %v1513
    %2522 = vmatpush.msra.mxu0 %v1505
    %2523 = vmatpush.msra.mxu0 %v1497
    %2524 = vmatpush.msra.mxu0 %v1489
    %2525 = vmatpush.msra.mxu0 %v1481
    %2526 = vmatpush.msra.mxu0 %v1473
    %2527 = vmatmul.f32.gmra.mxu0 %v1069
    %v2528 = vpop.f32.mrf.mxu0
    %v2529 = vadd.f32 %v2500, %v2528
    %2530 = vmatmul.f32.gmra.mxu0 %v1073
    %v2531 = vpop.f32.mrf.mxu0
    %v2532 = vadd.f32 %v2503, %v2531
    %2533 = vmatmul.f32.gmra.mxu0 %v1077
    %v2534 = vpop.f32.mrf.mxu0
    %v2535 = vadd.f32 %v2506, %v2534
    %2536 = vmatmul.f32.gmra.mxu0 %v1081
    %v2537 = vpop.f32.mrf.mxu0
    %v2538 = vadd.f32 %v2509, %v2537
    %2539 = vdwg.mxu0
    %v2540 = vsel %vm269, %v1717, -3e+38
    %v2541 = vsel %vm269, %v1833, -3e+38
    %v2542 = vsel %vm269, %v1949, -3e+38
    %v2543 = vsel %vm269, %v2065, -3e+38
    %v2544 = vsel %vm269, %v2181, -3e+38
    %v2545 = vsel %vm269, %v2297, -3e+38
    %v2546 = vsel %vm269, %v2413, -3e+38
    %v2547 = vsel %vm269, %v2529, -3e+38
    %v2548 = vsel %vm270, %v1720, -3e+38
    %v2549 = vsel %vm270, %v1836, -3e+38
    %v2550 = vsel %vm270, %v1952, -3e+38
    %v2551 = vsel %vm270, %v2068, -3e+38
    %v2552 = vsel %vm270, %v2184, -3e+38
    %v2553 = vsel %vm270, %v2300, -3e+38
    %v2554 = vsel %vm270, %v2416, -3e+38
    %v2555 = vsel %vm270, %v2532, -3e+38
    %v2556 = vsel %vm271, %v1723, -3e+38
    %v2557 = vsel %vm271, %v1839, -3e+38
    %v2558 = vsel %vm271, %v1955, -3e+38
    %v2559 = vsel %vm271, %v2071, -3e+38
    %v2560 = vsel %vm271, %v2187, -3e+38
    %v2561 = vsel %vm271, %v2303, -3e+38
    %v2562 = vsel %vm271, %v2419, -3e+38
    %v2563 = vsel %vm271, %v2535, -3e+38
    %v2564 = vsel %vm272, %v1726, -3e+38
    %v2565 = vsel %vm272, %v1842, -3e+38
    %v2566 = vsel %vm272, %v1958, -3e+38
    %v2567 = vsel %vm272, %v2074, -3e+38
    %v2568 = vsel %vm272, %v2190, -3e+38
    %v2569 = vsel %vm272, %v2306, -3e+38
    %v2570 = vsel %vm272, %v2422, -3e+38
    %v2571 = vsel %vm272, %v2538, -3e+38
    %v2572 = vmax.f32 %v2540, %v2548
    %v2573 = vrot.slane %v2572, 4
    %v2574 = vmax.f32 %v2572, %v2573
    %v2575 = vrot.slane %v2574, 2
    %v2576 = vmax.f32 %v2574, %v2575
    %v2577 = vrot.slane %v2576, 1
    %v2578 = vmax.f32 %v2576, %v2577
    %v2579 = vmax.f32 %v2541, %v2549
    %v2580 = vrot.slane %v2579, 4
    %v2581 = vmax.f32 %v2579, %v2580
    %v2582 = vrot.slane %v2581, 2
    %v2583 = vmax.f32 %v2581, %v2582
    %v2584 = vrot.slane %v2583, 1
    %v2585 = vmax.f32 %v2583, %v2584
    %v2586 = vmax.f32 %v2542, %v2550
    %v2587 = vrot.slane %v2586, 4
    %v2588 = vmax.f32 %v2586, %v2587
    %v2589 = vrot.slane %v2588, 2
    %v2590 = vmax.f32 %v2588, %v2589
    %v2591 = vrot.slane %v2590, 1
    %v2592 = vmax.f32 %v2590, %v2591
    %v2593 = vmax.f32 %v2543, %v2551
    %v2594 = vrot.slane %v2593, 4
    %v2595 = vmax.f32 %v2593, %v2594
    %v2596 = vrot.slane %v2595, 2
    %v2597 = vmax.f32 %v2595, %v2596
    %v2598 = vrot.slane %v2597, 1
    %v2599 = vmax.f32 %v2597, %v2598
    %v2600 = vmax.f32 %v2544, %v2552
    %v2601 = vrot.slane %v2600, 4
    %v2602 = vmax.f32 %v2600, %v2601
    %v2603 = vrot.slane %v2602, 2
    %v2604 = vmax.f32 %v2602, %v2603
    %v2605 = vrot.slane %v2604, 1
    %v2606 = vmax.f32 %v2604, %v2605
    %v2607 = vmax.f32 %v2545, %v2553
    %v2608 = vrot.slane %v2607, 4
    %v2609 = vmax.f32 %v2607, %v2608
    %v2610 = vrot.slane %v2609, 2
    %v2611 = vmax.f32 %v2609, %v2610
    %v2612 = vrot.slane %v2611, 1
    %v2613 = vmax.f32 %v2611, %v2612
    %v2614 = vmax.f32 %v2546, %v2554
    %v2615 = vrot.slane %v2614, 4
    %v2616 = vmax.f32 %v2614, %v2615
    %v2617 = vrot.slane %v2616, 2
    %v2618 = vmax.f32 %v2616, %v2617
    %v2619 = vrot.slane %v2618, 1
    %v2620 = vmax.f32 %v2618, %v2619
    %v2621 = vmax.f32 %v2547, %v2555
    %v2622 = vrot.slane %v2621, 4
    %v2623 = vmax.f32 %v2621, %v2622
    %v2624 = vrot.slane %v2623, 2
    %v2625 = vmax.f32 %v2623, %v2624
    %v2626 = vrot.slane %v2625, 1
    %v2627 = vmax.f32 %v2625, %v2626
    %v2628 = vmax.f32 %v2556, %v2564
    %v2629 = vrot.slane %v2628, 4
    %v2630 = vmax.f32 %v2628, %v2629
    %v2631 = vrot.slane %v2630, 2
    %v2632 = vmax.f32 %v2630, %v2631
    %v2633 = vrot.slane %v2632, 1
    %v2634 = vmax.f32 %v2632, %v2633
    %v2635 = vmax.f32 %v2557, %v2565
    %v2636 = vrot.slane %v2635, 4
    %v2637 = vmax.f32 %v2635, %v2636
    %v2638 = vrot.slane %v2637, 2
    %v2639 = vmax.f32 %v2637, %v2638
    %v2640 = vrot.slane %v2639, 1
    %v2641 = vmax.f32 %v2639, %v2640
    %v2642 = vmax.f32 %v2558, %v2566
    %v2643 = vrot.slane %v2642, 4
    %v2644 = vmax.f32 %v2642, %v2643
    %v2645 = vrot.slane %v2644, 2
    %v2646 = vmax.f32 %v2644, %v2645
    %v2647 = vrot.slane %v2646, 1
    %v2648 = vmax.f32 %v2646, %v2647
    %v2649 = vmax.f32 %v2559, %v2567
    %v2650 = vrot.slane %v2649, 4
    %v2651 = vmax.f32 %v2649, %v2650
    %v2652 = vrot.slane %v2651, 2
    %v2653 = vmax.f32 %v2651, %v2652
    %v2654 = vrot.slane %v2653, 1
    %v2655 = vmax.f32 %v2653, %v2654
    %v2656 = vmax.f32 %v2560, %v2568
    %v2657 = vrot.slane %v2656, 4
    %v2658 = vmax.f32 %v2656, %v2657
    %v2659 = vrot.slane %v2658, 2
    %v2660 = vmax.f32 %v2658, %v2659
    %v2661 = vrot.slane %v2660, 1
    %v2662 = vmax.f32 %v2660, %v2661
    %v2663 = vmax.f32 %v2561, %v2569
    %v2664 = vrot.slane %v2663, 4
    %v2665 = vmax.f32 %v2663, %v2664
    %v2666 = vrot.slane %v2665, 2
    %v2667 = vmax.f32 %v2665, %v2666
    %v2668 = vrot.slane %v2667, 1
    %v2669 = vmax.f32 %v2667, %v2668
    %v2670 = vmax.f32 %v2562, %v2570
    %v2671 = vrot.slane %v2670, 4
    %v2672 = vmax.f32 %v2670, %v2671
    %v2673 = vrot.slane %v2672, 2
    %v2674 = vmax.f32 %v2672, %v2673
    %v2675 = vrot.slane %v2674, 1
    %v2676 = vmax.f32 %v2674, %v2675
    %v2677 = vmax.f32 %v2563, %v2571
    %v2678 = vrot.slane %v2677, 4
    %v2679 = vmax.f32 %v2677, %v2678
    %v2680 = vrot.slane %v2679, 2
    %v2681 = vmax.f32 %v2679, %v2680
    %v2682 = vrot.slane %v2681, 1
    %v2683 = vmax.f32 %v2681, %v2682
    %v2700 = vsel %vm318, %v2634, %v2578
    %v2701 = vsel %vm318, %v2641, %v2585
    %v2702 = vsel %vm318, %v2648, %v2592
    %v2703 = vsel %vm318, %v2655, %v2599
    %v2704 = vsel %vm318, %v2662, %v2606
    %v2705 = vsel %vm318, %v2669, %v2613
    %v2706 = vsel %vm318, %v2676, %v2620
    %v2707 = vsel %vm318, %v2683, %v2627
    %v2716 = vsel %vm313, %v2700, 0.0
    %v2717 = vsel %vm313, %v2701, 0.0
    %v2718 = vsel %vm313, %v2702, 0.0
    %v2719 = vsel %vm313, %v2703, 0.0
    %v2720 = vsel %vm313, %v2704, 0.0
    %v2721 = vsel %vm313, %v2705, 0.0
    %v2722 = vsel %vm313, %v2706, 0.0
    %v2723 = vsel %vm313, %v2707, 0.0
    %v2732 = vrot.slane %v2717, 6
    %v2733 = vrot.slane %v2718, 4
    %v2734 = vrot.slane %v2719, 2
    %v2735 = vrot.slane %v2721, 6
    %v2736 = vrot.slane %v2722, 4
    %v2737 = vrot.slane %v2723, 2
    %v2738 = vsel %vm994, %v2716, %v2732
    %vm2739 = vcmask 1045508
    %v2740 = vsel %vm2739, %v2733, %v2734
    %v2741 = vsel %vm88, %v2738, %v2740
    %v2742 = vsel %vm994, %v2720, %v2735
    %v2743 = vsel %vm2739, %v2736, %v2737
    %v2744 = vsel %vm88, %v2742, %v2743
    %2747 = vst [vmem:[%s11] sm:$0xff] %v2741
    %2748 = vst [vmem:[%s11 + $0x8] sm:$0xff] %v2744
    // Predicated region
    $region50: #{objectcloud_encoder_pallas.2} parent=1 // pred_check
      _
    $region51: #{objectcloud_encoder_pallas.2} parent=1 // pred_check_branch
      %2750 = sbr.rel (0) target = $region53
    $region52: #{objectcloud_encoder_pallas.2} parent=1 // pred_region
      _
    $region53: #{objectcloud_encoder_pallas.2} parent=1 // pred_fallthru
      _
    // Predicated region
    $region54: #{objectcloud_encoder_pallas.2} parent=1 // pred_check
      _
    $region55: #{objectcloud_encoder_pallas.2} parent=1 // pred_check_branch
      %2752 = sbr.rel (0) target = $region57
    $region56: #{objectcloud_encoder_pallas.2} parent=1 // pred_region
      _
    $region57: #{objectcloud_encoder_pallas.2} parent=1 // pred_fallthru
      _
    %2753 = vsyncpa [#allocation3], 1

</llo_original>
